<compile_context>
chip_gen: v7x
topology: tpu7x:2x2x1
jax: 0.10.0
libtpu: 0.0.40
codegen_flags: <defaults>
</compile_context>

<pallas_src>
import functools

import jax
import jax.numpy as jnp
from jax import lax
from jax.experimental import pallas as pl
from jax.experimental.pallas import tpu as pltpu

PAD = 2                       # max(k // 2) over k in (1, 3, 5)
NPARAMS = 1 + 9 + 25 + 3      # folded weights (1x1, 3x3, 5x5) + 3 biases = 38


def _msdw_compute(tap, wv):
    """Fused 3-branch depthwise conv + bias + ReLU6 for one (C, TH, W) slab.

    tap(i, j) -> (C, TH, W) f32 input window shifted by (i, j) in the PAD=2
                 padded frame (5x5 halo offset 0, 3x3 offset 1, 1x1 offset 2).
    wv(idx)   -> (C, 1, W) f32 weight/bias row (sublane-broadcast operand).
    """
    w1 = wv(0)
    w3 = [wv(1 + t) for t in range(9)]
    w5 = [wv(10 + t) for t in range(25)]
    b1, b3, b5 = wv(35), wv(36), wv(37)

    rows5 = []     # independent per-row partial sums -> ILP on the VALU slots
    rows3 = []
    center = None
    for i in range(5):
        r5 = tap(i, 0) * w5[5 * i]
        r3 = None
        for j in range(1, 5):
            t = tap(i, j)                      # shared by the 5x5 / 3x3 / 1x1
            r5 = r5 + t * w5[5 * i + j]
            if 1 <= i <= 3 and 1 <= j <= 3:
                term = t * w3[3 * (i - 1) + (j - 1)]
                r3 = term if r3 is None else r3 + term
                if i == 2 and j == 2:
                    center = t                 # 1x1 branch reuses this tap
        rows5.append(r5)
        if r3 is not None:
            rows3.append(r3)

    acc5 = (rows5[0] + rows5[1]) + (rows5[2] + rows5[3]) + rows5[4]
    acc3 = (rows3[0] + rows3[1]) + rows3[2]

    out = jnp.clip(acc5 + b5, 0.0, 6.0)
    out = out + jnp.clip(acc3 + b3, 0.0, 6.0)
    out = out + jnp.clip(center * w1 + b1, 0.0, 6.0)
    return out


def _msdw_kernel_resident(params_ref, x_ref, o_ref, *, H, W):
    """Whole padded image resident in VMEM; one grid step per batch element.

    params_ref: VMEM (NPARAMS, C, W) f32 (BN-scale-folded weights + biases).
    x_ref:      VMEM (1, C, Hp, Wp) zero-padded image, all channels.
    o_ref:      VMEM (1, C, H, W) output.
    """
    def tap(i, j):
        return x_ref[0, :, i:i + H, j:j + W].astype(jnp.float32)

    def wv(idx):
        return params_ref[idx][:, None, :]

    o_ref[0] = _msdw_compute(tap, wv).astype(o_ref.dtype)


def _msdw_kernel_tiled(params_ref, x_hbm_ref, o_ref, buf_ref, sem,
                       *, tile_h, W):
    """Large-image path: x stays in HBM; DMA a (C, TH+4, Wp) halo window.

    Keeps input VMEM bounded (2*(TH+4)*Wp*C bytes-ish) regardless of H, so
    v7x's 64 MiB VMEM and the 32 MiB scoped default are safe for any H.
    """
    thp = tile_h + 2 * PAD
    n = pl.program_id(0)
    r0 = pl.multiple_of(pl.program_id(1) * tile_h, 8)

    cp = pltpu.make_async_copy(
        x_hbm_ref.at[n, :, pl.ds(r0, thp), :], buf_ref, sem)
    cp.start()
    cp.wait()
    # TODO(synk): double-buffer the halo DMA across h-steps to hide it fully.

    def tap(i, j):
        return buf_ref[:, i:i + tile_h, j:j + W].astype(jnp.float32)

    def wv(idx):
        return params_ref[idx][:, None, :]

    o_ref[0] = _msdw_compute(tap, wv).astype(o_ref.dtype)


def _plan_tile_h(C, H, W, itemsize):
    """Pick rows per output tile; returns (TH, tiled).  Budgets the input
    block, output block, live f32 temporaries and the params table against a
    conservative VMEM budget (safe for the 32 MiB scoped default and v7x)."""
    Wp = W + 2 * PAD
    budget = 24 << 20

    def step_bytes(th, resident_input):
        thp = th + 2 * PAD
        in_b = C * thp * Wp * itemsize * (2 if resident_input else 1)
        out_b = 2 * C * th * W * itemsize          # double-buffered output
        tmp_b = 8 * C * th * W * 4                 # live f32 temporaries
        par_b = 2 * NPARAMS * C * W * 4
        return in_b + out_b + tmp_b + par_b

    if step_bytes(H, True) <= budget:
        return H, False
    best = None
    for th in range(8, H, 8):
        if H % th == 0 and step_bytes(th, False) <= budget:
            best = th
    if best is None:
        # TODO(synk): ragged last H tile; fall back to whole-image residency.
        return H, False
    return best, True


def _pack_params(w1, w3, w5, scales, biases, W):
    """Fold BN scale into the depthwise weights and expand every per-channel
    scalar along W so in-kernel tap multiplies are cheap sublane broadcasts."""
    C = w1.shape[-1]
    w1f = (w1.astype(jnp.float32) * scales[0]).reshape(1, C)
    w3f = (w3.astype(jnp.float32) * scales[1]).reshape(9, C)
    w5f = (w5.astype(jnp.float32) * scales[2]).reshape(25, C)
    packed = jnp.concatenate(
        [w1f, w3f, w5f, biases.astype(jnp.float32)], axis=0)     # (38, C)
    return jnp.broadcast_to(packed[:, :, None], (NPARAMS, C, W))


def multi_scale_depthwise_conv(x_nchw, w1, w3, w5, scales, biases):
    """x_nchw: (N, C, H, W).  wK: (K, K, C) depthwise weights.  scales/biases:
    (3, C) folded BatchNorm (eval) parameters per branch.  Returns NCHW."""
    N, C, H, W = x_nchw.shape
    params = _pack_params(w1, w3, w5, scales, biases, W)

    # Halo padding for the largest (5x5) branch, one pass in HBM.
    # TODO(synk): fuse the pad into the kernel (edge masks) to save this pass.
    xp = jnp.pad(x_nchw, ((0, 0), (0, 0), (PAD, PAD), (PAD, PAD)))
    Hp, Wp = H + 2 * PAD, W + 2 * PAD

    TH, tiled = _plan_tile_h(C, H, W, x_nchw.dtype.itemsize)

    itemsize = x_nchw.dtype.itemsize
    cost = pl.CostEstimate(
        flops=72 * N * C * H * W,
        transcendentals=0,
        bytes_accessed=N * C * (Hp * Wp + H * W) * itemsize
                       + NPARAMS * C * W * 4)

    if tiled:
        grid = (N, H // TH)
        kernel = functools.partial(_msdw_kernel_tiled, tile_h=TH, W=W)
        in_specs = [
            pl.BlockSpec((NPARAMS, C, W), lambda n, h: (0, 0, 0)),
            pl.BlockSpec(memory_space=pl.ANY),        # x stays in HBM
        ]
        out_specs = pl.BlockSpec((1, C, TH, W), lambda n, h: (n, 0, h, 0))
        scratch_shapes = [
            pltpu.VMEM((C, TH + 2 * PAD, Wp), x_nchw.dtype),
            pltpu.SemaphoreType.DMA(()),
        ]
        # No carried state across h-steps -> let v7x's 2 TCs shard H too.
        semantics = ("parallel", "parallel")
    else:
        grid = (N,)
        kernel = functools.partial(_msdw_kernel_resident, H=H, W=W)
        in_specs = [
            pl.BlockSpec((NPARAMS, C, W), lambda n: (0, 0, 0)),
            pl.BlockSpec((1, C, Hp, Wp), lambda n: (n, 0, 0, 0)),
        ]
        out_specs = pl.BlockSpec((1, C, H, W), lambda n: (n, 0, 0, 0))
        scratch_shapes = []
        semantics = ("parallel",)

    out = pl.pallas_call(
        kernel,
        out_shape=jax.ShapeDtypeStruct((N, C, H, W), x_nchw.dtype),
        grid=grid,
        in_specs=in_specs,
        out_specs=out_specs,
        scratch_shapes=scratch_shapes,
        compiler_params=pltpu.CompilerParams(
            dimension_semantics=semantics,
            vmem_limit_bytes=64 * 1024 * 1024),
        cost_estimate=cost,
    )(params, xp)
    return out


def _reference(x_nchw, w1, w3, w5, scales, biases):
    """Pure-JAX reference using lax.conv_general_dilated (depthwise)."""
    C = x_nchw.shape[1]
    out = jnp.zeros_like(x_nchw, dtype=jnp.float32)
    for bi, (k, w) in enumerate(((1, w1), (3, w3), (5, w5))):
        kern = w.reshape(k, k, 1, C).astype(jnp.float32)
        y = lax.conv_general_dilated(
            x_nchw.astype(jnp.float32), kern,
            window_strides=(1, 1),
            padding=((k // 2, k // 2), (k // 2, k // 2)),
            dimension_numbers=("NCHW", "HWIO", "NCHW"),
            feature_group_count=C)
        y = y * scales[bi][None, :, None, None] + biases[bi][None, :, None, None]
        out = out + jnp.clip(y, 0.0, 6.0)
    return out.astype(x_nchw.dtype)


if __name__ == "__main__":
    key = jax.random.PRNGKey(0)
    N, C, H, W = 2, 4, 16, 16

    k_x, k_w1, k_w3, k_w5, k_g, k_b, k_m, k_v = jax.random.split(key, 8)

    x = jax.random.normal(k_x, (N, C, H, W), dtype=jnp.float32)

    # Depthwise conv weights (PyTorch shape (C,1,k,k) -> layout (k,k,C) here).
    w1 = jax.random.normal(k_w1, (1, 1, C), dtype=jnp.float32) * 0.5
    w3 = jax.random.normal(k_w3, (3, 3, C), dtype=jnp.float32) * 0.2
    w5 = jax.random.normal(k_w5, (5, 5, C), dtype=jnp.float32) * 0.1

    # BatchNorm2d (eval) parameters per branch, folded to scale/bias.
    eps = 1e-5
    gamma = 1.0 + 0.1 * jax.random.normal(k_g, (3, C), dtype=jnp.float32)
    beta = 0.1 * jax.random.normal(k_b, (3, C), dtype=jnp.float32)
    running_mean = 0.1 * jax.random.normal(k_m, (3, C), dtype=jnp.float32)
    running_var = 1.0 + 0.1 * jax.random.uniform(k_v, (3, C), dtype=jnp.float32)
    scales = gamma / jnp.sqrt(running_var + eps)        # (3, C)
    biases = beta - running_mean * scales               # (3, C)

    out = multi_scale_depthwise_conv(x, w1, w3, w5, scales, biases)
    out = jax.block_until_ready(out)

    ref = _reference(x, w1, w3, w5, scales, biases)
    assert out.shape == (N, C, H, W)
    assert jnp.allclose(out, ref, atol=1e-4, rtol=1e-4), "mismatch vs reference"

    print("KERNEL_OK")
</pallas_src>

<mosaic_0001>
module attributes {stable_mosaic.version = 11 : i64} {
  func.func @_msdw_kernel_resident(%arg0: i32, %arg1: memref<38x4x16xf32, #tpu.memory_space<vmem>>, %arg2: memref<1x4x20x20xf32, #tpu.memory_space<vmem>>, %arg3: memref<1x4x16x16xf32, #tpu.memory_space<vmem>>) attributes {dimension_semantics = [#tpu.dimension_semantics<parallel>], iteration_bounds = array<i64: 2>, scalar_prefetch = 0 : i64, scratch_operands = 0 : i64, tpu.core_type = #tpu.core_type<tc>, window_params = [{pipeline_mode = #tpu.pipeline_mode<synchronous>, transform_indices = @transform_0, window_bounds = array<i64: 38, 4, 16>}, {transform_indices = @transform_1, window_bounds = array<i64: 1, 4, 20, 20>}, {transform_indices = @transform_2, window_bounds = array<i64: 1, 4, 16, 16>}]} {
    %c0 = arith.constant 0 : index
    %c0_0 = arith.constant 0 : index
    %c0_1 = arith.constant 0 : index
    %0 = vector.load %arg1[%c0, %c0_0, %c0_1] : memref<38x4x16xf32, #tpu.memory_space<vmem>>, vector<1x4x16xf32>
    %1 = vector.shape_cast %0 : vector<1x4x16xf32> to vector<4x16xf32>
    %2 = vector.shape_cast %1 : vector<4x16xf32> to vector<4x1x16xf32>
    %c1 = arith.constant 1 : index
    %c0_2 = arith.constant 0 : index
    %c0_3 = arith.constant 0 : index
    %3 = vector.load %arg1[%c1, %c0_2, %c0_3] : memref<38x4x16xf32, #tpu.memory_space<vmem>>, vector<1x4x16xf32>
    %4 = vector.shape_cast %3 : vector<1x4x16xf32> to vector<4x16xf32>
    %5 = vector.shape_cast %4 : vector<4x16xf32> to vector<4x1x16xf32>
    %c2 = arith.constant 2 : index
    %c0_4 = arith.constant 0 : index
    %c0_5 = arith.constant 0 : index
    %6 = vector.load %arg1[%c2, %c0_4, %c0_5] : memref<38x4x16xf32, #tpu.memory_space<vmem>>, vector<1x4x16xf32>
    %7 = vector.shape_cast %6 : vector<1x4x16xf32> to vector<4x16xf32>
    %8 = vector.shape_cast %7 : vector<4x16xf32> to vector<4x1x16xf32>
    %c3 = arith.constant 3 : index
    %c0_6 = arith.constant 0 : index
    %c0_7 = arith.constant 0 : index
    %9 = vector.load %arg1[%c3, %c0_6, %c0_7] : memref<38x4x16xf32, #tpu.memory_space<vmem>>, vector<1x4x16xf32>
    %10 = vector.shape_cast %9 : vector<1x4x16xf32> to vector<4x16xf32>
    %11 = vector.shape_cast %10 : vector<4x16xf32> to vector<4x1x16xf32>
    %c4 = arith.constant 4 : index
    %c0_8 = arith.constant 0 : index
    %c0_9 = arith.constant 0 : index
    %12 = vector.load %arg1[%c4, %c0_8, %c0_9] : memref<38x4x16xf32, #tpu.memory_space<vmem>>, vector<1x4x16xf32>
    %13 = vector.shape_cast %12 : vector<1x4x16xf32> to vector<4x16xf32>
    %14 = vector.shape_cast %13 : vector<4x16xf32> to vector<4x1x16xf32>
    %c5 = arith.constant 5 : index
    %c0_10 = arith.constant 0 : index
    %c0_11 = arith.constant 0 : index
    %15 = vector.load %arg1[%c5, %c0_10, %c0_11] : memref<38x4x16xf32, #tpu.memory_space<vmem>>, vector<1x4x16xf32>
    %16 = vector.shape_cast %15 : vector<1x4x16xf32> to vector<4x16xf32>
    %17 = vector.shape_cast %16 : vector<4x16xf32> to vector<4x1x16xf32>
    %c6 = arith.constant 6 : index
    %c0_12 = arith.constant 0 : index
    %c0_13 = arith.constant 0 : index
    %18 = vector.load %arg1[%c6, %c0_12, %c0_13] : memref<38x4x16xf32, #tpu.memory_space<vmem>>, vector<1x4x16xf32>
    %19 = vector.shape_cast %18 : vector<1x4x16xf32> to vector<4x16xf32>
    %20 = vector.shape_cast %19 : vector<4x16xf32> to vector<4x1x16xf32>
    %c7 = arith.constant 7 : index
    %c0_14 = arith.constant 0 : index
    %c0_15 = arith.constant 0 : index
    %21 = vector.load %arg1[%c7, %c0_14, %c0_15] : memref<38x4x16xf32, #tpu.memory_space<vmem>>, vector<1x4x16xf32>
    %22 = vector.shape_cast %21 : vector<1x4x16xf32> to vector<4x16xf32>
    %23 = vector.shape_cast %22 : vector<4x16xf32> to vector<4x1x16xf32>
    %c8 = arith.constant 8 : index
    %c0_16 = arith.constant 0 : index
    %c0_17 = arith.constant 0 : index
    %24 = vector.load %arg1[%c8, %c0_16, %c0_17] : memref<38x4x16xf32, #tpu.memory_space<vmem>>, vector<1x4x16xf32>
    %25 = vector.shape_cast %24 : vector<1x4x16xf32> to vector<4x16xf32>
    %26 = vector.shape_cast %25 : vector<4x16xf32> to vector<4x1x16xf32>
    %c9 = arith.constant 9 : index
    %c0_18 = arith.constant 0 : index
    %c0_19 = arith.constant 0 : index
    %27 = vector.load %arg1[%c9, %c0_18, %c0_19] : memref<38x4x16xf32, #tpu.memory_space<vmem>>, vector<1x4x16xf32>
    %28 = vector.shape_cast %27 : vector<1x4x16xf32> to vector<4x16xf32>
    %29 = vector.shape_cast %28 : vector<4x16xf32> to vector<4x1x16xf32>
    %c10 = arith.constant 10 : index
    %c0_20 = arith.constant 0 : index
    %c0_21 = arith.constant 0 : index
    %30 = vector.load %arg1[%c10, %c0_20, %c0_21] : memref<38x4x16xf32, #tpu.memory_space<vmem>>, vector<1x4x16xf32>
    %31 = vector.shape_cast %30 : vector<1x4x16xf32> to vector<4x16xf32>
    %32 = vector.shape_cast %31 : vector<4x16xf32> to vector<4x1x16xf32>
    %c11 = arith.constant 11 : index
    %c0_22 = arith.constant 0 : index
    %c0_23 = arith.constant 0 : index
    %33 = vector.load %arg1[%c11, %c0_22, %c0_23] : memref<38x4x16xf32, #tpu.memory_space<vmem>>, vector<1x4x16xf32>
    %34 = vector.shape_cast %33 : vector<1x4x16xf32> to vector<4x16xf32>
    %35 = vector.shape_cast %34 : vector<4x16xf32> to vector<4x1x16xf32>
    %c12 = arith.constant 12 : index
    %c0_24 = arith.constant 0 : index
    %c0_25 = arith.constant 0 : index
    %36 = vector.load %arg1[%c12, %c0_24, %c0_25] : memref<38x4x16xf32, #tpu.memory_space<vmem>>, vector<1x4x16xf32>
    %37 = vector.shape_cast %36 : vector<1x4x16xf32> to vector<4x16xf32>
    %38 = vector.shape_cast %37 : vector<4x16xf32> to vector<4x1x16xf32>
    %c13 = arith.constant 13 : index
    %c0_26 = arith.constant 0 : index
    %c0_27 = arith.constant 0 : index
    %39 = vector.load %arg1[%c13, %c0_26, %c0_27] : memref<38x4x16xf32, #tpu.memory_space<vmem>>, vector<1x4x16xf32>
    %40 = vector.shape_cast %39 : vector<1x4x16xf32> to vector<4x16xf32>
    %41 = vector.shape_cast %40 : vector<4x16xf32> to vector<4x1x16xf32>
    %c14 = arith.constant 14 : index
    %c0_28 = arith.constant 0 : index
    %c0_29 = arith.constant 0 : index
    %42 = vector.load %arg1[%c14, %c0_28, %c0_29] : memref<38x4x16xf32, #tpu.memory_space<vmem>>, vector<1x4x16xf32>
    %43 = vector.shape_cast %42 : vector<1x4x16xf32> to vector<4x16xf32>
    %44 = vector.shape_cast %43 : vector<4x16xf32> to vector<4x1x16xf32>
    %c15 = arith.constant 15 : index
    %c0_30 = arith.constant 0 : index
    %c0_31 = arith.constant 0 : index
    %45 = vector.load %arg1[%c15, %c0_30, %c0_31] : memref<38x4x16xf32, #tpu.memory_space<vmem>>, vector<1x4x16xf32>
    %46 = vector.shape_cast %45 : vector<1x4x16xf32> to vector<4x16xf32>
    %47 = vector.shape_cast %46 : vector<4x16xf32> to vector<4x1x16xf32>
    %c16 = arith.constant 16 : index
    %c0_32 = arith.constant 0 : index
    %c0_33 = arith.constant 0 : index
    %48 = vector.load %arg1[%c16, %c0_32, %c0_33] : memref<38x4x16xf32, #tpu.memory_space<vmem>>, vector<1x4x16xf32>
    %49 = vector.shape_cast %48 : vector<1x4x16xf32> to vector<4x16xf32>
    %50 = vector.shape_cast %49 : vector<4x16xf32> to vector<4x1x16xf32>
    %c17 = arith.constant 17 : index
    %c0_34 = arith.constant 0 : index
    %c0_35 = arith.constant 0 : index
    %51 = vector.load %arg1[%c17, %c0_34, %c0_35] : memref<38x4x16xf32, #tpu.memory_space<vmem>>, vector<1x4x16xf32>
    %52 = vector.shape_cast %51 : vector<1x4x16xf32> to vector<4x16xf32>
    %53 = vector.shape_cast %52 : vector<4x16xf32> to vector<4x1x16xf32>
    %c18 = arith.constant 18 : index
    %c0_36 = arith.constant 0 : index
    %c0_37 = arith.constant 0 : index
    %54 = vector.load %arg1[%c18, %c0_36, %c0_37] : memref<38x4x16xf32, #tpu.memory_space<vmem>>, vector<1x4x16xf32>
    %55 = vector.shape_cast %54 : vector<1x4x16xf32> to vector<4x16xf32>
    %56 = vector.shape_cast %55 : vector<4x16xf32> to vector<4x1x16xf32>
    %c19 = arith.constant 19 : index
    %c0_38 = arith.constant 0 : index
    %c0_39 = arith.constant 0 : index
    %57 = vector.load %arg1[%c19, %c0_38, %c0_39] : memref<38x4x16xf32, #tpu.memory_space<vmem>>, vector<1x4x16xf32>
    %58 = vector.shape_cast %57 : vector<1x4x16xf32> to vector<4x16xf32>
    %59 = vector.shape_cast %58 : vector<4x16xf32> to vector<4x1x16xf32>
    %c20 = arith.constant 20 : index
    %c0_40 = arith.constant 0 : index
    %c0_41 = arith.constant 0 : index
    %60 = vector.load %arg1[%c20, %c0_40, %c0_41] : memref<38x4x16xf32, #tpu.memory_space<vmem>>, vector<1x4x16xf32>
    %61 = vector.shape_cast %60 : vector<1x4x16xf32> to vector<4x16xf32>
    %62 = vector.shape_cast %61 : vector<4x16xf32> to vector<4x1x16xf32>
    %c21 = arith.constant 21 : index
    %c0_42 = arith.constant 0 : index
    %c0_43 = arith.constant 0 : index
    %63 = vector.load %arg1[%c21, %c0_42, %c0_43] : memref<38x4x16xf32, #tpu.memory_space<vmem>>, vector<1x4x16xf32>
    %64 = vector.shape_cast %63 : vector<1x4x16xf32> to vector<4x16xf32>
    %65 = vector.shape_cast %64 : vector<4x16xf32> to vector<4x1x16xf32>
    %c22 = arith.constant 22 : index
    %c0_44 = arith.constant 0 : index
    %c0_45 = arith.constant 0 : index
    %66 = vector.load %arg1[%c22, %c0_44, %c0_45] : memref<38x4x16xf32, #tpu.memory_space<vmem>>, vector<1x4x16xf32>
    %67 = vector.shape_cast %66 : vector<1x4x16xf32> to vector<4x16xf32>
    %68 = vector.shape_cast %67 : vector<4x16xf32> to vector<4x1x16xf32>
    %c23 = arith.constant 23 : index
    %c0_46 = arith.constant 0 : index
    %c0_47 = arith.constant 0 : index
    %69 = vector.load %arg1[%c23, %c0_46, %c0_47] : memref<38x4x16xf32, #tpu.memory_space<vmem>>, vector<1x4x16xf32>
    %70 = vector.shape_cast %69 : vector<1x4x16xf32> to vector<4x16xf32>
    %71 = vector.shape_cast %70 : vector<4x16xf32> to vector<4x1x16xf32>
    %c24 = arith.constant 24 : index
    %c0_48 = arith.constant 0 : index
    %c0_49 = arith.constant 0 : index
    %72 = vector.load %arg1[%c24, %c0_48, %c0_49] : memref<38x4x16xf32, #tpu.memory_space<vmem>>, vector<1x4x16xf32>
    %73 = vector.shape_cast %72 : vector<1x4x16xf32> to vector<4x16xf32>
    %74 = vector.shape_cast %73 : vector<4x16xf32> to vector<4x1x16xf32>
    %c25 = arith.constant 25 : index
    %c0_50 = arith.constant 0 : index
    %c0_51 = arith.constant 0 : index
    %75 = vector.load %arg1[%c25, %c0_50, %c0_51] : memref<38x4x16xf32, #tpu.memory_space<vmem>>, vector<1x4x16xf32>
    %76 = vector.shape_cast %75 : vector<1x4x16xf32> to vector<4x16xf32>
    %77 = vector.shape_cast %76 : vector<4x16xf32> to vector<4x1x16xf32>
    %c26 = arith.constant 26 : index
    %c0_52 = arith.constant 0 : index
    %c0_53 = arith.constant 0 : index
    %78 = vector.load %arg1[%c26, %c0_52, %c0_53] : memref<38x4x16xf32, #tpu.memory_space<vmem>>, vector<1x4x16xf32>
    %79 = vector.shape_cast %78 : vector<1x4x16xf32> to vector<4x16xf32>
    %80 = vector.shape_cast %79 : vector<4x16xf32> to vector<4x1x16xf32>
    %c27 = arith.constant 27 : index
    %c0_54 = arith.constant 0 : index
    %c0_55 = arith.constant 0 : index
    %81 = vector.load %arg1[%c27, %c0_54, %c0_55] : memref<38x4x16xf32, #tpu.memory_space<vmem>>, vector<1x4x16xf32>
    %82 = vector.shape_cast %81 : vector<1x4x16xf32> to vector<4x16xf32>
    %83 = vector.shape_cast %82 : vector<4x16xf32> to vector<4x1x16xf32>
    %c28 = arith.constant 28 : index
    %c0_56 = arith.constant 0 : index
    %c0_57 = arith.constant 0 : index
    %84 = vector.load %arg1[%c28, %c0_56, %c0_57] : memref<38x4x16xf32, #tpu.memory_space<vmem>>, vector<1x4x16xf32>
    %85 = vector.shape_cast %84 : vector<1x4x16xf32> to vector<4x16xf32>
    %86 = vector.shape_cast %85 : vector<4x16xf32> to vector<4x1x16xf32>
    %c29 = arith.constant 29 : index
    %c0_58 = arith.constant 0 : index
    %c0_59 = arith.constant 0 : index
    %87 = vector.load %arg1[%c29, %c0_58, %c0_59] : memref<38x4x16xf32, #tpu.memory_space<vmem>>, vector<1x4x16xf32>
    %88 = vector.shape_cast %87 : vector<1x4x16xf32> to vector<4x16xf32>
    %89 = vector.shape_cast %88 : vector<4x16xf32> to vector<4x1x16xf32>
    %c30 = arith.constant 30 : index
    %c0_60 = arith.constant 0 : index
    %c0_61 = arith.constant 0 : index
    %90 = vector.load %arg1[%c30, %c0_60, %c0_61] : memref<38x4x16xf32, #tpu.memory_space<vmem>>, vector<1x4x16xf32>
    %91 = vector.shape_cast %90 : vector<1x4x16xf32> to vector<4x16xf32>
    %92 = vector.shape_cast %91 : vector<4x16xf32> to vector<4x1x16xf32>
    %c31 = arith.constant 31 : index
    %c0_62 = arith.constant 0 : index
    %c0_63 = arith.constant 0 : index
    %93 = vector.load %arg1[%c31, %c0_62, %c0_63] : memref<38x4x16xf32, #tpu.memory_space<vmem>>, vector<1x4x16xf32>
    %94 = vector.shape_cast %93 : vector<1x4x16xf32> to vector<4x16xf32>
    %95 = vector.shape_cast %94 : vector<4x16xf32> to vector<4x1x16xf32>
    %c32 = arith.constant 32 : index
    %c0_64 = arith.constant 0 : index
    %c0_65 = arith.constant 0 : index
    %96 = vector.load %arg1[%c32, %c0_64, %c0_65] : memref<38x4x16xf32, #tpu.memory_space<vmem>>, vector<1x4x16xf32>
    %97 = vector.shape_cast %96 : vector<1x4x16xf32> to vector<4x16xf32>
    %98 = vector.shape_cast %97 : vector<4x16xf32> to vector<4x1x16xf32>
    %c33 = arith.constant 33 : index
    %c0_66 = arith.constant 0 : index
    %c0_67 = arith.constant 0 : index
    %99 = vector.load %arg1[%c33, %c0_66, %c0_67] : memref<38x4x16xf32, #tpu.memory_space<vmem>>, vector<1x4x16xf32>
    %100 = vector.shape_cast %99 : vector<1x4x16xf32> to vector<4x16xf32>
    %101 = vector.shape_cast %100 : vector<4x16xf32> to vector<4x1x16xf32>
    %c34 = arith.constant 34 : index
    %c0_68 = arith.constant 0 : index
    %c0_69 = arith.constant 0 : index
    %102 = vector.load %arg1[%c34, %c0_68, %c0_69] : memref<38x4x16xf32, #tpu.memory_space<vmem>>, vector<1x4x16xf32>
    %103 = vector.shape_cast %102 : vector<1x4x16xf32> to vector<4x16xf32>
    %104 = vector.shape_cast %103 : vector<4x16xf32> to vector<4x1x16xf32>
    %c35 = arith.constant 35 : index
    %c0_70 = arith.constant 0 : index
    %c0_71 = arith.constant 0 : index
    %105 = vector.load %arg1[%c35, %c0_70, %c0_71] : memref<38x4x16xf32, #tpu.memory_space<vmem>>, vector<1x4x16xf32>
    %106 = vector.shape_cast %105 : vector<1x4x16xf32> to vector<4x16xf32>
    %107 = vector.shape_cast %106 : vector<4x16xf32> to vector<4x1x16xf32>
    %c36 = arith.constant 36 : index
    %c0_72 = arith.constant 0 : index
    %c0_73 = arith.constant 0 : index
    %108 = vector.load %arg1[%c36, %c0_72, %c0_73] : memref<38x4x16xf32, #tpu.memory_space<vmem>>, vector<1x4x16xf32>
    %109 = vector.shape_cast %108 : vector<1x4x16xf32> to vector<4x16xf32>
    %110 = vector.shape_cast %109 : vector<4x16xf32> to vector<4x1x16xf32>
    %c37 = arith.constant 37 : index
    %c0_74 = arith.constant 0 : index
    %c0_75 = arith.constant 0 : index
    %111 = vector.load %arg1[%c37, %c0_74, %c0_75] : memref<38x4x16xf32, #tpu.memory_space<vmem>>, vector<1x4x16xf32>
    %112 = vector.shape_cast %111 : vector<1x4x16xf32> to vector<4x16xf32>
    %113 = vector.shape_cast %112 : vector<4x16xf32> to vector<4x1x16xf32>
    %c0_76 = arith.constant 0 : index
    %c0_77 = arith.constant 0 : index
    %c0_78 = arith.constant 0 : index
    %c0_79 = arith.constant 0 : index
    %114 = vector.load %arg2[%c0_76, %c0_77, %c0_78, %c0_79] : memref<1x4x20x20xf32, #tpu.memory_space<vmem>>, vector<1x4x16x16xf32>
    %115 = vector.shape_cast %114 : vector<1x4x16x16xf32> to vector<4x16x16xf32>
    %116 = vector.broadcast %32 : vector<4x1x16xf32> to vector<4x16x16xf32>
    %117 = arith.mulf %115, %116 : vector<4x16x16xf32>
    %c0_80 = arith.constant 0 : index
    %c0_81 = arith.constant 0 : index
    %c0_82 = arith.constant 0 : index
    %c1_83 = arith.constant 1 : index
    %118 = vector.load %arg2[%c0_80, %c0_81, %c0_82, %c1_83] : memref<1x4x20x20xf32, #tpu.memory_space<vmem>>, vector<1x4x16x16xf32>
    %119 = vector.shape_cast %118 : vector<1x4x16x16xf32> to vector<4x16x16xf32>
    %120 = vector.broadcast %35 : vector<4x1x16xf32> to vector<4x16x16xf32>
    %121 = arith.mulf %119, %120 : vector<4x16x16xf32>
    %122 = arith.addf %117, %121 : vector<4x16x16xf32>
    %c0_84 = arith.constant 0 : index
    %c0_85 = arith.constant 0 : index
    %c0_86 = arith.constant 0 : index
    %c2_87 = arith.constant 2 : index
    %123 = vector.load %arg2[%c0_84, %c0_85, %c0_86, %c2_87] : memref<1x4x20x20xf32, #tpu.memory_space<vmem>>, vector<1x4x16x16xf32>
    %124 = vector.shape_cast %123 : vector<1x4x16x16xf32> to vector<4x16x16xf32>
    %125 = vector.broadcast %38 : vector<4x1x16xf32> to vector<4x16x16xf32>
    %126 = arith.mulf %124, %125 : vector<4x16x16xf32>
    %127 = arith.addf %122, %126 : vector<4x16x16xf32>
    %c0_88 = arith.constant 0 : index
    %c0_89 = arith.constant 0 : index
    %c0_90 = arith.constant 0 : index
    %c3_91 = arith.constant 3 : index
    %128 = vector.load %arg2[%c0_88, %c0_89, %c0_90, %c3_91] : memref<1x4x20x20xf32, #tpu.memory_space<vmem>>, vector<1x4x16x16xf32>
    %129 = vector.shape_cast %128 : vector<1x4x16x16xf32> to vector<4x16x16xf32>
    %130 = vector.broadcast %41 : vector<4x1x16xf32> to vector<4x16x16xf32>
    %131 = arith.mulf %129, %130 : vector<4x16x16xf32>
    %132 = arith.addf %127, %131 : vector<4x16x16xf32>
    %c0_92 = arith.constant 0 : index
    %c0_93 = arith.constant 0 : index
    %c0_94 = arith.constant 0 : index
    %c4_95 = arith.constant 4 : index
    %133 = vector.load %arg2[%c0_92, %c0_93, %c0_94, %c4_95] : memref<1x4x20x20xf32, #tpu.memory_space<vmem>>, vector<1x4x16x16xf32>
    %134 = vector.shape_cast %133 : vector<1x4x16x16xf32> to vector<4x16x16xf32>
    %135 = vector.broadcast %44 : vector<4x1x16xf32> to vector<4x16x16xf32>
    %136 = arith.mulf %134, %135 : vector<4x16x16xf32>
    %137 = arith.addf %132, %136 : vector<4x16x16xf32>
    %c0_96 = arith.constant 0 : index
    %c0_97 = arith.constant 0 : index
    %c1_98 = arith.constant 1 : index
    %c0_99 = arith.constant 0 : index
    %138 = vector.load %arg2[%c0_96, %c0_97, %c1_98, %c0_99] : memref<1x4x20x20xf32, #tpu.memory_space<vmem>>, vector<1x4x16x16xf32>
    %139 = vector.shape_cast %138 : vector<1x4x16x16xf32> to vector<4x16x16xf32>
    %140 = vector.broadcast %47 : vector<4x1x16xf32> to vector<4x16x16xf32>
    %141 = arith.mulf %139, %140 : vector<4x16x16xf32>
    %c0_100 = arith.constant 0 : index
    %c0_101 = arith.constant 0 : index
    %c1_102 = arith.constant 1 : index
    %c1_103 = arith.constant 1 : index
    %142 = vector.load %arg2[%c0_100, %c0_101, %c1_102, %c1_103] : memref<1x4x20x20xf32, #tpu.memory_space<vmem>>, vector<1x4x16x16xf32>
    %143 = vector.shape_cast %142 : vector<1x4x16x16xf32> to vector<4x16x16xf32>
    %144 = vector.broadcast %50 : vector<4x1x16xf32> to vector<4x16x16xf32>
    %145 = arith.mulf %143, %144 : vector<4x16x16xf32>
    %146 = arith.addf %141, %145 : vector<4x16x16xf32>
    %147 = vector.broadcast %5 : vector<4x1x16xf32> to vector<4x16x16xf32>
    %148 = arith.mulf %143, %147 : vector<4x16x16xf32>
    %c0_104 = arith.constant 0 : index
    %c0_105 = arith.constant 0 : index
    %c1_106 = arith.constant 1 : index
    %c2_107 = arith.constant 2 : index
    %149 = vector.load %arg2[%c0_104, %c0_105, %c1_106, %c2_107] : memref<1x4x20x20xf32, #tpu.memory_space<vmem>>, vector<1x4x16x16xf32>
    %150 = vector.shape_cast %149 : vector<1x4x16x16xf32> to vector<4x16x16xf32>
    %151 = vector.broadcast %53 : vector<4x1x16xf32> to vector<4x16x16xf32>
    %152 = arith.mulf %150, %151 : vector<4x16x16xf32>
    %153 = arith.addf %146, %152 : vector<4x16x16xf32>
    %154 = vector.broadcast %8 : vector<4x1x16xf32> to vector<4x16x16xf32>
    %155 = arith.mulf %150, %154 : vector<4x16x16xf32>
    %156 = arith.addf %148, %155 : vector<4x16x16xf32>
    %c0_108 = arith.constant 0 : index
    %c0_109 = arith.constant 0 : index
    %c1_110 = arith.constant 1 : index
    %c3_111 = arith.constant 3 : index
    %157 = vector.load %arg2[%c0_108, %c0_109, %c1_110, %c3_111] : memref<1x4x20x20xf32, #tpu.memory_space<vmem>>, vector<1x4x16x16xf32>
    %158 = vector.shape_cast %157 : vector<1x4x16x16xf32> to vector<4x16x16xf32>
    %159 = vector.broadcast %56 : vector<4x1x16xf32> to vector<4x16x16xf32>
    %160 = arith.mulf %158, %159 : vector<4x16x16xf32>
    %161 = arith.addf %153, %160 : vector<4x16x16xf32>
    %162 = vector.broadcast %11 : vector<4x1x16xf32> to vector<4x16x16xf32>
    %163 = arith.mulf %158, %162 : vector<4x16x16xf32>
    %164 = arith.addf %156, %163 : vector<4x16x16xf32>
    %c0_112 = arith.constant 0 : index
    %c0_113 = arith.constant 0 : index
    %c1_114 = arith.constant 1 : index
    %c4_115 = arith.constant 4 : index
    %165 = vector.load %arg2[%c0_112, %c0_113, %c1_114, %c4_115] : memref<1x4x20x20xf32, #tpu.memory_space<vmem>>, vector<1x4x16x16xf32>
    %166 = vector.shape_cast %165 : vector<1x4x16x16xf32> to vector<4x16x16xf32>
    %167 = vector.broadcast %59 : vector<4x1x16xf32> to vector<4x16x16xf32>
    %168 = arith.mulf %166, %167 : vector<4x16x16xf32>
    %169 = arith.addf %161, %168 : vector<4x16x16xf32>
    %c0_116 = arith.constant 0 : index
    %c0_117 = arith.constant 0 : index
    %c2_118 = arith.constant 2 : index
    %c0_119 = arith.constant 0 : index
    %170 = vector.load %arg2[%c0_116, %c0_117, %c2_118, %c0_119] : memref<1x4x20x20xf32, #tpu.memory_space<vmem>>, vector<1x4x16x16xf32>
    %171 = vector.shape_cast %170 : vector<1x4x16x16xf32> to vector<4x16x16xf32>
    %172 = vector.broadcast %62 : vector<4x1x16xf32> to vector<4x16x16xf32>
    %173 = arith.mulf %171, %172 : vector<4x16x16xf32>
    %c0_120 = arith.constant 0 : index
    %c0_121 = arith.constant 0 : index
    %c2_122 = arith.constant 2 : index
    %c1_123 = arith.constant 1 : index
    %174 = vector.load %arg2[%c0_120, %c0_121, %c2_122, %c1_123] : memref<1x4x20x20xf32, #tpu.memory_space<vmem>>, vector<1x4x16x16xf32>
    %175 = vector.shape_cast %174 : vector<1x4x16x16xf32> to vector<4x16x16xf32>
    %176 = vector.broadcast %65 : vector<4x1x16xf32> to vector<4x16x16xf32>
    %177 = arith.mulf %175, %176 : vector<4x16x16xf32>
    %178 = arith.addf %173, %177 : vector<4x16x16xf32>
    %179 = vector.broadcast %14 : vector<4x1x16xf32> to vector<4x16x16xf32>
    %180 = arith.mulf %175, %179 : vector<4x16x16xf32>
    %c0_124 = arith.constant 0 : index
    %c0_125 = arith.constant 0 : index
    %c2_126 = arith.constant 2 : index
    %c2_127 = arith.constant 2 : index
    %181 = vector.load %arg2[%c0_124, %c0_125, %c2_126, %c2_127] : memref<1x4x20x20xf32, #tpu.memory_space<vmem>>, vector<1x4x16x16xf32>
    %182 = vector.shape_cast %181 : vector<1x4x16x16xf32> to vector<4x16x16xf32>
    %183 = vector.broadcast %68 : vector<4x1x16xf32> to vector<4x16x16xf32>
    %184 = arith.mulf %182, %183 : vector<4x16x16xf32>
    %185 = arith.addf %178, %184 : vector<4x16x16xf32>
    %186 = vector.broadcast %17 : vector<4x1x16xf32> to vector<4x16x16xf32>
    %187 = arith.mulf %182, %186 : vector<4x16x16xf32>
    %188 = arith.addf %180, %187 : vector<4x16x16xf32>
    %c0_128 = arith.constant 0 : index
    %c0_129 = arith.constant 0 : index
    %c2_130 = arith.constant 2 : index
    %c3_131 = arith.constant 3 : index
    %189 = vector.load %arg2[%c0_128, %c0_129, %c2_130, %c3_131] : memref<1x4x20x20xf32, #tpu.memory_space<vmem>>, vector<1x4x16x16xf32>
    %190 = vector.shape_cast %189 : vector<1x4x16x16xf32> to vector<4x16x16xf32>
    %191 = vector.broadcast %71 : vector<4x1x16xf32> to vector<4x16x16xf32>
    %192 = arith.mulf %190, %191 : vector<4x16x16xf32>
    %193 = arith.addf %185, %192 : vector<4x16x16xf32>
    %194 = vector.broadcast %20 : vector<4x1x16xf32> to vector<4x16x16xf32>
    %195 = arith.mulf %190, %194 : vector<4x16x16xf32>
    %196 = arith.addf %188, %195 : vector<4x16x16xf32>
    %c0_132 = arith.constant 0 : index
    %c0_133 = arith.constant 0 : index
    %c2_134 = arith.constant 2 : index
    %c4_135 = arith.constant 4 : index
    %197 = vector.load %arg2[%c0_132, %c0_133, %c2_134, %c4_135] : memref<1x4x20x20xf32, #tpu.memory_space<vmem>>, vector<1x4x16x16xf32>
    %198 = vector.shape_cast %197 : vector<1x4x16x16xf32> to vector<4x16x16xf32>
    %199 = vector.broadcast %74 : vector<4x1x16xf32> to vector<4x16x16xf32>
    %200 = arith.mulf %198, %199 : vector<4x16x16xf32>
    %201 = arith.addf %193, %200 : vector<4x16x16xf32>
    %c0_136 = arith.constant 0 : index
    %c0_137 = arith.constant 0 : index
    %c3_138 = arith.constant 3 : index
    %c0_139 = arith.constant 0 : index
    %202 = vector.load %arg2[%c0_136, %c0_137, %c3_138, %c0_139] : memref<1x4x20x20xf32, #tpu.memory_space<vmem>>, vector<1x4x16x16xf32>
    %203 = vector.shape_cast %202 : vector<1x4x16x16xf32> to vector<4x16x16xf32>
    %204 = vector.broadcast %77 : vector<4x1x16xf32> to vector<4x16x16xf32>
    %205 = arith.mulf %203, %204 : vector<4x16x16xf32>
    %c0_140 = arith.constant 0 : index
    %c0_141 = arith.constant 0 : index
    %c3_142 = arith.constant 3 : index
    %c1_143 = arith.constant 1 : index
    %206 = vector.load %arg2[%c0_140, %c0_141, %c3_142, %c1_143] : memref<1x4x20x20xf32, #tpu.memory_space<vmem>>, vector<1x4x16x16xf32>
    %207 = vector.shape_cast %206 : vector<1x4x16x16xf32> to vector<4x16x16xf32>
    %208 = vector.broadcast %80 : vector<4x1x16xf32> to vector<4x16x16xf32>
    %209 = arith.mulf %207, %208 : vector<4x16x16xf32>
    %210 = arith.addf %205, %209 : vector<4x16x16xf32>
    %211 = vector.broadcast %23 : vector<4x1x16xf32> to vector<4x16x16xf32>
    %212 = arith.mulf %207, %211 : vector<4x16x16xf32>
    %c0_144 = arith.constant 0 : index
    %c0_145 = arith.constant 0 : index
    %c3_146 = arith.constant 3 : index
    %c2_147 = arith.constant 2 : index
    %213 = vector.load %arg2[%c0_144, %c0_145, %c3_146, %c2_147] : memref<1x4x20x20xf32, #tpu.memory_space<vmem>>, vector<1x4x16x16xf32>
    %214 = vector.shape_cast %213 : vector<1x4x16x16xf32> to vector<4x16x16xf32>
    %215 = vector.broadcast %83 : vector<4x1x16xf32> to vector<4x16x16xf32>
    %216 = arith.mulf %214, %215 : vector<4x16x16xf32>
    %217 = arith.addf %210, %216 : vector<4x16x16xf32>
    %218 = vector.broadcast %26 : vector<4x1x16xf32> to vector<4x16x16xf32>
    %219 = arith.mulf %214, %218 : vector<4x16x16xf32>
    %220 = arith.addf %212, %219 : vector<4x16x16xf32>
    %c0_148 = arith.constant 0 : index
    %c0_149 = arith.constant 0 : index
    %c3_150 = arith.constant 3 : index
    %c3_151 = arith.constant 3 : index
    %221 = vector.load %arg2[%c0_148, %c0_149, %c3_150, %c3_151] : memref<1x4x20x20xf32, #tpu.memory_space<vmem>>, vector<1x4x16x16xf32>
    %222 = vector.shape_cast %221 : vector<1x4x16x16xf32> to vector<4x16x16xf32>
    %223 = vector.broadcast %86 : vector<4x1x16xf32> to vector<4x16x16xf32>
    %224 = arith.mulf %222, %223 : vector<4x16x16xf32>
    %225 = arith.addf %217, %224 : vector<4x16x16xf32>
    %226 = vector.broadcast %29 : vector<4x1x16xf32> to vector<4x16x16xf32>
    %227 = arith.mulf %222, %226 : vector<4x16x16xf32>
    %228 = arith.addf %220, %227 : vector<4x16x16xf32>
    %c0_152 = arith.constant 0 : index
    %c0_153 = arith.constant 0 : index
    %c3_154 = arith.constant 3 : index
    %c4_155 = arith.constant 4 : index
    %229 = vector.load %arg2[%c0_152, %c0_153, %c3_154, %c4_155] : memref<1x4x20x20xf32, #tpu.memory_space<vmem>>, vector<1x4x16x16xf32>
    %230 = vector.shape_cast %229 : vector<1x4x16x16xf32> to vector<4x16x16xf32>
    %231 = vector.broadcast %89 : vector<4x1x16xf32> to vector<4x16x16xf32>
    %232 = arith.mulf %230, %231 : vector<4x16x16xf32>
    %233 = arith.addf %225, %232 : vector<4x16x16xf32>
    %c0_156 = arith.constant 0 : index
    %c0_157 = arith.constant 0 : index
    %c4_158 = arith.constant 4 : index
    %c0_159 = arith.constant 0 : index
    %234 = vector.load %arg2[%c0_156, %c0_157, %c4_158, %c0_159] : memref<1x4x20x20xf32, #tpu.memory_space<vmem>>, vector<1x4x16x16xf32>
    %235 = vector.shape_cast %234 : vector<1x4x16x16xf32> to vector<4x16x16xf32>
    %236 = vector.broadcast %92 : vector<4x1x16xf32> to vector<4x16x16xf32>
    %237 = arith.mulf %235, %236 : vector<4x16x16xf32>
    %c0_160 = arith.constant 0 : index
    %c0_161 = arith.constant 0 : index
    %c4_162 = arith.constant 4 : index
    %c1_163 = arith.constant 1 : index
    %238 = vector.load %arg2[%c0_160, %c0_161, %c4_162, %c1_163] : memref<1x4x20x20xf32, #tpu.memory_space<vmem>>, vector<1x4x16x16xf32>
    %239 = vector.shape_cast %238 : vector<1x4x16x16xf32> to vector<4x16x16xf32>
    %240 = vector.broadcast %95 : vector<4x1x16xf32> to vector<4x16x16xf32>
    %241 = arith.mulf %239, %240 : vector<4x16x16xf32>
    %242 = arith.addf %237, %241 : vector<4x16x16xf32>
    %c0_164 = arith.constant 0 : index
    %c0_165 = arith.constant 0 : index
    %c4_166 = arith.constant 4 : index
    %c2_167 = arith.constant 2 : index
    %243 = vector.load %arg2[%c0_164, %c0_165, %c4_166, %c2_167] : memref<1x4x20x20xf32, #tpu.memory_space<vmem>>, vector<1x4x16x16xf32>
    %244 = vector.shape_cast %243 : vector<1x4x16x16xf32> to vector<4x16x16xf32>
    %245 = vector.broadcast %98 : vector<4x1x16xf32> to vector<4x16x16xf32>
    %246 = arith.mulf %244, %245 : vector<4x16x16xf32>
    %247 = arith.addf %242, %246 : vector<4x16x16xf32>
    %c0_168 = arith.constant 0 : index
    %c0_169 = arith.constant 0 : index
    %c4_170 = arith.constant 4 : index
    %c3_171 = arith.constant 3 : index
    %248 = vector.load %arg2[%c0_168, %c0_169, %c4_170, %c3_171] : memref<1x4x20x20xf32, #tpu.memory_space<vmem>>, vector<1x4x16x16xf32>
    %249 = vector.shape_cast %248 : vector<1x4x16x16xf32> to vector<4x16x16xf32>
    %250 = vector.broadcast %101 : vector<4x1x16xf32> to vector<4x16x16xf32>
    %251 = arith.mulf %249, %250 : vector<4x16x16xf32>
    %252 = arith.addf %247, %251 : vector<4x16x16xf32>
    %c0_172 = arith.constant 0 : index
    %c0_173 = arith.constant 0 : index
    %c4_174 = arith.constant 4 : index
    %c4_175 = arith.constant 4 : index
    %253 = vector.load %arg2[%c0_172, %c0_173, %c4_174, %c4_175] : memref<1x4x20x20xf32, #tpu.memory_space<vmem>>, vector<1x4x16x16xf32>
    %254 = vector.shape_cast %253 : vector<1x4x16x16xf32> to vector<4x16x16xf32>
    %255 = vector.broadcast %104 : vector<4x1x16xf32> to vector<4x16x16xf32>
    %256 = arith.mulf %254, %255 : vector<4x16x16xf32>
    %257 = arith.addf %252, %256 : vector<4x16x16xf32>
    %258 = arith.addf %137, %169 : vector<4x16x16xf32>
    %259 = arith.addf %201, %233 : vector<4x16x16xf32>
    %260 = arith.addf %258, %259 : vector<4x16x16xf32>
    %261 = arith.addf %260, %257 : vector<4x16x16xf32>
    %262 = arith.addf %164, %196 : vector<4x16x16xf32>
    %263 = arith.addf %262, %228 : vector<4x16x16xf32>
    %264 = vector.broadcast %113 : vector<4x1x16xf32> to vector<4x16x16xf32>
    %265 = arith.addf %261, %264 : vector<4x16x16xf32>
    %cst = arith.constant 0.000000e+00 : f32
    %cst_176 = arith.constant 6.000000e+00 : f32
    %266 = vector.broadcast %cst : f32 to vector<4x16x16xf32>
    %267 = arith.maximumf %266, %265 : vector<4x16x16xf32>
    %268 = vector.broadcast %cst_176 : f32 to vector<4x16x16xf32>
    %269 = arith.minimumf %268, %267 : vector<4x16x16xf32>
    %270 = vector.broadcast %110 : vector<4x1x16xf32> to vector<4x16x16xf32>
    %271 = arith.addf %263, %270 : vector<4x16x16xf32>
    %cst_177 = arith.constant 0.000000e+00 : f32
    %cst_178 = arith.constant 6.000000e+00 : f32
    %272 = vector.broadcast %cst_177 : f32 to vector<4x16x16xf32>
    %273 = arith.maximumf %272, %271 : vector<4x16x16xf32>
    %274 = vector.broadcast %cst_178 : f32 to vector<4x16x16xf32>
    %275 = arith.minimumf %274, %273 : vector<4x16x16xf32>
    %276 = arith.addf %269, %275 : vector<4x16x16xf32>
    %277 = vector.broadcast %2 : vector<4x1x16xf32> to vector<4x16x16xf32>
    %278 = arith.mulf %182, %277 : vector<4x16x16xf32>
    %279 = vector.broadcast %107 : vector<4x1x16xf32> to vector<4x16x16xf32>
    %280 = arith.addf %278, %279 : vector<4x16x16xf32>
    %cst_179 = arith.constant 0.000000e+00 : f32
    %cst_180 = arith.constant 6.000000e+00 : f32
    %281 = vector.broadcast %cst_179 : f32 to vector<4x16x16xf32>
    %282 = arith.maximumf %281, %280 : vector<4x16x16xf32>
    %283 = vector.broadcast %cst_180 : f32 to vector<4x16x16xf32>
    %284 = arith.minimumf %283, %282 : vector<4x16x16xf32>
    %285 = arith.addf %276, %284 : vector<4x16x16xf32>
    %c0_181 = arith.constant 0 : index
    %c0_182 = arith.constant 0 : index
    %c0_183 = arith.constant 0 : index
    %c0_184 = arith.constant 0 : index
    %286 = vector.load %arg3[%c0_181, %c0_182, %c0_183, %c0_184] : memref<1x4x16x16xf32, #tpu.memory_space<vmem>>, vector<1x4x16x16xf32>
    %287 = vector.shape_cast %286 : vector<1x4x16x16xf32> to vector<4x16x16xf32>
    %288 = vector.shape_cast %285 : vector<4x16x16xf32> to vector<1x4x16x16xf32>
    tpu.vector_store %arg3[%c0_181, %c0_182, %c0_183, %c0_184], %288 {strides = array<i32>} : memref<1x4x16x16xf32, #tpu.memory_space<vmem>>, vector<1x4x16x16xf32>,
    return
  }
  func.func @transform_0(%arg0: i32) -> (i32, i32, i32) {
    %c0_i32 = arith.constant 0 : i32
    %c0_i32_0 = arith.constant 0 : i32
    %c0_i32_1 = arith.constant 0 : i32
    %c0_i32_2 = arith.constant 0 : i32
    return %c0_i32, %c0_i32_0, %c0_i32_1 : i32, i32, i32
  }
  func.func @transform_1(%arg0: i32) -> (i32, i32, i32, i32) {
    %c0_i32 = arith.constant 0 : i32
    %c0_i32_0 = arith.constant 0 : i32
    %c0_i32_1 = arith.constant 0 : i32
    %c0_i32_2 = arith.constant 0 : i32
    return %arg0, %c0_i32, %c0_i32_0, %c0_i32_1 : i32, i32, i32, i32
  }
  func.func @transform_2(%arg0: i32) -> (i32, i32, i32, i32) {
    %c0_i32 = arith.constant 0 : i32
    %c0_i32_0 = arith.constant 0 : i32
    %c0_i32_1 = arith.constant 0 : i32
    %c0_i32_2 = arith.constant 0 : i32
    return %arg0, %c0_i32, %c0_i32_0, %c0_i32_1 : i32, i32, i32, i32
  }
}

</mosaic_0001>

<llo_original>
// kernel: tpu_custom_call.1
$region0: #{tpu_custom_call.1}
  #allocation0 [shape = 'u32[]', space=smem, size = 0x4, offset = 0x4, fixed_abs, tag = 'smem constant byte address 0x4 - core index']
  #allocation1 [shape = 'u32[144,128]{1,0:T(1,128)}', space=vmem, size = 0x12000, scoped, tag = 'internal scratch']
  %s0 = inlined_call_operand.hbm [shape: f32[38,4,16], index: 0, kind: input, shape index: {}]
  %s1 = inlined_call_operand.hbm [shape: f32[2,4,20,20], index: 1, kind: input, shape index: {}]
  %s2 = inlined_call_operand.hbm [shape: f32[2,4,16,16], index: 2, kind: output, shape index: {}]
  %s3 = sld [smem:[#allocation0]]
  $region49: #{tpu_custom_call.1} parent=0
    _
  %s5 = ssub.s32 1, %s3
  %s6 = scalar_select 0, %s5, %s3
  $region1: #{tpu_custom_call.1} parent=0
    #allocation2 [shape = 'u8[77824]{0}', space=vmem, size = 0x13000, scoped, tag = 'input window, operand 0, single buffered']
    #allocation3 [shape = 's32[2]{0}', space=sflag, size = 0x8, scoped, tag = 'scoped memory for tpu_custom_call.1']
    #allocation4 [shape = 's32[2]{0}', space=sflag, size = 0x8, scoped, tag = 'scoped memory for tpu_custom_call.1']
    #allocation5 [shape = 'u8[98304]{0}', space=vmem, size = 0x18000, scoped, tag = 'input window, operand 1']
    #allocation6 [shape = 's32[2]{0}', space=sflag, size = 0x8, scoped, tag = 'scoped memory for tpu_custom_call.1']
    #allocation7 [shape = 'u8[65536]{0}', space=vmem, size = 0x10000, scoped, tag = 'output window, operand 0']
    %7 = vsyncpa [#allocation3], 0
    %8 = vsyncpa [#allocation6], 0
    %s9 = scalar_lea.sflag [#allocation6], 1
    %10 = vsyncpa %s9, 0
    %11 = vsyncpa [#allocation4], 0
    %s12 = scalar_lea.sflag [#allocation4], 1
    %13 = vsyncpa %s12, 0
    loop: start=0, step=1, limit=4
    $region2: #{tpu_custom_call.1} parent=1 // loop_pre_header
      _
    $region3: #{tpu_custom_call.1} parent=1 // loop_header
      %s15 = sphi 0, %s19
      %p16 = scmp.ge.s32.totalorder %s15, 4
      %s23 = sphi 0, %s23
      %s25 = sphi 0, %s23
      %s26 = sphi 0, %s25
      %s40 = sphi 0, %s26
      %s46 = sphi 0, %s48
      %s49 = sphi 0, %s46
      %s50 = sphi 0, %s49
      %s66 = sphi 0, %s50
      %s72 = sphi 0, %s74
      %s75 = sphi 0, %s72
      %s76 = sphi 0, %s75
      %s92 = sphi 0, %s76
    $region4: #{tpu_custom_call.1} parent=1 // loop_header_branch
      %18 = sbr.rel (%p16) target = $region8
    $region5: #{tpu_custom_call.1} parent=1 // loop_body
      %s20 = ssub.s32 %s15, 1
      %s21 = ssub.s32 %s15, 2
      %s22 = sadd.s32 %s15, 1
      %s24 = sadd.s32 %s23, 1
      %p27 = scmp.eq.s32.totalorder %s15, 1
      %p28 = scmp.ne.s32.totalorder %s23, %s25
      %p29 = scmp.eq.s32.totalorder %s15, 0
      %p30 = por %p28, %p29
      %p31 = scmp.ne.s32.totalorder %s23, %s25
      %p32 = scmp.eq.s32.totalorder %s20, 1
      %p33 = por %p31, %p32
      %p34 = scmp.ne.s32.totalorder %s25, %s26
      %p35 = scmp.eq.s32.totalorder %s20, 0
      %p36 = por %p34, %p35
      %p37 = scmp.ne.s32.totalorder %s25, %s26
      %p38 = scmp.eq.s32.totalorder %s21, 1
      %p39 = por %p37, %p38
      %p41 = scmp.ne.s32.totalorder %s26, %s40
      %p42 = scmp.eq.s32.totalorder %s21, 0
      %p43 = por %p41, %p42
      %s44 = ssub.s32 %s15, %s22
      %p45 = scmp.eq.s32.totalorder %s44, 0
      %s47 = sadd.s32 %s46, 1
      %s48 = scalar_select %p45, %s46, %s47
      %p51 = pneg %p45
      %p52 = scmp.eq.s32.totalorder %s15, 1
      %p53 = por %p51, %p52
      %p54 = scmp.ne.s32.totalorder %s46, %s49
      %p55 = scmp.eq.s32.totalorder %s15, 0
      %p56 = por %p54, %p55
      %p57 = scmp.ne.s32.totalorder %s46, %s49
      %p58 = scmp.eq.s32.totalorder %s20, 1
      %p59 = por %p57, %p58
      %p60 = scmp.ne.s32.totalorder %s49, %s50
      %p61 = scmp.eq.s32.totalorder %s20, 0
      %p62 = por %p60, %p61
      %p63 = scmp.ne.s32.totalorder %s49, %s50
      %p64 = scmp.eq.s32.totalorder %s21, 1
      %p65 = por %p63, %p64
      %p67 = scmp.ne.s32.totalorder %s50, %s66
      %p68 = scmp.eq.s32.totalorder %s21, 0
      %p69 = por %p67, %p68
      %s70 = ssub.s32 %s15, %s22
      %p71 = scmp.eq.s32.totalorder %s70, 0
      %s73 = sadd.s32 %s72, 1
      %s74 = scalar_select %p71, %s72, %s73
      %p77 = pneg %p71
      %p78 = scmp.eq.s32.totalorder %s15, 1
      %p79 = por %p77, %p78
      %p80 = scmp.ne.s32.totalorder %s72, %s75
      %p81 = scmp.eq.s32.totalorder %s15, 0
      %p82 = por %p80, %p81
      %p83 = scmp.ne.s32.totalorder %s72, %s75
      %p84 = scmp.eq.s32.totalorder %s20, 1
      %p85 = por %p83, %p84
      %p86 = scmp.ne.s32.totalorder %s75, %s76
      %p87 = scmp.eq.s32.totalorder %s20, 0
      %p88 = por %p86, %p87
      %p89 = scmp.ne.s32.totalorder %s75, %s76
      %p90 = scmp.eq.s32.totalorder %s21, 1
      %p91 = por %p89, %p90
      %p93 = scmp.ne.s32.totalorder %s76, %s92
      %p94 = scmp.eq.s32.totalorder %s21, 0
      %p95 = por %p93, %p94
      %p96 = scmp.le.s32.totalorder 1, %s15
      %p97 = scmp.lt.s32.totalorder %s15, 3
      %p98 = pnand %p96, %p97
      %p99 = pneg %p98
      // Predicated region
      $region9: #{tpu_custom_call.1} parent=5 // pred_check
        _
      $region10: #{tpu_custom_call.1} parent=5 // pred_check_branch
        %101 = sbr.rel (%p98) target = $region12
      $region11: #{tpu_custom_call.1} parent=5 // pred_region
        %s102 = ssub.s32 %s15, 1
        // Predicated region
        $region13: #{tpu_custom_call.1} parent=11 // pred_check
          %p103 = pneg %p36
        $region14: #{tpu_custom_call.1} parent=11 // pred_check_branch
          %105 = sbr.rel (%p103) target = $region16
        $region15: #{tpu_custom_call.1} parent=11 // pred_region
          %s107 = ssub.s32 2432, 2432
          %108 = vsyncadd [#allocation3], %s107
          %s109 = sshll.u32 [#allocation2], 4
          %s110 = int_to_ptr.vmem [resolvable:$true] %s109
          %115 = dma.hbm_to_vmem [thread:$0]  %s0, 2432, %s110, [#allocation3], 64, 64, 4
        $region16: #{tpu_custom_call.1} parent=11 // pred_fallthru
          _
      $region12: #{tpu_custom_call.1} parent=5 // pred_fallthru
        _
      %p116 = scmp.lt.s32.totalorder %s15, 2
      // Predicated region
      $region17: #{tpu_custom_call.1} parent=5 // pred_check
        %p117 = pneg %p116
      $region18: #{tpu_custom_call.1} parent=5 // pred_check_branch
        %119 = sbr.rel (%p117) target = $region20
      $region19: #{tpu_custom_call.1} parent=5 // pred_region
        // Predicated region
        $region21: #{tpu_custom_call.1} parent=19 // pred_check
          %p120 = pneg %p56
        $region22: #{tpu_custom_call.1} parent=19 // pred_check_branch
          %122 = sbr.rel (%p120) target = $region24
        $region23: #{tpu_custom_call.1} parent=19 // pred_region
          %s123 = sand.u32 %s46, 1
          %s124 = scalar_lea.sflag [#allocation6], %s123
          %s125 = sand.u32 %s46, 1
          %s126 = smul.addr %s125, 96
          %s127 = scalar_lea.vmem [#allocation5], %s126
          %s129 = ssub.s32 1536, 1536
          %130 = vsyncadd %s124, %s129
          %s131 = smul.addr %s15, 12
          %s132 = smul.addr %s131, 128
          %s133 = scalar_lea.hbm %s1, %s132
          %s134 = sshll.u32 %s127, 4
          %s135 = int_to_ptr.vmem [resolvable:$true] %s134
          %140 = dma.hbm_to_vmem [thread:$0]  %s133, 1536, %s135, %s124, 128, 128, 8
        $region24: #{tpu_custom_call.1} parent=19 // pred_fallthru
          _
      $region20: #{tpu_custom_call.1} parent=5 // pred_fallthru
        _
      %p141 = scmp.le.s32.totalorder 1, %s15
      %p142 = scmp.lt.s32.totalorder %s15, 3
      %p143 = pnand %p141, %p142
      %p144 = pneg %p143
      // Predicated region
      $region25: #{tpu_custom_call.1} parent=5 // pred_check
        _
      $region26: #{tpu_custom_call.1} parent=5 // pred_check_branch
        %146 = sbr.rel (%p143) target = $region28
      $region27: #{tpu_custom_call.1} parent=5 // pred_region
        %s147 = ssub.s32 %s15, 1
        // Predicated region
        $region29: #{tpu_custom_call.1} parent=27 // pred_check
          %p148 = pneg %p36
        $region30: #{tpu_custom_call.1} parent=27 // pred_check_branch
          %150 = sbr.rel (%p148) target = $region32
        $region31: #{tpu_custom_call.1} parent=27 // pred_region
          %151 = dma.done [#allocation3], 2432
        $region32: #{tpu_custom_call.1} parent=27 // pred_fallthru
          _
        %s152 = sand.u32 %s49, 1
        %s153 = scalar_lea.sflag [#allocation6], %s152
        %s154 = sand.u32 %s49, 1
        %s155 = smul.addr %s154, 96
        %s156 = scalar_lea.vmem [#allocation5], %s155
        // Predicated region
        $region33: #{tpu_custom_call.1} parent=27 // pred_check
          %p157 = pneg %p62
        $region34: #{tpu_custom_call.1} parent=27 // pred_check_branch
          %159 = sbr.rel (%p157) target = $region36
        $region35: #{tpu_custom_call.1} parent=27 // pred_region
          %160 = dma.done %s153, 1536
        $region36: #{tpu_custom_call.1} parent=27 // pred_fallthru
          _
        %p161 = pneg %p36
        %p162 = pneg %p33
        %s163 = sand.u32 %s49, 1
        %s164 = scalar_lea.sflag [#allocation6], %s163
        %s165 = sand.u32 %s49, 1
        %s166 = smul.addr %s165, 96
        %s167 = scalar_lea.vmem [#allocation5], %s166
        %p168 = pneg %p62
        %p169 = pneg %p59
        %p170 = pneg %p88
        %p171 = pneg %p85
        %s172 = sand.u32 %s75, 1
        %s173 = scalar_lea.sflag [#allocation4], %s172
        %s174 = sand.u32 %s75, 1
        %s175 = smul.addr %s174, 64
        %s176 = scalar_lea.vmem [#allocation7], %s175
        %v177 = vld [vmem:[#allocation2] sm:$0xf]
        %v180 = vunpack.c.l.s4 1966171168
        %v181 = vunpack.c.0.s8 %v180
        %v182 = vlaneseq
        %v183 = vshrl.u32 %v182, 7
        %v184 = vsub.s32 %v181, %v183
        %v185 = vrot.slane %v177, %v184
        %v186 = vcombine.high %v185, %v185
        %v188 = vunpack.c.l.s4 1966171168
        %v189 = vunpack.c.0.s8 %v188
        %v190 = vlaneseq
        %v191 = vshrl.u32 %v190, 7
        %v192 = vsub.s32 %v189, %v191
        %v193 = vrot.slane %v185, %v192
        %v195 = vunpack.c.l.s4 1966171168
        %v196 = vunpack.c.0.s8 %v195
        %v197 = vlaneseq
        %v198 = vshrl.u32 %v197, 7
        %v199 = vsub.s32 %v196, %v198
        %v200 = vrot.slane %v186, %v199
        %v201 = vcombine.high %v193, %v193
        %v202 = vcombine.high %v200, %v200
        %s203 = scalar_lea.vmem [#allocation2], 4
        %v204 = vld [vmem:[%s203] sm:$0xf]
        %v207 = vunpack.c.l.s4 1966171168
        %v208 = vunpack.c.0.s8 %v207
        %v209 = vlaneseq
        %v210 = vshrl.u32 %v209, 7
        %v211 = vsub.s32 %v208, %v210
        %v212 = vrot.slane %v204, %v211
        %v213 = vcombine.high %v212, %v212
        %v215 = vunpack.c.l.s4 1966171168
        %v216 = vunpack.c.0.s8 %v215
        %v217 = vlaneseq
        %v218 = vshrl.u32 %v217, 7
        %v219 = vsub.s32 %v216, %v218
        %v220 = vrot.slane %v212, %v219
        %v222 = vunpack.c.l.s4 1966171168
        %v223 = vunpack.c.0.s8 %v222
        %v224 = vlaneseq
        %v225 = vshrl.u32 %v224, 7
        %v226 = vsub.s32 %v223, %v225
        %v227 = vrot.slane %v213, %v226
        %v228 = vcombine.high %v220, %v220
        %v229 = vcombine.high %v227, %v227
        %s230 = scalar_lea.vmem [#allocation2], 8
        %v231 = vld [vmem:[%s230] sm:$0xf]
        %v234 = vunpack.c.l.s4 1966171168
        %v235 = vunpack.c.0.s8 %v234
        %v236 = vlaneseq
        %v237 = vshrl.u32 %v236, 7
        %v238 = vsub.s32 %v235, %v237
        %v239 = vrot.slane %v231, %v238
        %v240 = vcombine.high %v239, %v239
        %v242 = vunpack.c.l.s4 1966171168
        %v243 = vunpack.c.0.s8 %v242
        %v244 = vlaneseq
        %v245 = vshrl.u32 %v244, 7
        %v246 = vsub.s32 %v243, %v245
        %v247 = vrot.slane %v239, %v246
        %v249 = vunpack.c.l.s4 1966171168
        %v250 = vunpack.c.0.s8 %v249
        %v251 = vlaneseq
        %v252 = vshrl.u32 %v251, 7
        %v253 = vsub.s32 %v250, %v252
        %v254 = vrot.slane %v240, %v253
        %v255 = vcombine.high %v247, %v247
        %v256 = vcombine.high %v254, %v254
        %s257 = scalar_lea.vmem [#allocation2], 12
        %v258 = vld [vmem:[%s257] sm:$0xf]
        %v261 = vunpack.c.l.s4 1966171168
        %v262 = vunpack.c.0.s8 %v261
        %v263 = vlaneseq
        %v264 = vshrl.u32 %v263, 7
        %v265 = vsub.s32 %v262, %v264
        %v266 = vrot.slane %v258, %v265
        %v267 = vcombine.high %v266, %v266
        %v269 = vunpack.c.l.s4 1966171168
        %v270 = vunpack.c.0.s8 %v269
        %v271 = vlaneseq
        %v272 = vshrl.u32 %v271, 7
        %v273 = vsub.s32 %v270, %v272
        %v274 = vrot.slane %v266, %v273
        %v276 = vunpack.c.l.s4 1966171168
        %v277 = vunpack.c.0.s8 %v276
        %v278 = vlaneseq
        %v279 = vshrl.u32 %v278, 7
        %v280 = vsub.s32 %v277, %v279
        %v281 = vrot.slane %v267, %v280
        %v282 = vcombine.high %v274, %v274
        %v283 = vcombine.high %v281, %v281
        %s284 = scalar_lea.vmem [#allocation2], 16
        %v285 = vld [vmem:[%s284] sm:$0xf]
        %v288 = vunpack.c.l.s4 1966171168
        %v289 = vunpack.c.0.s8 %v288
        %v290 = vlaneseq
        %v291 = vshrl.u32 %v290, 7
        %v292 = vsub.s32 %v289, %v291
        %v293 = vrot.slane %v285, %v292
        %v294 = vcombine.high %v293, %v293
        %v296 = vunpack.c.l.s4 1966171168
        %v297 = vunpack.c.0.s8 %v296
        %v298 = vlaneseq
        %v299 = vshrl.u32 %v298, 7
        %v300 = vsub.s32 %v297, %v299
        %v301 = vrot.slane %v293, %v300
        %v303 = vunpack.c.l.s4 1966171168
        %v304 = vunpack.c.0.s8 %v303
        %v305 = vlaneseq
        %v306 = vshrl.u32 %v305, 7
        %v307 = vsub.s32 %v304, %v306
        %v308 = vrot.slane %v294, %v307
        %v309 = vcombine.high %v301, %v301
        %v310 = vcombine.high %v308, %v308
        %s311 = scalar_lea.vmem [#allocation2], 20
        %v312 = vld [vmem:[%s311] sm:$0xf]
        %v315 = vunpack.c.l.s4 1966171168
        %v316 = vunpack.c.0.s8 %v315
        %v317 = vlaneseq
        %v318 = vshrl.u32 %v317, 7
        %v319 = vsub.s32 %v316, %v318
        %v320 = vrot.slane %v312, %v319
        %v321 = vcombine.high %v320, %v320
        %v323 = vunpack.c.l.s4 1966171168
        %v324 = vunpack.c.0.s8 %v323
        %v325 = vlaneseq
        %v326 = vshrl.u32 %v325, 7
        %v327 = vsub.s32 %v324, %v326
        %v328 = vrot.slane %v320, %v327
        %v330 = vunpack.c.l.s4 1966171168
        %v331 = vunpack.c.0.s8 %v330
        %v332 = vlaneseq
        %v333 = vshrl.u32 %v332, 7
        %v334 = vsub.s32 %v331, %v333
        %v335 = vrot.slane %v321, %v334
        %v336 = vcombine.high %v328, %v328
        %v337 = vcombine.high %v335, %v335
        %s338 = scalar_lea.vmem [#allocation2], 24
        %v339 = vld [vmem:[%s338] sm:$0xf]
        %v342 = vunpack.c.l.s4 1966171168
        %v343 = vunpack.c.0.s8 %v342
        %v344 = vlaneseq
        %v345 = vshrl.u32 %v344, 7
        %v346 = vsub.s32 %v343, %v345
        %v347 = vrot.slane %v339, %v346
        %v348 = vcombine.high %v347, %v347
        %v350 = vunpack.c.l.s4 1966171168
        %v351 = vunpack.c.0.s8 %v350
        %v352 = vlaneseq
        %v353 = vshrl.u32 %v352, 7
        %v354 = vsub.s32 %v351, %v353
        %v355 = vrot.slane %v347, %v354
        %v357 = vunpack.c.l.s4 1966171168
        %v358 = vunpack.c.0.s8 %v357
        %v359 = vlaneseq
        %v360 = vshrl.u32 %v359, 7
        %v361 = vsub.s32 %v358, %v360
        %v362 = vrot.slane %v348, %v361
        %v363 = vcombine.high %v355, %v355
        %v364 = vcombine.high %v362, %v362
        %s365 = scalar_lea.vmem [#allocation2], 28
        %v366 = vld [vmem:[%s365] sm:$0xf]
        %v369 = vunpack.c.l.s4 1966171168
        %v370 = vunpack.c.0.s8 %v369
        %v371 = vlaneseq
        %v372 = vshrl.u32 %v371, 7
        %v373 = vsub.s32 %v370, %v372
        %v374 = vrot.slane %v366, %v373
        %v375 = vcombine.high %v374, %v374
        %v377 = vunpack.c.l.s4 1966171168
        %v378 = vunpack.c.0.s8 %v377
        %v379 = vlaneseq
        %v380 = vshrl.u32 %v379, 7
        %v381 = vsub.s32 %v378, %v380
        %v382 = vrot.slane %v374, %v381
        %v384 = vunpack.c.l.s4 1966171168
        %v385 = vunpack.c.0.s8 %v384
        %v386 = vlaneseq
        %v387 = vshrl.u32 %v386, 7
        %v388 = vsub.s32 %v385, %v387
        %v389 = vrot.slane %v375, %v388
        %v390 = vcombine.high %v382, %v382
        %v391 = vcombine.high %v389, %v389
        %s392 = scalar_lea.vmem [#allocation2], 32
        %v393 = vld [vmem:[%s392] sm:$0xf]
        %v396 = vunpack.c.l.s4 1966171168
        %v397 = vunpack.c.0.s8 %v396
        %v398 = vlaneseq
        %v399 = vshrl.u32 %v398, 7
        %v400 = vsub.s32 %v397, %v399
        %v401 = vrot.slane %v393, %v400
        %v402 = vcombine.high %v401, %v401
        %v404 = vunpack.c.l.s4 1966171168
        %v405 = vunpack.c.0.s8 %v404
        %v406 = vlaneseq
        %v407 = vshrl.u32 %v406, 7
        %v408 = vsub.s32 %v405, %v407
        %v409 = vrot.slane %v401, %v408
        %v411 = vunpack.c.l.s4 1966171168
        %v412 = vunpack.c.0.s8 %v411
        %v413 = vlaneseq
        %v414 = vshrl.u32 %v413, 7
        %v415 = vsub.s32 %v412, %v414
        %v416 = vrot.slane %v402, %v415
        %v417 = vcombine.high %v409, %v409
        %v418 = vcombine.high %v416, %v416
        %s419 = scalar_lea.vmem [#allocation2], 36
        %v420 = vld [vmem:[%s419] sm:$0xf]
        %v423 = vunpack.c.l.s4 1966171168
        %v424 = vunpack.c.0.s8 %v423
        %v425 = vlaneseq
        %v426 = vshrl.u32 %v425, 7
        %v427 = vsub.s32 %v424, %v426
        %v428 = vrot.slane %v420, %v427
        %v429 = vcombine.high %v428, %v428
        %v431 = vunpack.c.l.s4 1966171168
        %v432 = vunpack.c.0.s8 %v431
        %v433 = vlaneseq
        %v434 = vshrl.u32 %v433, 7
        %v435 = vsub.s32 %v432, %v434
        %v436 = vrot.slane %v428, %v435
        %v438 = vunpack.c.l.s4 1966171168
        %v439 = vunpack.c.0.s8 %v438
        %v440 = vlaneseq
        %v441 = vshrl.u32 %v440, 7
        %v442 = vsub.s32 %v439, %v441
        %v443 = vrot.slane %v429, %v442
        %v444 = vcombine.high %v436, %v436
        %v445 = vcombine.high %v443, %v443
        %s446 = scalar_lea.vmem [#allocation2], 40
        %v447 = vld [vmem:[%s446] sm:$0xf]
        %v450 = vunpack.c.l.s4 1966171168
        %v451 = vunpack.c.0.s8 %v450
        %v452 = vlaneseq
        %v453 = vshrl.u32 %v452, 7
        %v454 = vsub.s32 %v451, %v453
        %v455 = vrot.slane %v447, %v454
        %v456 = vcombine.high %v455, %v455
        %v458 = vunpack.c.l.s4 1966171168
        %v459 = vunpack.c.0.s8 %v458
        %v460 = vlaneseq
        %v461 = vshrl.u32 %v460, 7
        %v462 = vsub.s32 %v459, %v461
        %v463 = vrot.slane %v455, %v462
        %v465 = vunpack.c.l.s4 1966171168
        %v466 = vunpack.c.0.s8 %v465
        %v467 = vlaneseq
        %v468 = vshrl.u32 %v467, 7
        %v469 = vsub.s32 %v466, %v468
        %v470 = vrot.slane %v456, %v469
        %v471 = vcombine.high %v463, %v463
        %v472 = vcombine.high %v470, %v470
        %s473 = scalar_lea.vmem [#allocation2], 44
        %v474 = vld [vmem:[%s473] sm:$0xf]
        %v477 = vunpack.c.l.s4 1966171168
        %v478 = vunpack.c.0.s8 %v477
        %v479 = vlaneseq
        %v480 = vshrl.u32 %v479, 7
        %v481 = vsub.s32 %v478, %v480
        %v482 = vrot.slane %v474, %v481
        %v483 = vcombine.high %v482, %v482
        %v485 = vunpack.c.l.s4 1966171168
        %v486 = vunpack.c.0.s8 %v485
        %v487 = vlaneseq
        %v488 = vshrl.u32 %v487, 7
        %v489 = vsub.s32 %v486, %v488
        %v490 = vrot.slane %v482, %v489
        %v492 = vunpack.c.l.s4 1966171168
        %v493 = vunpack.c.0.s8 %v492
        %v494 = vlaneseq
        %v495 = vshrl.u32 %v494, 7
        %v496 = vsub.s32 %v493, %v495
        %v497 = vrot.slane %v483, %v496
        %v498 = vcombine.high %v490, %v490
        %v499 = vcombine.high %v497, %v497
        %s500 = scalar_lea.vmem [#allocation2], 48
        %v501 = vld [vmem:[%s500] sm:$0xf]
        %v504 = vunpack.c.l.s4 1966171168
        %v505 = vunpack.c.0.s8 %v504
        %v506 = vlaneseq
        %v507 = vshrl.u32 %v506, 7
        %v508 = vsub.s32 %v505, %v507
        %v509 = vrot.slane %v501, %v508
        %v510 = vcombine.high %v509, %v509
        %v512 = vunpack.c.l.s4 1966171168
        %v513 = vunpack.c.0.s8 %v512
        %v514 = vlaneseq
        %v515 = vshrl.u32 %v514, 7
        %v516 = vsub.s32 %v513, %v515
        %v517 = vrot.slane %v509, %v516
        %v519 = vunpack.c.l.s4 1966171168
        %v520 = vunpack.c.0.s8 %v519
        %v521 = vlaneseq
        %v522 = vshrl.u32 %v521, 7
        %v523 = vsub.s32 %v520, %v522
        %v524 = vrot.slane %v510, %v523
        %v525 = vcombine.high %v517, %v517
        %v526 = vcombine.high %v524, %v524
        %s527 = scalar_lea.vmem [#allocation2], 52
        %v528 = vld [vmem:[%s527] sm:$0xf]
        %v531 = vunpack.c.l.s4 1966171168
        %v532 = vunpack.c.0.s8 %v531
        %v533 = vlaneseq
        %v534 = vshrl.u32 %v533, 7
        %v535 = vsub.s32 %v532, %v534
        %v536 = vrot.slane %v528, %v535
        %v537 = vcombine.high %v536, %v536
        %v539 = vunpack.c.l.s4 1966171168
        %v540 = vunpack.c.0.s8 %v539
        %v541 = vlaneseq
        %v542 = vshrl.u32 %v541, 7
        %v543 = vsub.s32 %v540, %v542
        %v544 = vrot.slane %v536, %v543
        %v546 = vunpack.c.l.s4 1966171168
        %v547 = vunpack.c.0.s8 %v546
        %v548 = vlaneseq
        %v549 = vshrl.u32 %v548, 7
        %v550 = vsub.s32 %v547, %v549
        %v551 = vrot.slane %v537, %v550
        %v552 = vcombine.high %v544, %v544
        %v553 = vcombine.high %v551, %v551
        %s554 = scalar_lea.vmem [#allocation2], 56
        %v555 = vld [vmem:[%s554] sm:$0xf]
        %v558 = vunpack.c.l.s4 1966171168
        %v559 = vunpack.c.0.s8 %v558
        %v560 = vlaneseq
        %v561 = vshrl.u32 %v560, 7
        %v562 = vsub.s32 %v559, %v561
        %v563 = vrot.slane %v555, %v562
        %v564 = vcombine.high %v563, %v563
        %v566 = vunpack.c.l.s4 1966171168
        %v567 = vunpack.c.0.s8 %v566
        %v568 = vlaneseq
        %v569 = vshrl.u32 %v568, 7
        %v570 = vsub.s32 %v567, %v569
        %v571 = vrot.slane %v563, %v570
        %v573 = vunpack.c.l.s4 1966171168
        %v574 = vunpack.c.0.s8 %v573
        %v575 = vlaneseq
        %v576 = vshrl.u32 %v575, 7
        %v577 = vsub.s32 %v574, %v576
        %v578 = vrot.slane %v564, %v577
        %v579 = vcombine.high %v571, %v571
        %v580 = vcombine.high %v578, %v578
        %s581 = scalar_lea.vmem [#allocation2], 60
        %v582 = vld [vmem:[%s581] sm:$0xf]
        %v585 = vunpack.c.l.s4 1966171168
        %v586 = vunpack.c.0.s8 %v585
        %v587 = vlaneseq
        %v588 = vshrl.u32 %v587, 7
        %v589 = vsub.s32 %v586, %v588
        %v590 = vrot.slane %v582, %v589
        %v591 = vcombine.high %v590, %v590
        %v593 = vunpack.c.l.s4 1966171168
        %v594 = vunpack.c.0.s8 %v593
        %v595 = vlaneseq
        %v596 = vshrl.u32 %v595, 7
        %v597 = vsub.s32 %v594, %v596
        %v598 = vrot.slane %v590, %v597
        %v600 = vunpack.c.l.s4 1966171168
        %v601 = vunpack.c.0.s8 %v600
        %v602 = vlaneseq
        %v603 = vshrl.u32 %v602, 7
        %v604 = vsub.s32 %v601, %v603
        %v605 = vrot.slane %v591, %v604
        %v606 = vcombine.high %v598, %v598
        %v607 = vcombine.high %v605, %v605
        %s608 = scalar_lea.vmem [#allocation2], 64
        %v609 = vld [vmem:[%s608] sm:$0xf]
        %v612 = vunpack.c.l.s4 1966171168
        %v613 = vunpack.c.0.s8 %v612
        %v614 = vlaneseq
        %v615 = vshrl.u32 %v614, 7
        %v616 = vsub.s32 %v613, %v615
        %v617 = vrot.slane %v609, %v616
        %v618 = vcombine.high %v617, %v617
        %v620 = vunpack.c.l.s4 1966171168
        %v621 = vunpack.c.0.s8 %v620
        %v622 = vlaneseq
        %v623 = vshrl.u32 %v622, 7
        %v624 = vsub.s32 %v621, %v623
        %v625 = vrot.slane %v617, %v624
        %v627 = vunpack.c.l.s4 1966171168
        %v628 = vunpack.c.0.s8 %v627
        %v629 = vlaneseq
        %v630 = vshrl.u32 %v629, 7
        %v631 = vsub.s32 %v628, %v630
        %v632 = vrot.slane %v618, %v631
        %v633 = vcombine.high %v625, %v625
        %v634 = vcombine.high %v632, %v632
        %s635 = scalar_lea.vmem [#allocation2], 68
        %v636 = vld [vmem:[%s635] sm:$0xf]
        %v639 = vunpack.c.l.s4 1966171168
        %v640 = vunpack.c.0.s8 %v639
        %v641 = vlaneseq
        %v642 = vshrl.u32 %v641, 7
        %v643 = vsub.s32 %v640, %v642
        %v644 = vrot.slane %v636, %v643
        %v645 = vcombine.high %v644, %v644
        %v647 = vunpack.c.l.s4 1966171168
        %v648 = vunpack.c.0.s8 %v647
        %v649 = vlaneseq
        %v650 = vshrl.u32 %v649, 7
        %v651 = vsub.s32 %v648, %v650
        %v652 = vrot.slane %v644, %v651
        %v654 = vunpack.c.l.s4 1966171168
        %v655 = vunpack.c.0.s8 %v654
        %v656 = vlaneseq
        %v657 = vshrl.u32 %v656, 7
        %v658 = vsub.s32 %v655, %v657
        %v659 = vrot.slane %v645, %v658
        %v660 = vcombine.high %v652, %v652
        %v661 = vcombine.high %v659, %v659
        %s662 = scalar_lea.vmem [#allocation2], 72
        %v663 = vld [vmem:[%s662] sm:$0xf]
        %v666 = vunpack.c.l.s4 1966171168
        %v667 = vunpack.c.0.s8 %v666
        %v668 = vlaneseq
        %v669 = vshrl.u32 %v668, 7
        %v670 = vsub.s32 %v667, %v669
        %v671 = vrot.slane %v663, %v670
        %v672 = vcombine.high %v671, %v671
        %v674 = vunpack.c.l.s4 1966171168
        %v675 = vunpack.c.0.s8 %v674
        %v676 = vlaneseq
        %v677 = vshrl.u32 %v676, 7
        %v678 = vsub.s32 %v675, %v677
        %v679 = vrot.slane %v671, %v678
        %v681 = vunpack.c.l.s4 1966171168
        %v682 = vunpack.c.0.s8 %v681
        %v683 = vlaneseq
        %v684 = vshrl.u32 %v683, 7
        %v685 = vsub.s32 %v682, %v684
        %v686 = vrot.slane %v672, %v685
        %v687 = vcombine.high %v679, %v679
        %v688 = vcombine.high %v686, %v686
        %s689 = scalar_lea.vmem [#allocation2], 76
        %v690 = vld [vmem:[%s689] sm:$0xf]
        %v693 = vunpack.c.l.s4 1966171168
        %v694 = vunpack.c.0.s8 %v693
        %v695 = vlaneseq
        %v696 = vshrl.u32 %v695, 7
        %v697 = vsub.s32 %v694, %v696
        %v698 = vrot.slane %v690, %v697
        %v699 = vcombine.high %v698, %v698
        %v701 = vunpack.c.l.s4 1966171168
        %v702 = vunpack.c.0.s8 %v701
        %v703 = vlaneseq
        %v704 = vshrl.u32 %v703, 7
        %v705 = vsub.s32 %v702, %v704
        %v706 = vrot.slane %v698, %v705
        %v708 = vunpack.c.l.s4 1966171168
        %v709 = vunpack.c.0.s8 %v708
        %v710 = vlaneseq
        %v711 = vshrl.u32 %v710, 7
        %v712 = vsub.s32 %v709, %v711
        %v713 = vrot.slane %v699, %v712
        %v714 = vcombine.high %v706, %v706
        %v715 = vcombine.high %v713, %v713
        %s716 = scalar_lea.vmem [#allocation2], 80
        %v717 = vld [vmem:[%s716] sm:$0xf]
        %v720 = vunpack.c.l.s4 1966171168
        %v721 = vunpack.c.0.s8 %v720
        %v722 = vlaneseq
        %v723 = vshrl.u32 %v722, 7
        %v724 = vsub.s32 %v721, %v723
        %v725 = vrot.slane %v717, %v724
        %v726 = vcombine.high %v725, %v725
        %v728 = vunpack.c.l.s4 1966171168
        %v729 = vunpack.c.0.s8 %v728
        %v730 = vlaneseq
        %v731 = vshrl.u32 %v730, 7
        %v732 = vsub.s32 %v729, %v731
        %v733 = vrot.slane %v725, %v732
        %v735 = vunpack.c.l.s4 1966171168
        %v736 = vunpack.c.0.s8 %v735
        %v737 = vlaneseq
        %v738 = vshrl.u32 %v737, 7
        %v739 = vsub.s32 %v736, %v738
        %v740 = vrot.slane %v726, %v739
        %v741 = vcombine.high %v733, %v733
        %v742 = vcombine.high %v740, %v740
        %s743 = scalar_lea.vmem [#allocation2], 84
        %v744 = vld [vmem:[%s743] sm:$0xf]
        %v747 = vunpack.c.l.s4 1966171168
        %v748 = vunpack.c.0.s8 %v747
        %v749 = vlaneseq
        %v750 = vshrl.u32 %v749, 7
        %v751 = vsub.s32 %v748, %v750
        %v752 = vrot.slane %v744, %v751
        %v753 = vcombine.high %v752, %v752
        %v755 = vunpack.c.l.s4 1966171168
        %v756 = vunpack.c.0.s8 %v755
        %v757 = vlaneseq
        %v758 = vshrl.u32 %v757, 7
        %v759 = vsub.s32 %v756, %v758
        %v760 = vrot.slane %v752, %v759
        %v762 = vunpack.c.l.s4 1966171168
        %v763 = vunpack.c.0.s8 %v762
        %v764 = vlaneseq
        %v765 = vshrl.u32 %v764, 7
        %v766 = vsub.s32 %v763, %v765
        %v767 = vrot.slane %v753, %v766
        %v768 = vcombine.high %v760, %v760
        %v769 = vcombine.high %v767, %v767
        %s770 = scalar_lea.vmem [#allocation2], 88
        %v771 = vld [vmem:[%s770] sm:$0xf]
        %v774 = vunpack.c.l.s4 1966171168
        %v775 = vunpack.c.0.s8 %v774
        %v776 = vlaneseq
        %v777 = vshrl.u32 %v776, 7
        %v778 = vsub.s32 %v775, %v777
        %v779 = vrot.slane %v771, %v778
        %v780 = vcombine.high %v779, %v779
        %v782 = vunpack.c.l.s4 1966171168
        %v783 = vunpack.c.0.s8 %v782
        %v784 = vlaneseq
        %v785 = vshrl.u32 %v784, 7
        %v786 = vsub.s32 %v783, %v785
        %v787 = vrot.slane %v779, %v786
        %v789 = vunpack.c.l.s4 1966171168
        %v790 = vunpack.c.0.s8 %v789
        %v791 = vlaneseq
        %v792 = vshrl.u32 %v791, 7
        %v793 = vsub.s32 %v790, %v792
        %v794 = vrot.slane %v780, %v793
        %v795 = vcombine.high %v787, %v787
        %v796 = vcombine.high %v794, %v794
        %s797 = scalar_lea.vmem [#allocation2], 92
        %v798 = vld [vmem:[%s797] sm:$0xf]
        %v801 = vunpack.c.l.s4 1966171168
        %v802 = vunpack.c.0.s8 %v801
        %v803 = vlaneseq
        %v804 = vshrl.u32 %v803, 7
        %v805 = vsub.s32 %v802, %v804
        %v806 = vrot.slane %v798, %v805
        %v807 = vcombine.high %v806, %v806
        %v809 = vunpack.c.l.s4 1966171168
        %v810 = vunpack.c.0.s8 %v809
        %v811 = vlaneseq
        %v812 = vshrl.u32 %v811, 7
        %v813 = vsub.s32 %v810, %v812
        %v814 = vrot.slane %v806, %v813
        %v816 = vunpack.c.l.s4 1966171168
        %v817 = vunpack.c.0.s8 %v816
        %v818 = vlaneseq
        %v819 = vshrl.u32 %v818, 7
        %v820 = vsub.s32 %v817, %v819
        %v821 = vrot.slane %v807, %v820
        %v822 = vcombine.high %v814, %v814
        %v823 = vcombine.high %v821, %v821
        %s824 = scalar_lea.vmem [#allocation2], 96
        %v825 = vld [vmem:[%s824] sm:$0xf]
        %v828 = vunpack.c.l.s4 1966171168
        %v829 = vunpack.c.0.s8 %v828
        %v830 = vlaneseq
        %v831 = vshrl.u32 %v830, 7
        %v832 = vsub.s32 %v829, %v831
        %v833 = vrot.slane %v825, %v832
        %v834 = vcombine.high %v833, %v833
        %v836 = vunpack.c.l.s4 1966171168
        %v837 = vunpack.c.0.s8 %v836
        %v838 = vlaneseq
        %v839 = vshrl.u32 %v838, 7
        %v840 = vsub.s32 %v837, %v839
        %v841 = vrot.slane %v833, %v840
        %v843 = vunpack.c.l.s4 1966171168
        %v844 = vunpack.c.0.s8 %v843
        %v845 = vlaneseq
        %v846 = vshrl.u32 %v845, 7
        %v847 = vsub.s32 %v844, %v846
        %v848 = vrot.slane %v834, %v847
        %v849 = vcombine.high %v841, %v841
        %v850 = vcombine.high %v848, %v848
        %s851 = scalar_lea.vmem [#allocation2], 100
        %v852 = vld [vmem:[%s851] sm:$0xf]
        %v855 = vunpack.c.l.s4 1966171168
        %v856 = vunpack.c.0.s8 %v855
        %v857 = vlaneseq
        %v858 = vshrl.u32 %v857, 7
        %v859 = vsub.s32 %v856, %v858
        %v860 = vrot.slane %v852, %v859
        %v861 = vcombine.high %v860, %v860
        %v863 = vunpack.c.l.s4 1966171168
        %v864 = vunpack.c.0.s8 %v863
        %v865 = vlaneseq
        %v866 = vshrl.u32 %v865, 7
        %v867 = vsub.s32 %v864, %v866
        %v868 = vrot.slane %v860, %v867
        %v870 = vunpack.c.l.s4 1966171168
        %v871 = vunpack.c.0.s8 %v870
        %v872 = vlaneseq
        %v873 = vshrl.u32 %v872, 7
        %v874 = vsub.s32 %v871, %v873
        %v875 = vrot.slane %v861, %v874
        %v876 = vcombine.high %v868, %v868
        %v877 = vcombine.high %v875, %v875
        %s878 = scalar_lea.vmem [#allocation2], 104
        %v879 = vld [vmem:[%s878] sm:$0xf]
        %v882 = vunpack.c.l.s4 1966171168
        %v883 = vunpack.c.0.s8 %v882
        %v884 = vlaneseq
        %v885 = vshrl.u32 %v884, 7
        %v886 = vsub.s32 %v883, %v885
        %v887 = vrot.slane %v879, %v886
        %v888 = vcombine.high %v887, %v887
        %v890 = vunpack.c.l.s4 1966171168
        %v891 = vunpack.c.0.s8 %v890
        %v892 = vlaneseq
        %v893 = vshrl.u32 %v892, 7
        %v894 = vsub.s32 %v891, %v893
        %v895 = vrot.slane %v887, %v894
        %v897 = vunpack.c.l.s4 1966171168
        %v898 = vunpack.c.0.s8 %v897
        %v899 = vlaneseq
        %v900 = vshrl.u32 %v899, 7
        %v901 = vsub.s32 %v898, %v900
        %v902 = vrot.slane %v888, %v901
        %v903 = vcombine.high %v895, %v895
        %v904 = vcombine.high %v902, %v902
        %s905 = scalar_lea.vmem [#allocation2], 108
        %v906 = vld [vmem:[%s905] sm:$0xf]
        %v909 = vunpack.c.l.s4 1966171168
        %v910 = vunpack.c.0.s8 %v909
        %v911 = vlaneseq
        %v912 = vshrl.u32 %v911, 7
        %v913 = vsub.s32 %v910, %v912
        %v914 = vrot.slane %v906, %v913
        %v915 = vcombine.high %v914, %v914
        %v917 = vunpack.c.l.s4 1966171168
        %v918 = vunpack.c.0.s8 %v917
        %v919 = vlaneseq
        %v920 = vshrl.u32 %v919, 7
        %v921 = vsub.s32 %v918, %v920
        %v922 = vrot.slane %v914, %v921
        %v924 = vunpack.c.l.s4 1966171168
        %v925 = vunpack.c.0.s8 %v924
        %v926 = vlaneseq
        %v927 = vshrl.u32 %v926, 7
        %v928 = vsub.s32 %v925, %v927
        %v929 = vrot.slane %v915, %v928
        %v930 = vcombine.high %v922, %v922
        %v931 = vcombine.high %v929, %v929
        %s932 = scalar_lea.vmem [#allocation2], 112
        %v933 = vld [vmem:[%s932] sm:$0xf]
        %v936 = vunpack.c.l.s4 1966171168
        %v937 = vunpack.c.0.s8 %v936
        %v938 = vlaneseq
        %v939 = vshrl.u32 %v938, 7
        %v940 = vsub.s32 %v937, %v939
        %v941 = vrot.slane %v933, %v940
        %v942 = vcombine.high %v941, %v941
        %v944 = vunpack.c.l.s4 1966171168
        %v945 = vunpack.c.0.s8 %v944
        %v946 = vlaneseq
        %v947 = vshrl.u32 %v946, 7
        %v948 = vsub.s32 %v945, %v947
        %v949 = vrot.slane %v941, %v948
        %v951 = vunpack.c.l.s4 1966171168
        %v952 = vunpack.c.0.s8 %v951
        %v953 = vlaneseq
        %v954 = vshrl.u32 %v953, 7
        %v955 = vsub.s32 %v952, %v954
        %v956 = vrot.slane %v942, %v955
        %v957 = vcombine.high %v949, %v949
        %v958 = vcombine.high %v956, %v956
        %s959 = scalar_lea.vmem [#allocation2], 116
        %v960 = vld [vmem:[%s959] sm:$0xf]
        %v963 = vunpack.c.l.s4 1966171168
        %v964 = vunpack.c.0.s8 %v963
        %v965 = vlaneseq
        %v966 = vshrl.u32 %v965, 7
        %v967 = vsub.s32 %v964, %v966
        %v968 = vrot.slane %v960, %v967
        %v969 = vcombine.high %v968, %v968
        %v971 = vunpack.c.l.s4 1966171168
        %v972 = vunpack.c.0.s8 %v971
        %v973 = vlaneseq
        %v974 = vshrl.u32 %v973, 7
        %v975 = vsub.s32 %v972, %v974
        %v976 = vrot.slane %v968, %v975
        %v978 = vunpack.c.l.s4 1966171168
        %v979 = vunpack.c.0.s8 %v978
        %v980 = vlaneseq
        %v981 = vshrl.u32 %v980, 7
        %v982 = vsub.s32 %v979, %v981
        %v983 = vrot.slane %v969, %v982
        %v984 = vcombine.high %v976, %v976
        %v985 = vcombine.high %v983, %v983
        %s986 = scalar_lea.vmem [#allocation2], 120
        %v987 = vld [vmem:[%s986] sm:$0xf]
        %v990 = vunpack.c.l.s4 1966171168
        %v991 = vunpack.c.0.s8 %v990
        %v992 = vlaneseq
        %v993 = vshrl.u32 %v992, 7
        %v994 = vsub.s32 %v991, %v993
        %v995 = vrot.slane %v987, %v994
        %v996 = vcombine.high %v995, %v995
        %v998 = vunpack.c.l.s4 1966171168
        %v999 = vunpack.c.0.s8 %v998
        %v1000 = vlaneseq
        %v1001 = vshrl.u32 %v1000, 7
        %v1002 = vsub.s32 %v999, %v1001
        %v1003 = vrot.slane %v995, %v1002
        %v1005 = vunpack.c.l.s4 1966171168
        %v1006 = vunpack.c.0.s8 %v1005
        %v1007 = vlaneseq
        %v1008 = vshrl.u32 %v1007, 7
        %v1009 = vsub.s32 %v1006, %v1008
        %v1010 = vrot.slane %v996, %v1009
        %v1011 = vcombine.high %v1003, %v1003
        %v1012 = vcombine.high %v1010, %v1010
        %s1013 = scalar_lea.vmem [#allocation2], 124
        %v1014 = vld [vmem:[%s1013] sm:$0xf]
        %v1017 = vunpack.c.l.s4 1966171168
        %v1018 = vunpack.c.0.s8 %v1017
        %v1019 = vlaneseq
        %v1020 = vshrl.u32 %v1019, 7
        %v1021 = vsub.s32 %v1018, %v1020
        %v1022 = vrot.slane %v1014, %v1021
        %v1023 = vcombine.high %v1022, %v1022
        %v1025 = vunpack.c.l.s4 1966171168
        %v1026 = vunpack.c.0.s8 %v1025
        %v1027 = vlaneseq
        %v1028 = vshrl.u32 %v1027, 7
        %v1029 = vsub.s32 %v1026, %v1028
        %v1030 = vrot.slane %v1022, %v1029
        %v1032 = vunpack.c.l.s4 1966171168
        %v1033 = vunpack.c.0.s8 %v1032
        %v1034 = vlaneseq
        %v1035 = vshrl.u32 %v1034, 7
        %v1036 = vsub.s32 %v1033, %v1035
        %v1037 = vrot.slane %v1023, %v1036
        %v1038 = vcombine.high %v1030, %v1030
        %v1039 = vcombine.high %v1037, %v1037
        %s1040 = scalar_lea.vmem [#allocation2], 128
        %v1041 = vld [vmem:[%s1040] sm:$0xf]
        %v1044 = vunpack.c.l.s4 1966171168
        %v1045 = vunpack.c.0.s8 %v1044
        %v1046 = vlaneseq
        %v1047 = vshrl.u32 %v1046, 7
        %v1048 = vsub.s32 %v1045, %v1047
        %v1049 = vrot.slane %v1041, %v1048
        %v1050 = vcombine.high %v1049, %v1049
        %v1052 = vunpack.c.l.s4 1966171168
        %v1053 = vunpack.c.0.s8 %v1052
        %v1054 = vlaneseq
        %v1055 = vshrl.u32 %v1054, 7
        %v1056 = vsub.s32 %v1053, %v1055
        %v1057 = vrot.slane %v1049, %v1056
        %v1059 = vunpack.c.l.s4 1966171168
        %v1060 = vunpack.c.0.s8 %v1059
        %v1061 = vlaneseq
        %v1062 = vshrl.u32 %v1061, 7
        %v1063 = vsub.s32 %v1060, %v1062
        %v1064 = vrot.slane %v1050, %v1063
        %v1065 = vcombine.high %v1057, %v1057
        %v1066 = vcombine.high %v1064, %v1064
        %s1067 = scalar_lea.vmem [#allocation2], 132
        %v1068 = vld [vmem:[%s1067] sm:$0xf]
        %v1071 = vunpack.c.l.s4 1966171168
        %v1072 = vunpack.c.0.s8 %v1071
        %v1073 = vlaneseq
        %v1074 = vshrl.u32 %v1073, 7
        %v1075 = vsub.s32 %v1072, %v1074
        %v1076 = vrot.slane %v1068, %v1075
        %v1077 = vcombine.high %v1076, %v1076
        %v1079 = vunpack.c.l.s4 1966171168
        %v1080 = vunpack.c.0.s8 %v1079
        %v1081 = vlaneseq
        %v1082 = vshrl.u32 %v1081, 7
        %v1083 = vsub.s32 %v1080, %v1082
        %v1084 = vrot.slane %v1076, %v1083
        %v1086 = vunpack.c.l.s4 1966171168
        %v1087 = vunpack.c.0.s8 %v1086
        %v1088 = vlaneseq
        %v1089 = vshrl.u32 %v1088, 7
        %v1090 = vsub.s32 %v1087, %v1089
        %v1091 = vrot.slane %v1077, %v1090
        %v1092 = vcombine.high %v1084, %v1084
        %v1093 = vcombine.high %v1091, %v1091
        %s1094 = scalar_lea.vmem [#allocation2], 136
        %v1095 = vld [vmem:[%s1094] sm:$0xf]
        %v1098 = vunpack.c.l.s4 1966171168
        %v1099 = vunpack.c.0.s8 %v1098
        %v1100 = vlaneseq
        %v1101 = vshrl.u32 %v1100, 7
        %v1102 = vsub.s32 %v1099, %v1101
        %v1103 = vrot.slane %v1095, %v1102
        %v1104 = vcombine.high %v1103, %v1103
        %v1106 = vunpack.c.l.s4 1966171168
        %v1107 = vunpack.c.0.s8 %v1106
        %v1108 = vlaneseq
        %v1109 = vshrl.u32 %v1108, 7
        %v1110 = vsub.s32 %v1107, %v1109
        %v1111 = vrot.slane %v1103, %v1110
        %v1113 = vunpack.c.l.s4 1966171168
        %v1114 = vunpack.c.0.s8 %v1113
        %v1115 = vlaneseq
        %v1116 = vshrl.u32 %v1115, 7
        %v1117 = vsub.s32 %v1114, %v1116
        %v1118 = vrot.slane %v1104, %v1117
        %v1119 = vcombine.high %v1111, %v1111
        %v1120 = vcombine.high %v1118, %v1118
        %s1121 = scalar_lea.vmem [#allocation2], 140
        %v1122 = vld [vmem:[%s1121] sm:$0xf]
        %v1125 = vunpack.c.l.s4 1966171168
        %v1126 = vunpack.c.0.s8 %v1125
        %v1127 = vlaneseq
        %v1128 = vshrl.u32 %v1127, 7
        %v1129 = vsub.s32 %v1126, %v1128
        %v1130 = vrot.slane %v1122, %v1129
        %v1131 = vcombine.high %v1130, %v1130
        %v1133 = vunpack.c.l.s4 1966171168
        %v1134 = vunpack.c.0.s8 %v1133
        %v1135 = vlaneseq
        %v1136 = vshrl.u32 %v1135, 7
        %v1137 = vsub.s32 %v1134, %v1136
        %v1138 = vrot.slane %v1130, %v1137
        %v1140 = vunpack.c.l.s4 1966171168
        %v1141 = vunpack.c.0.s8 %v1140
        %v1142 = vlaneseq
        %v1143 = vshrl.u32 %v1142, 7
        %v1144 = vsub.s32 %v1141, %v1143
        %v1145 = vrot.slane %v1131, %v1144
        %v1146 = vcombine.high %v1138, %v1138
        %v1147 = vcombine.high %v1145, %v1145
        %s1148 = scalar_lea.vmem [#allocation2], 144
        %v1149 = vld [vmem:[%s1148] sm:$0xf]
        %v1152 = vunpack.c.l.s4 1966171168
        %v1153 = vunpack.c.0.s8 %v1152
        %v1154 = vlaneseq
        %v1155 = vshrl.u32 %v1154, 7
        %v1156 = vsub.s32 %v1153, %v1155
        %v1157 = vrot.slane %v1149, %v1156
        %v1158 = vcombine.high %v1157, %v1157
        %v1160 = vunpack.c.l.s4 1966171168
        %v1161 = vunpack.c.0.s8 %v1160
        %v1162 = vlaneseq
        %v1163 = vshrl.u32 %v1162, 7
        %v1164 = vsub.s32 %v1161, %v1163
        %v1165 = vrot.slane %v1157, %v1164
        %v1167 = vunpack.c.l.s4 1966171168
        %v1168 = vunpack.c.0.s8 %v1167
        %v1169 = vlaneseq
        %v1170 = vshrl.u32 %v1169, 7
        %v1171 = vsub.s32 %v1168, %v1170
        %v1172 = vrot.slane %v1158, %v1171
        %v1173 = vcombine.high %v1165, %v1165
        %v1174 = vcombine.high %v1172, %v1172
        %s1175 = scalar_lea.vmem [#allocation2], 148
        %v1176 = vld [vmem:[%s1175] sm:$0xf]
        %v1179 = vunpack.c.l.s4 1966171168
        %v1180 = vunpack.c.0.s8 %v1179
        %v1181 = vlaneseq
        %v1182 = vshrl.u32 %v1181, 7
        %v1183 = vsub.s32 %v1180, %v1182
        %v1184 = vrot.slane %v1176, %v1183
        %v1185 = vcombine.high %v1184, %v1184
        %v1187 = vunpack.c.l.s4 1966171168
        %v1188 = vunpack.c.0.s8 %v1187
        %v1189 = vlaneseq
        %v1190 = vshrl.u32 %v1189, 7
        %v1191 = vsub.s32 %v1188, %v1190
        %v1192 = vrot.slane %v1184, %v1191
        %v1194 = vunpack.c.l.s4 1966171168
        %v1195 = vunpack.c.0.s8 %v1194
        %v1196 = vlaneseq
        %v1197 = vshrl.u32 %v1196, 7
        %v1198 = vsub.s32 %v1195, %v1197
        %v1199 = vrot.slane %v1185, %v1198
        %v1200 = vcombine.high %v1192, %v1192
        %v1201 = vcombine.high %v1199, %v1199
        %v1202 = vld [vmem:[%s156] sm:$0xff]
        %v1203 = vld [vmem:[%s156 + $0x8] sm:$0xff]
        %v1204 = vld [vmem:[%s156 + $0x18] sm:$0xff]
        %v1205 = vld [vmem:[%s156 + $0x20] sm:$0xff]
        %v1206 = vld [vmem:[%s156 + $0x30] sm:$0xff]
        %v1207 = vld [vmem:[%s156 + $0x38] sm:$0xff]
        %v1208 = vld [vmem:[%s156 + $0x48] sm:$0xff]
        %v1209 = vld [vmem:[%s156 + $0x50] sm:$0xff]
        %v1210 = vlaneseq
        %v1211 = vshrl.u32 %v1210, 7
        %v1212 = vsub.s32 0, %v1211
        %v1213 = vrot.slane %v463, %v1212
        %v1214 = vlaneseq
        %v1215 = vshrl.u32 %v1214, 7
        %v1216 = vsub.s32 0, %v1215
        %v1217 = vrot.slane %v470, %v1216
        %v1218 = vlaneseq
        %v1219 = vshrl.u32 %v1218, 7
        %v1220 = vsub.s32 0, %v1219
        %v1221 = vrot.slane %v471, %v1220
        %v1222 = vlaneseq
        %v1223 = vshrl.u32 %v1222, 7
        %v1224 = vsub.s32 0, %v1223
        %v1225 = vrot.slane %v472, %v1224
        %v1230 = vmul.f32 %v1202, %v1213
        %v1231 = vmul.f32 %v1203, %v1213
        %v1232 = vmul.f32 %v1204, %v1217
        %v1233 = vmul.f32 %v1205, %v1217
        %v1234 = vmul.f32 %v1206, %v1221
        %v1235 = vmul.f32 %v1207, %v1221
        %v1236 = vmul.f32 %v1208, %v1225
        %v1237 = vmul.f32 %v1209, %v1225
        %v1238 = vlaneseq
        %v1239 = vshrl.u32 %v1238, 7
        %v1240 = vsub.s32 0, %v1239
        %v1241 = vrot.slane %v490, %v1240
        %v1242 = vlaneseq
        %v1243 = vshrl.u32 %v1242, 7
        %v1244 = vsub.s32 0, %v1243
        %v1245 = vrot.slane %v497, %v1244
        %v1246 = vlaneseq
        %v1247 = vshrl.u32 %v1246, 7
        %v1248 = vsub.s32 0, %v1247
        %v1249 = vrot.slane %v498, %v1248
        %v1250 = vlaneseq
        %v1251 = vshrl.u32 %v1250, 7
        %v1252 = vsub.s32 0, %v1251
        %v1253 = vrot.slane %v499, %v1252
        %1254 = vrot.lane.b32.xlu0 %v1241, 1
        %v1255 = vpop.permute.xlu0 %1254
        %1256 = vrot.lane.b32.xlu0 %v1245, 1
        %v1257 = vpop.permute.xlu0 %1256
        %1258 = vrot.lane.b32.xlu0 %v1249, 1
        %v1259 = vpop.permute.xlu0 %1258
        %1260 = vrot.lane.b32.xlu0 %v1253, 1
        %v1261 = vpop.permute.xlu0 %1260
        %v1266 = vmul.f32 %v1202, %v1255
        %v1267 = vmul.f32 %v1203, %v1255
        %v1268 = vmul.f32 %v1204, %v1257
        %v1269 = vmul.f32 %v1205, %v1257
        %v1270 = vmul.f32 %v1206, %v1259
        %v1271 = vmul.f32 %v1207, %v1259
        %v1272 = vmul.f32 %v1208, %v1261
        %v1273 = vmul.f32 %v1209, %v1261
        %1282 = vrot.lane.b32.xlu0 %v1266, 127
        %v1283 = vpop.permute.xlu0 %1282
        %1284 = vrot.lane.b32.xlu0 %v1267, 127
        %v1285 = vpop.permute.xlu0 %1284
        %1286 = vrot.lane.b32.xlu0 %v1268, 127
        %v1287 = vpop.permute.xlu0 %1286
        %1288 = vrot.lane.b32.xlu0 %v1269, 127
        %v1289 = vpop.permute.xlu0 %1288
        %1290 = vrot.lane.b32.xlu0 %v1270, 127
        %v1291 = vpop.permute.xlu0 %1290
        %1292 = vrot.lane.b32.xlu0 %v1271, 127
        %v1293 = vpop.permute.xlu0 %1292
        %1294 = vrot.lane.b32.xlu0 %v1272, 127
        %v1295 = vpop.permute.xlu0 %1294
        %1296 = vrot.lane.b32.xlu0 %v1273, 127
        %v1297 = vpop.permute.xlu0 %1296
        %v1306 = vadd.f32 %v1230, %v1283
        %v1307 = vadd.f32 %v1231, %v1285
        %v1308 = vadd.f32 %v1232, %v1287
        %v1309 = vadd.f32 %v1233, %v1289
        %v1310 = vadd.f32 %v1234, %v1291
        %v1311 = vadd.f32 %v1235, %v1293
        %v1312 = vadd.f32 %v1236, %v1295
        %v1313 = vadd.f32 %v1237, %v1297
        %v1314 = vlaneseq
        %v1315 = vshrl.u32 %v1314, 7
        %v1316 = vsub.s32 0, %v1315
        %v1317 = vrot.slane %v517, %v1316
        %v1318 = vlaneseq
        %v1319 = vshrl.u32 %v1318, 7
        %v1320 = vsub.s32 0, %v1319
        %v1321 = vrot.slane %v524, %v1320
        %v1322 = vlaneseq
        %v1323 = vshrl.u32 %v1322, 7
        %v1324 = vsub.s32 0, %v1323
        %v1325 = vrot.slane %v525, %v1324
        %v1326 = vlaneseq
        %v1327 = vshrl.u32 %v1326, 7
        %v1328 = vsub.s32 0, %v1327
        %v1329 = vrot.slane %v526, %v1328
        %1330 = vrot.lane.b32.xlu0 %v1317, 2
        %v1331 = vpop.permute.xlu0 %1330
        %1332 = vrot.lane.b32.xlu0 %v1321, 2
        %v1333 = vpop.permute.xlu0 %1332
        %1334 = vrot.lane.b32.xlu0 %v1325, 2
        %v1335 = vpop.permute.xlu0 %1334
        %1336 = vrot.lane.b32.xlu0 %v1329, 2
        %v1337 = vpop.permute.xlu0 %1336
        %v1342 = vmul.f32 %v1202, %v1331
        %v1343 = vmul.f32 %v1203, %v1331
        %v1344 = vmul.f32 %v1204, %v1333
        %v1345 = vmul.f32 %v1205, %v1333
        %v1346 = vmul.f32 %v1206, %v1335
        %v1347 = vmul.f32 %v1207, %v1335
        %v1348 = vmul.f32 %v1208, %v1337
        %v1349 = vmul.f32 %v1209, %v1337
        %1358 = vrot.lane.b32.xlu0 %v1342, 126
        %v1359 = vpop.permute.xlu0 %1358
        %1360 = vrot.lane.b32.xlu0 %v1343, 126
        %v1361 = vpop.permute.xlu0 %1360
        %1362 = vrot.lane.b32.xlu0 %v1344, 126
        %v1363 = vpop.permute.xlu0 %1362
        %1364 = vrot.lane.b32.xlu0 %v1345, 126
        %v1365 = vpop.permute.xlu0 %1364
        %1366 = vrot.lane.b32.xlu0 %v1346, 126
        %v1367 = vpop.permute.xlu0 %1366
        %1368 = vrot.lane.b32.xlu0 %v1347, 126
        %v1369 = vpop.permute.xlu0 %1368
        %1370 = vrot.lane.b32.xlu0 %v1348, 126
        %v1371 = vpop.permute.xlu0 %1370
        %1372 = vrot.lane.b32.xlu0 %v1349, 126
        %v1373 = vpop.permute.xlu0 %1372
        %v1382 = vadd.f32 %v1306, %v1359
        %v1383 = vadd.f32 %v1307, %v1361
        %v1384 = vadd.f32 %v1308, %v1363
        %v1385 = vadd.f32 %v1309, %v1365
        %v1386 = vadd.f32 %v1310, %v1367
        %v1387 = vadd.f32 %v1311, %v1369
        %v1388 = vadd.f32 %v1312, %v1371
        %v1389 = vadd.f32 %v1313, %v1373
        %v1390 = vlaneseq
        %v1391 = vshrl.u32 %v1390, 7
        %v1392 = vsub.s32 0, %v1391
        %v1393 = vrot.slane %v544, %v1392
        %v1394 = vlaneseq
        %v1395 = vshrl.u32 %v1394, 7
        %v1396 = vsub.s32 0, %v1395
        %v1397 = vrot.slane %v551, %v1396
        %v1398 = vlaneseq
        %v1399 = vshrl.u32 %v1398, 7
        %v1400 = vsub.s32 0, %v1399
        %v1401 = vrot.slane %v552, %v1400
        %v1402 = vlaneseq
        %v1403 = vshrl.u32 %v1402, 7
        %v1404 = vsub.s32 0, %v1403
        %v1405 = vrot.slane %v553, %v1404
        %1406 = vrot.lane.b32.xlu0 %v1393, 3
        %v1407 = vpop.permute.xlu0 %1406
        %1408 = vrot.lane.b32.xlu0 %v1397, 3
        %v1409 = vpop.permute.xlu0 %1408
        %1410 = vrot.lane.b32.xlu0 %v1401, 3
        %v1411 = vpop.permute.xlu0 %1410
        %1412 = vrot.lane.b32.xlu0 %v1405, 3
        %v1413 = vpop.permute.xlu0 %1412
        %v1418 = vmul.f32 %v1202, %v1407
        %v1419 = vmul.f32 %v1203, %v1407
        %v1420 = vmul.f32 %v1204, %v1409
        %v1421 = vmul.f32 %v1205, %v1409
        %v1422 = vmul.f32 %v1206, %v1411
        %v1423 = vmul.f32 %v1207, %v1411
        %v1424 = vmul.f32 %v1208, %v1413
        %v1425 = vmul.f32 %v1209, %v1413
        %1434 = vrot.lane.b32.xlu0 %v1418, 125
        %v1435 = vpop.permute.xlu0 %1434
        %1436 = vrot.lane.b32.xlu0 %v1419, 125
        %v1437 = vpop.permute.xlu0 %1436
        %1438 = vrot.lane.b32.xlu0 %v1420, 125
        %v1439 = vpop.permute.xlu0 %1438
        %1440 = vrot.lane.b32.xlu0 %v1421, 125
        %v1441 = vpop.permute.xlu0 %1440
        %1442 = vrot.lane.b32.xlu0 %v1422, 125
        %v1443 = vpop.permute.xlu0 %1442
        %1444 = vrot.lane.b32.xlu0 %v1423, 125
        %v1445 = vpop.permute.xlu0 %1444
        %1446 = vrot.lane.b32.xlu0 %v1424, 125
        %v1447 = vpop.permute.xlu0 %1446
        %1448 = vrot.lane.b32.xlu0 %v1425, 125
        %v1449 = vpop.permute.xlu0 %1448
        %v1458 = vadd.f32 %v1382, %v1435
        %v1459 = vadd.f32 %v1383, %v1437
        %v1460 = vadd.f32 %v1384, %v1439
        %v1461 = vadd.f32 %v1385, %v1441
        %v1462 = vadd.f32 %v1386, %v1443
        %v1463 = vadd.f32 %v1387, %v1445
        %v1464 = vadd.f32 %v1388, %v1447
        %v1465 = vadd.f32 %v1389, %v1449
        %v1466 = vlaneseq
        %v1467 = vshrl.u32 %v1466, 7
        %v1468 = vsub.s32 0, %v1467
        %v1469 = vrot.slane %v571, %v1468
        %v1470 = vlaneseq
        %v1471 = vshrl.u32 %v1470, 7
        %v1472 = vsub.s32 0, %v1471
        %v1473 = vrot.slane %v578, %v1472
        %v1474 = vlaneseq
        %v1475 = vshrl.u32 %v1474, 7
        %v1476 = vsub.s32 0, %v1475
        %v1477 = vrot.slane %v579, %v1476
        %v1478 = vlaneseq
        %v1479 = vshrl.u32 %v1478, 7
        %v1480 = vsub.s32 0, %v1479
        %v1481 = vrot.slane %v580, %v1480
        %1482 = vrot.lane.b32.xlu0 %v1469, 4
        %v1483 = vpop.permute.xlu0 %1482
        %1484 = vrot.lane.b32.xlu0 %v1473, 4
        %v1485 = vpop.permute.xlu0 %1484
        %1486 = vrot.lane.b32.xlu0 %v1477, 4
        %v1487 = vpop.permute.xlu0 %1486
        %1488 = vrot.lane.b32.xlu0 %v1481, 4
        %v1489 = vpop.permute.xlu0 %1488
        %v1494 = vmul.f32 %v1202, %v1483
        %v1495 = vmul.f32 %v1203, %v1483
        %v1496 = vmul.f32 %v1204, %v1485
        %v1497 = vmul.f32 %v1205, %v1485
        %v1498 = vmul.f32 %v1206, %v1487
        %v1499 = vmul.f32 %v1207, %v1487
        %v1500 = vmul.f32 %v1208, %v1489
        %v1501 = vmul.f32 %v1209, %v1489
        %1510 = vrot.lane.b32.xlu0 %v1494, 124
        %v1511 = vpop.permute.xlu0 %1510
        %1512 = vrot.lane.b32.xlu0 %v1495, 124
        %v1513 = vpop.permute.xlu0 %1512
        %1514 = vrot.lane.b32.xlu0 %v1496, 124
        %v1515 = vpop.permute.xlu0 %1514
        %1516 = vrot.lane.b32.xlu0 %v1497, 124
        %v1517 = vpop.permute.xlu0 %1516
        %1518 = vrot.lane.b32.xlu0 %v1498, 124
        %v1519 = vpop.permute.xlu0 %1518
        %1520 = vrot.lane.b32.xlu0 %v1499, 124
        %v1521 = vpop.permute.xlu0 %1520
        %1522 = vrot.lane.b32.xlu0 %v1500, 124
        %v1523 = vpop.permute.xlu0 %1522
        %1524 = vrot.lane.b32.xlu0 %v1501, 124
        %v1525 = vpop.permute.xlu0 %1524
        %v1534 = vadd.f32 %v1458, %v1511
        %v1535 = vadd.f32 %v1459, %v1513
        %v1536 = vadd.f32 %v1460, %v1515
        %v1537 = vadd.f32 %v1461, %v1517
        %v1538 = vadd.f32 %v1462, %v1519
        %v1539 = vadd.f32 %v1463, %v1521
        %v1540 = vadd.f32 %v1464, %v1523
        %v1541 = vadd.f32 %v1465, %v1525
        %v1542 = vld [vmem:[%s156 + $0x1] sm:$0xff]
        %v1543 = vld [vmem:[%s156 + $0x9] sm:$0xff]
        %v1544 = vld [vmem:[%s156 + $0x19] sm:$0xff]
        %v1545 = vld [vmem:[%s156 + $0x21] sm:$0xff]
        %v1546 = vld [vmem:[%s156 + $0x31] sm:$0xff]
        %v1547 = vld [vmem:[%s156 + $0x39] sm:$0xff]
        %v1548 = vld [vmem:[%s156 + $0x49] sm:$0xff]
        %v1549 = vld [vmem:[%s156 + $0x51] sm:$0xff]
        %v1550 = vlaneseq
        %v1551 = vshrl.u32 %v1550, 7
        %v1552 = vsub.s32 0, %v1551
        %v1553 = vrot.slane %v598, %v1552
        %v1554 = vlaneseq
        %v1555 = vshrl.u32 %v1554, 7
        %v1556 = vsub.s32 0, %v1555
        %v1557 = vrot.slane %v605, %v1556
        %v1558 = vlaneseq
        %v1559 = vshrl.u32 %v1558, 7
        %v1560 = vsub.s32 0, %v1559
        %v1561 = vrot.slane %v606, %v1560
        %v1562 = vlaneseq
        %v1563 = vshrl.u32 %v1562, 7
        %v1564 = vsub.s32 0, %v1563
        %v1565 = vrot.slane %v607, %v1564
        %v1570 = vmul.f32 %v1542, %v1553
        %v1571 = vmul.f32 %v1543, %v1553
        %v1572 = vmul.f32 %v1544, %v1557
        %v1573 = vmul.f32 %v1545, %v1557
        %v1574 = vmul.f32 %v1546, %v1561
        %v1575 = vmul.f32 %v1547, %v1561
        %v1576 = vmul.f32 %v1548, %v1565
        %v1577 = vmul.f32 %v1549, %v1565
        %v1578 = vlaneseq
        %v1579 = vshrl.u32 %v1578, 7
        %v1580 = vsub.s32 0, %v1579
        %v1581 = vrot.slane %v625, %v1580
        %v1582 = vlaneseq
        %v1583 = vshrl.u32 %v1582, 7
        %v1584 = vsub.s32 0, %v1583
        %v1585 = vrot.slane %v632, %v1584
        %v1586 = vlaneseq
        %v1587 = vshrl.u32 %v1586, 7
        %v1588 = vsub.s32 0, %v1587
        %v1589 = vrot.slane %v633, %v1588
        %v1590 = vlaneseq
        %v1591 = vshrl.u32 %v1590, 7
        %v1592 = vsub.s32 0, %v1591
        %v1593 = vrot.slane %v634, %v1592
        %1594 = vrot.lane.b32.xlu0 %v1581, 1
        %v1595 = vpop.permute.xlu0 %1594
        %1596 = vrot.lane.b32.xlu0 %v1585, 1
        %v1597 = vpop.permute.xlu0 %1596
        %1598 = vrot.lane.b32.xlu0 %v1589, 1
        %v1599 = vpop.permute.xlu0 %1598
        %1600 = vrot.lane.b32.xlu0 %v1593, 1
        %v1601 = vpop.permute.xlu0 %1600
        %v1606 = vmul.f32 %v1542, %v1595
        %v1607 = vmul.f32 %v1543, %v1595
        %v1608 = vmul.f32 %v1544, %v1597
        %v1609 = vmul.f32 %v1545, %v1597
        %v1610 = vmul.f32 %v1546, %v1599
        %v1611 = vmul.f32 %v1547, %v1599
        %v1612 = vmul.f32 %v1548, %v1601
        %v1613 = vmul.f32 %v1549, %v1601
        %1622 = vrot.lane.b32.xlu0 %v1606, 127
        %v1623 = vpop.permute.xlu0 %1622
        %1624 = vrot.lane.b32.xlu0 %v1607, 127
        %v1625 = vpop.permute.xlu0 %1624
        %1626 = vrot.lane.b32.xlu0 %v1608, 127
        %v1627 = vpop.permute.xlu0 %1626
        %1628 = vrot.lane.b32.xlu0 %v1609, 127
        %v1629 = vpop.permute.xlu0 %1628
        %1630 = vrot.lane.b32.xlu0 %v1610, 127
        %v1631 = vpop.permute.xlu0 %1630
        %1632 = vrot.lane.b32.xlu0 %v1611, 127
        %v1633 = vpop.permute.xlu0 %1632
        %1634 = vrot.lane.b32.xlu0 %v1612, 127
        %v1635 = vpop.permute.xlu0 %1634
        %1636 = vrot.lane.b32.xlu0 %v1613, 127
        %v1637 = vpop.permute.xlu0 %1636
        %v1646 = vadd.f32 %v1570, %v1623
        %v1647 = vadd.f32 %v1571, %v1625
        %v1648 = vadd.f32 %v1572, %v1627
        %v1649 = vadd.f32 %v1573, %v1629
        %v1650 = vadd.f32 %v1574, %v1631
        %v1651 = vadd.f32 %v1575, %v1633
        %v1652 = vadd.f32 %v1576, %v1635
        %v1653 = vadd.f32 %v1577, %v1637
        %v1654 = vlaneseq
        %v1655 = vshrl.u32 %v1654, 7
        %v1656 = vsub.s32 0, %v1655
        %v1657 = vrot.slane %v220, %v1656
        %v1658 = vlaneseq
        %v1659 = vshrl.u32 %v1658, 7
        %v1660 = vsub.s32 0, %v1659
        %v1661 = vrot.slane %v227, %v1660
        %v1662 = vlaneseq
        %v1663 = vshrl.u32 %v1662, 7
        %v1664 = vsub.s32 0, %v1663
        %v1665 = vrot.slane %v228, %v1664
        %v1666 = vlaneseq
        %v1667 = vshrl.u32 %v1666, 7
        %v1668 = vsub.s32 0, %v1667
        %v1669 = vrot.slane %v229, %v1668
        %1670 = vrot.lane.b32.xlu0 %v1657, 1
        %v1671 = vpop.permute.xlu0 %1670
        %1672 = vrot.lane.b32.xlu0 %v1661, 1
        %v1673 = vpop.permute.xlu0 %1672
        %1674 = vrot.lane.b32.xlu0 %v1665, 1
        %v1675 = vpop.permute.xlu0 %1674
        %1676 = vrot.lane.b32.xlu0 %v1669, 1
        %v1677 = vpop.permute.xlu0 %1676
        %v1682 = vmul.f32 %v1542, %v1671
        %v1683 = vmul.f32 %v1543, %v1671
        %v1684 = vmul.f32 %v1544, %v1673
        %v1685 = vmul.f32 %v1545, %v1673
        %v1686 = vmul.f32 %v1546, %v1675
        %v1687 = vmul.f32 %v1547, %v1675
        %v1688 = vmul.f32 %v1548, %v1677
        %v1689 = vmul.f32 %v1549, %v1677
        %v1690 = vlaneseq
        %v1691 = vshrl.u32 %v1690, 7
        %v1692 = vsub.s32 0, %v1691
        %v1693 = vrot.slane %v652, %v1692
        %v1694 = vlaneseq
        %v1695 = vshrl.u32 %v1694, 7
        %v1696 = vsub.s32 0, %v1695
        %v1697 = vrot.slane %v659, %v1696
        %v1698 = vlaneseq
        %v1699 = vshrl.u32 %v1698, 7
        %v1700 = vsub.s32 0, %v1699
        %v1701 = vrot.slane %v660, %v1700
        %v1702 = vlaneseq
        %v1703 = vshrl.u32 %v1702, 7
        %v1704 = vsub.s32 0, %v1703
        %v1705 = vrot.slane %v661, %v1704
        %1706 = vrot.lane.b32.xlu0 %v1693, 2
        %v1707 = vpop.permute.xlu0 %1706
        %1708 = vrot.lane.b32.xlu0 %v1697, 2
        %v1709 = vpop.permute.xlu0 %1708
        %1710 = vrot.lane.b32.xlu0 %v1701, 2
        %v1711 = vpop.permute.xlu0 %1710
        %1712 = vrot.lane.b32.xlu0 %v1705, 2
        %v1713 = vpop.permute.xlu0 %1712
        %v1718 = vmul.f32 %v1542, %v1707
        %v1719 = vmul.f32 %v1543, %v1707
        %v1720 = vmul.f32 %v1544, %v1709
        %v1721 = vmul.f32 %v1545, %v1709
        %v1722 = vmul.f32 %v1546, %v1711
        %v1723 = vmul.f32 %v1547, %v1711
        %v1724 = vmul.f32 %v1548, %v1713
        %v1725 = vmul.f32 %v1549, %v1713
        %1734 = vrot.lane.b32.xlu0 %v1718, 126
        %v1735 = vpop.permute.xlu0 %1734
        %1736 = vrot.lane.b32.xlu0 %v1719, 126
        %v1737 = vpop.permute.xlu0 %1736
        %1738 = vrot.lane.b32.xlu0 %v1720, 126
        %v1739 = vpop.permute.xlu0 %1738
        %1740 = vrot.lane.b32.xlu0 %v1721, 126
        %v1741 = vpop.permute.xlu0 %1740
        %1742 = vrot.lane.b32.xlu0 %v1722, 126
        %v1743 = vpop.permute.xlu0 %1742
        %1744 = vrot.lane.b32.xlu0 %v1723, 126
        %v1745 = vpop.permute.xlu0 %1744
        %1746 = vrot.lane.b32.xlu0 %v1724, 126
        %v1747 = vpop.permute.xlu0 %1746
        %1748 = vrot.lane.b32.xlu0 %v1725, 126
        %v1749 = vpop.permute.xlu0 %1748
        %v1758 = vadd.f32 %v1646, %v1735
        %v1759 = vadd.f32 %v1647, %v1737
        %v1760 = vadd.f32 %v1648, %v1739
        %v1761 = vadd.f32 %v1649, %v1741
        %v1762 = vadd.f32 %v1650, %v1743
        %v1763 = vadd.f32 %v1651, %v1745
        %v1764 = vadd.f32 %v1652, %v1747
        %v1765 = vadd.f32 %v1653, %v1749
        %v1766 = vlaneseq
        %v1767 = vshrl.u32 %v1766, 7
        %v1768 = vsub.s32 0, %v1767
        %v1769 = vrot.slane %v247, %v1768
        %v1770 = vlaneseq
        %v1771 = vshrl.u32 %v1770, 7
        %v1772 = vsub.s32 0, %v1771
        %v1773 = vrot.slane %v254, %v1772
        %v1774 = vlaneseq
        %v1775 = vshrl.u32 %v1774, 7
        %v1776 = vsub.s32 0, %v1775
        %v1777 = vrot.slane %v255, %v1776
        %v1778 = vlaneseq
        %v1779 = vshrl.u32 %v1778, 7
        %v1780 = vsub.s32 0, %v1779
        %v1781 = vrot.slane %v256, %v1780
        %1782 = vrot.lane.b32.xlu0 %v1769, 2
        %v1783 = vpop.permute.xlu0 %1782
        %1784 = vrot.lane.b32.xlu0 %v1773, 2
        %v1785 = vpop.permute.xlu0 %1784
        %1786 = vrot.lane.b32.xlu0 %v1777, 2
        %v1787 = vpop.permute.xlu0 %1786
        %1788 = vrot.lane.b32.xlu0 %v1781, 2
        %v1789 = vpop.permute.xlu0 %1788
        %v1794 = vmul.f32 %v1542, %v1783
        %v1795 = vmul.f32 %v1543, %v1783
        %v1796 = vmul.f32 %v1544, %v1785
        %v1797 = vmul.f32 %v1545, %v1785
        %v1798 = vmul.f32 %v1546, %v1787
        %v1799 = vmul.f32 %v1547, %v1787
        %v1800 = vmul.f32 %v1548, %v1789
        %v1801 = vmul.f32 %v1549, %v1789
        %1810 = vrot.lane.b32.xlu0 %v1794, 127
        %v1811 = vpop.permute.xlu0 %1810
        %1812 = vrot.lane.b32.xlu0 %v1795, 127
        %v1813 = vpop.permute.xlu0 %1812
        %1814 = vrot.lane.b32.xlu0 %v1796, 127
        %v1815 = vpop.permute.xlu0 %1814
        %1816 = vrot.lane.b32.xlu0 %v1797, 127
        %v1817 = vpop.permute.xlu0 %1816
        %1818 = vrot.lane.b32.xlu0 %v1798, 127
        %v1819 = vpop.permute.xlu0 %1818
        %1820 = vrot.lane.b32.xlu0 %v1799, 127
        %v1821 = vpop.permute.xlu0 %1820
        %1822 = vrot.lane.b32.xlu0 %v1800, 127
        %v1823 = vpop.permute.xlu0 %1822
        %1824 = vrot.lane.b32.xlu0 %v1801, 127
        %v1825 = vpop.permute.xlu0 %1824
        %v1834 = vadd.f32 %v1682, %v1811
        %v1835 = vadd.f32 %v1683, %v1813
        %v1836 = vadd.f32 %v1684, %v1815
        %v1837 = vadd.f32 %v1685, %v1817
        %v1838 = vadd.f32 %v1686, %v1819
        %v1839 = vadd.f32 %v1687, %v1821
        %v1840 = vadd.f32 %v1688, %v1823
        %v1841 = vadd.f32 %v1689, %v1825
        %v1842 = vlaneseq
        %v1843 = vshrl.u32 %v1842, 7
        %v1844 = vsub.s32 0, %v1843
        %v1845 = vrot.slane %v679, %v1844
        %v1846 = vlaneseq
        %v1847 = vshrl.u32 %v1846, 7
        %v1848 = vsub.s32 0, %v1847
        %v1849 = vrot.slane %v686, %v1848
        %v1850 = vlaneseq
        %v1851 = vshrl.u32 %v1850, 7
        %v1852 = vsub.s32 0, %v1851
        %v1853 = vrot.slane %v687, %v1852
        %v1854 = vlaneseq
        %v1855 = vshrl.u32 %v1854, 7
        %v1856 = vsub.s32 0, %v1855
        %v1857 = vrot.slane %v688, %v1856
        %1858 = vrot.lane.b32.xlu0 %v1845, 3
        %v1859 = vpop.permute.xlu0 %1858
        %1860 = vrot.lane.b32.xlu0 %v1849, 3
        %v1861 = vpop.permute.xlu0 %1860
        %1862 = vrot.lane.b32.xlu0 %v1853, 3
        %v1863 = vpop.permute.xlu0 %1862
        %1864 = vrot.lane.b32.xlu0 %v1857, 3
        %v1865 = vpop.permute.xlu0 %1864
        %v1870 = vmul.f32 %v1542, %v1859
        %v1871 = vmul.f32 %v1543, %v1859
        %v1872 = vmul.f32 %v1544, %v1861
        %v1873 = vmul.f32 %v1545, %v1861
        %v1874 = vmul.f32 %v1546, %v1863
        %v1875 = vmul.f32 %v1547, %v1863
        %v1876 = vmul.f32 %v1548, %v1865
        %v1877 = vmul.f32 %v1549, %v1865
        %1886 = vrot.lane.b32.xlu0 %v1870, 125
        %v1887 = vpop.permute.xlu0 %1886
        %1888 = vrot.lane.b32.xlu0 %v1871, 125
        %v1889 = vpop.permute.xlu0 %1888
        %1890 = vrot.lane.b32.xlu0 %v1872, 125
        %v1891 = vpop.permute.xlu0 %1890
        %1892 = vrot.lane.b32.xlu0 %v1873, 125
        %v1893 = vpop.permute.xlu0 %1892
        %1894 = vrot.lane.b32.xlu0 %v1874, 125
        %v1895 = vpop.permute.xlu0 %1894
        %1896 = vrot.lane.b32.xlu0 %v1875, 125
        %v1897 = vpop.permute.xlu0 %1896
        %1898 = vrot.lane.b32.xlu0 %v1876, 125
        %v1899 = vpop.permute.xlu0 %1898
        %1900 = vrot.lane.b32.xlu0 %v1877, 125
        %v1901 = vpop.permute.xlu0 %1900
        %v1910 = vadd.f32 %v1758, %v1887
        %v1911 = vadd.f32 %v1759, %v1889
        %v1912 = vadd.f32 %v1760, %v1891
        %v1913 = vadd.f32 %v1761, %v1893
        %v1914 = vadd.f32 %v1762, %v1895
        %v1915 = vadd.f32 %v1763, %v1897
        %v1916 = vadd.f32 %v1764, %v1899
        %v1917 = vadd.f32 %v1765, %v1901
        %v1918 = vlaneseq
        %v1919 = vshrl.u32 %v1918, 7
        %v1920 = vsub.s32 0, %v1919
        %v1921 = vrot.slane %v274, %v1920
        %v1922 = vlaneseq
        %v1923 = vshrl.u32 %v1922, 7
        %v1924 = vsub.s32 0, %v1923
        %v1925 = vrot.slane %v281, %v1924
        %v1926 = vlaneseq
        %v1927 = vshrl.u32 %v1926, 7
        %v1928 = vsub.s32 0, %v1927
        %v1929 = vrot.slane %v282, %v1928
        %v1930 = vlaneseq
        %v1931 = vshrl.u32 %v1930, 7
        %v1932 = vsub.s32 0, %v1931
        %v1933 = vrot.slane %v283, %v1932
        %1934 = vrot.lane.b32.xlu0 %v1921, 3
        %v1935 = vpop.permute.xlu0 %1934
        %1936 = vrot.lane.b32.xlu0 %v1925, 3
        %v1937 = vpop.permute.xlu0 %1936
        %1938 = vrot.lane.b32.xlu0 %v1929, 3
        %v1939 = vpop.permute.xlu0 %1938
        %1940 = vrot.lane.b32.xlu0 %v1933, 3
        %v1941 = vpop.permute.xlu0 %1940
        %v1946 = vmul.f32 %v1542, %v1935
        %v1947 = vmul.f32 %v1543, %v1935
        %v1948 = vmul.f32 %v1544, %v1937
        %v1949 = vmul.f32 %v1545, %v1937
        %v1950 = vmul.f32 %v1546, %v1939
        %v1951 = vmul.f32 %v1547, %v1939
        %v1952 = vmul.f32 %v1548, %v1941
        %v1953 = vmul.f32 %v1549, %v1941
        %1962 = vrot.lane.b32.xlu0 %v1946, 126
        %v1963 = vpop.permute.xlu0 %1962
        %1964 = vrot.lane.b32.xlu0 %v1947, 126
        %v1965 = vpop.permute.xlu0 %1964
        %1966 = vrot.lane.b32.xlu0 %v1948, 126
        %v1967 = vpop.permute.xlu0 %1966
        %1968 = vrot.lane.b32.xlu0 %v1949, 126
        %v1969 = vpop.permute.xlu0 %1968
        %1970 = vrot.lane.b32.xlu0 %v1950, 126
        %v1971 = vpop.permute.xlu0 %1970
        %1972 = vrot.lane.b32.xlu0 %v1951, 126
        %v1973 = vpop.permute.xlu0 %1972
        %1974 = vrot.lane.b32.xlu0 %v1952, 126
        %v1975 = vpop.permute.xlu0 %1974
        %1976 = vrot.lane.b32.xlu0 %v1953, 126
        %v1977 = vpop.permute.xlu0 %1976
        %v1986 = vadd.f32 %v1834, %v1963
        %v1987 = vadd.f32 %v1835, %v1965
        %v1988 = vadd.f32 %v1836, %v1967
        %v1989 = vadd.f32 %v1837, %v1969
        %v1990 = vadd.f32 %v1838, %v1971
        %v1991 = vadd.f32 %v1839, %v1973
        %v1992 = vadd.f32 %v1840, %v1975
        %v1993 = vadd.f32 %v1841, %v1977
        %v1994 = vlaneseq
        %v1995 = vshrl.u32 %v1994, 7
        %v1996 = vsub.s32 0, %v1995
        %v1997 = vrot.slane %v706, %v1996
        %v1998 = vlaneseq
        %v1999 = vshrl.u32 %v1998, 7
        %v2000 = vsub.s32 0, %v1999
        %v2001 = vrot.slane %v713, %v2000
        %v2002 = vlaneseq
        %v2003 = vshrl.u32 %v2002, 7
        %v2004 = vsub.s32 0, %v2003
        %v2005 = vrot.slane %v714, %v2004
        %v2006 = vlaneseq
        %v2007 = vshrl.u32 %v2006, 7
        %v2008 = vsub.s32 0, %v2007
        %v2009 = vrot.slane %v715, %v2008
        %2010 = vrot.lane.b32.xlu0 %v1997, 4
        %v2011 = vpop.permute.xlu0 %2010
        %2012 = vrot.lane.b32.xlu0 %v2001, 4
        %v2013 = vpop.permute.xlu0 %2012
        %2014 = vrot.lane.b32.xlu0 %v2005, 4
        %v2015 = vpop.permute.xlu0 %2014
        %2016 = vrot.lane.b32.xlu0 %v2009, 4
        %v2017 = vpop.permute.xlu0 %2016
        %v2022 = vmul.f32 %v1542, %v2011
        %v2023 = vmul.f32 %v1543, %v2011
        %v2024 = vmul.f32 %v1544, %v2013
        %v2025 = vmul.f32 %v1545, %v2013
        %v2026 = vmul.f32 %v1546, %v2015
        %v2027 = vmul.f32 %v1547, %v2015
        %v2028 = vmul.f32 %v1548, %v2017
        %v2029 = vmul.f32 %v1549, %v2017
        %2038 = vrot.lane.b32.xlu0 %v2022, 124
        %v2039 = vpop.permute.xlu0 %2038
        %2040 = vrot.lane.b32.xlu0 %v2023, 124
        %v2041 = vpop.permute.xlu0 %2040
        %2042 = vrot.lane.b32.xlu0 %v2024, 124
        %v2043 = vpop.permute.xlu0 %2042
        %2044 = vrot.lane.b32.xlu0 %v2025, 124
        %v2045 = vpop.permute.xlu0 %2044
        %2046 = vrot.lane.b32.xlu0 %v2026, 124
        %v2047 = vpop.permute.xlu0 %2046
        %2048 = vrot.lane.b32.xlu0 %v2027, 124
        %v2049 = vpop.permute.xlu0 %2048
        %2050 = vrot.lane.b32.xlu0 %v2028, 124
        %v2051 = vpop.permute.xlu0 %2050
        %2052 = vrot.lane.b32.xlu0 %v2029, 124
        %v2053 = vpop.permute.xlu0 %2052
        %v2062 = vadd.f32 %v1910, %v2039
        %v2063 = vadd.f32 %v1911, %v2041
        %v2064 = vadd.f32 %v1912, %v2043
        %v2065 = vadd.f32 %v1913, %v2045
        %v2066 = vadd.f32 %v1914, %v2047
        %v2067 = vadd.f32 %v1915, %v2049
        %v2068 = vadd.f32 %v1916, %v2051
        %v2069 = vadd.f32 %v1917, %v2053
        %v2070 = vld [vmem:[%s156 + $0x2] sm:$0xff]
        %v2071 = vld [vmem:[%s156 + $0xa] sm:$0xff]
        %v2072 = vld [vmem:[%s156 + $0x1a] sm:$0xff]
        %v2073 = vld [vmem:[%s156 + $0x22] sm:$0xff]
        %v2074 = vld [vmem:[%s156 + $0x32] sm:$0xff]
        %v2075 = vld [vmem:[%s156 + $0x3a] sm:$0xff]
        %v2076 = vld [vmem:[%s156 + $0x4a] sm:$0xff]
        %v2077 = vld [vmem:[%s156 + $0x52] sm:$0xff]
        %v2078 = vlaneseq
        %v2079 = vshrl.u32 %v2078, 7
        %v2080 = vsub.s32 0, %v2079
        %v2081 = vrot.slane %v733, %v2080
        %v2082 = vlaneseq
        %v2083 = vshrl.u32 %v2082, 7
        %v2084 = vsub.s32 0, %v2083
        %v2085 = vrot.slane %v740, %v2084
        %v2086 = vlaneseq
        %v2087 = vshrl.u32 %v2086, 7
        %v2088 = vsub.s32 0, %v2087
        %v2089 = vrot.slane %v741, %v2088
        %v2090 = vlaneseq
        %v2091 = vshrl.u32 %v2090, 7
        %v2092 = vsub.s32 0, %v2091
        %v2093 = vrot.slane %v742, %v2092
        %v2098 = vmul.f32 %v2070, %v2081
        %v2099 = vmul.f32 %v2071, %v2081
        %v2100 = vmul.f32 %v2072, %v2085
        %v2101 = vmul.f32 %v2073, %v2085
        %v2102 = vmul.f32 %v2074, %v2089
        %v2103 = vmul.f32 %v2075, %v2089
        %v2104 = vmul.f32 %v2076, %v2093
        %v2105 = vmul.f32 %v2077, %v2093
        %v2106 = vlaneseq
        %v2107 = vshrl.u32 %v2106, 7
        %v2108 = vsub.s32 0, %v2107
        %v2109 = vrot.slane %v760, %v2108
        %v2110 = vlaneseq
        %v2111 = vshrl.u32 %v2110, 7
        %v2112 = vsub.s32 0, %v2111
        %v2113 = vrot.slane %v767, %v2112
        %v2114 = vlaneseq
        %v2115 = vshrl.u32 %v2114, 7
        %v2116 = vsub.s32 0, %v2115
        %v2117 = vrot.slane %v768, %v2116
        %v2118 = vlaneseq
        %v2119 = vshrl.u32 %v2118, 7
        %v2120 = vsub.s32 0, %v2119
        %v2121 = vrot.slane %v769, %v2120
        %2122 = vrot.lane.b32.xlu0 %v2109, 1
        %v2123 = vpop.permute.xlu0 %2122
        %2124 = vrot.lane.b32.xlu0 %v2113, 1
        %v2125 = vpop.permute.xlu0 %2124
        %2126 = vrot.lane.b32.xlu0 %v2117, 1
        %v2127 = vpop.permute.xlu0 %2126
        %2128 = vrot.lane.b32.xlu0 %v2121, 1
        %v2129 = vpop.permute.xlu0 %2128
        %v2134 = vmul.f32 %v2070, %v2123
        %v2135 = vmul.f32 %v2071, %v2123
        %v2136 = vmul.f32 %v2072, %v2125
        %v2137 = vmul.f32 %v2073, %v2125
        %v2138 = vmul.f32 %v2074, %v2127
        %v2139 = vmul.f32 %v2075, %v2127
        %v2140 = vmul.f32 %v2076, %v2129
        %v2141 = vmul.f32 %v2077, %v2129
        %2150 = vrot.lane.b32.xlu0 %v2134, 127
        %v2151 = vpop.permute.xlu0 %2150
        %2152 = vrot.lane.b32.xlu0 %v2135, 127
        %v2153 = vpop.permute.xlu0 %2152
        %2154 = vrot.lane.b32.xlu0 %v2136, 127
        %v2155 = vpop.permute.xlu0 %2154
        %2156 = vrot.lane.b32.xlu0 %v2137, 127
        %v2157 = vpop.permute.xlu0 %2156
        %2158 = vrot.lane.b32.xlu0 %v2138, 127
        %v2159 = vpop.permute.xlu0 %2158
        %2160 = vrot.lane.b32.xlu0 %v2139, 127
        %v2161 = vpop.permute.xlu0 %2160
        %2162 = vrot.lane.b32.xlu0 %v2140, 127
        %v2163 = vpop.permute.xlu0 %2162
        %2164 = vrot.lane.b32.xlu0 %v2141, 127
        %v2165 = vpop.permute.xlu0 %2164
        %v2174 = vadd.f32 %v2098, %v2151
        %v2175 = vadd.f32 %v2099, %v2153
        %v2176 = vadd.f32 %v2100, %v2155
        %v2177 = vadd.f32 %v2101, %v2157
        %v2178 = vadd.f32 %v2102, %v2159
        %v2179 = vadd.f32 %v2103, %v2161
        %v2180 = vadd.f32 %v2104, %v2163
        %v2181 = vadd.f32 %v2105, %v2165
        %v2182 = vlaneseq
        %v2183 = vshrl.u32 %v2182, 7
        %v2184 = vsub.s32 0, %v2183
        %v2185 = vrot.slane %v301, %v2184
        %v2186 = vlaneseq
        %v2187 = vshrl.u32 %v2186, 7
        %v2188 = vsub.s32 0, %v2187
        %v2189 = vrot.slane %v308, %v2188
        %v2190 = vlaneseq
        %v2191 = vshrl.u32 %v2190, 7
        %v2192 = vsub.s32 0, %v2191
        %v2193 = vrot.slane %v309, %v2192
        %v2194 = vlaneseq
        %v2195 = vshrl.u32 %v2194, 7
        %v2196 = vsub.s32 0, %v2195
        %v2197 = vrot.slane %v310, %v2196
        %2198 = vrot.lane.b32.xlu0 %v2185, 1
        %v2199 = vpop.permute.xlu0 %2198
        %2200 = vrot.lane.b32.xlu0 %v2189, 1
        %v2201 = vpop.permute.xlu0 %2200
        %2202 = vrot.lane.b32.xlu0 %v2193, 1
        %v2203 = vpop.permute.xlu0 %2202
        %2204 = vrot.lane.b32.xlu0 %v2197, 1
        %v2205 = vpop.permute.xlu0 %2204
        %v2210 = vmul.f32 %v2070, %v2199
        %v2211 = vmul.f32 %v2071, %v2199
        %v2212 = vmul.f32 %v2072, %v2201
        %v2213 = vmul.f32 %v2073, %v2201
        %v2214 = vmul.f32 %v2074, %v2203
        %v2215 = vmul.f32 %v2075, %v2203
        %v2216 = vmul.f32 %v2076, %v2205
        %v2217 = vmul.f32 %v2077, %v2205
        %v2218 = vlaneseq
        %v2219 = vshrl.u32 %v2218, 7
        %v2220 = vsub.s32 0, %v2219
        %v2221 = vrot.slane %v787, %v2220
        %v2222 = vlaneseq
        %v2223 = vshrl.u32 %v2222, 7
        %v2224 = vsub.s32 0, %v2223
        %v2225 = vrot.slane %v794, %v2224
        %v2226 = vlaneseq
        %v2227 = vshrl.u32 %v2226, 7
        %v2228 = vsub.s32 0, %v2227
        %v2229 = vrot.slane %v795, %v2228
        %v2230 = vlaneseq
        %v2231 = vshrl.u32 %v2230, 7
        %v2232 = vsub.s32 0, %v2231
        %v2233 = vrot.slane %v796, %v2232
        %2234 = vrot.lane.b32.xlu0 %v2221, 2
        %v2235 = vpop.permute.xlu0 %2234
        %2236 = vrot.lane.b32.xlu0 %v2225, 2
        %v2237 = vpop.permute.xlu0 %2236
        %2238 = vrot.lane.b32.xlu0 %v2229, 2
        %v2239 = vpop.permute.xlu0 %2238
        %2240 = vrot.lane.b32.xlu0 %v2233, 2
        %v2241 = vpop.permute.xlu0 %2240
        %v2246 = vmul.f32 %v2070, %v2235
        %v2247 = vmul.f32 %v2071, %v2235
        %v2248 = vmul.f32 %v2072, %v2237
        %v2249 = vmul.f32 %v2073, %v2237
        %v2250 = vmul.f32 %v2074, %v2239
        %v2251 = vmul.f32 %v2075, %v2239
        %v2252 = vmul.f32 %v2076, %v2241
        %v2253 = vmul.f32 %v2077, %v2241
        %2262 = vrot.lane.b32.xlu0 %v2246, 126
        %v2263 = vpop.permute.xlu0 %2262
        %2264 = vrot.lane.b32.xlu0 %v2247, 126
        %v2265 = vpop.permute.xlu0 %2264
        %2266 = vrot.lane.b32.xlu0 %v2248, 126
        %v2267 = vpop.permute.xlu0 %2266
        %2268 = vrot.lane.b32.xlu0 %v2249, 126
        %v2269 = vpop.permute.xlu0 %2268
        %2270 = vrot.lane.b32.xlu0 %v2250, 126
        %v2271 = vpop.permute.xlu0 %2270
        %2272 = vrot.lane.b32.xlu0 %v2251, 126
        %v2273 = vpop.permute.xlu0 %2272
        %2274 = vrot.lane.b32.xlu0 %v2252, 126
        %v2275 = vpop.permute.xlu0 %2274
        %2276 = vrot.lane.b32.xlu0 %v2253, 126
        %v2277 = vpop.permute.xlu0 %2276
        %v2286 = vadd.f32 %v2174, %v2263
        %v2287 = vadd.f32 %v2175, %v2265
        %v2288 = vadd.f32 %v2176, %v2267
        %v2289 = vadd.f32 %v2177, %v2269
        %v2290 = vadd.f32 %v2178, %v2271
        %v2291 = vadd.f32 %v2179, %v2273
        %v2292 = vadd.f32 %v2180, %v2275
        %v2293 = vadd.f32 %v2181, %v2277
        %v2294 = vlaneseq
        %v2295 = vshrl.u32 %v2294, 7
        %v2296 = vsub.s32 0, %v2295
        %v2297 = vrot.slane %v328, %v2296
        %v2298 = vlaneseq
        %v2299 = vshrl.u32 %v2298, 7
        %v2300 = vsub.s32 0, %v2299
        %v2301 = vrot.slane %v335, %v2300
        %v2302 = vlaneseq
        %v2303 = vshrl.u32 %v2302, 7
        %v2304 = vsub.s32 0, %v2303
        %v2305 = vrot.slane %v336, %v2304
        %v2306 = vlaneseq
        %v2307 = vshrl.u32 %v2306, 7
        %v2308 = vsub.s32 0, %v2307
        %v2309 = vrot.slane %v337, %v2308
        %2310 = vrot.lane.b32.xlu0 %v2297, 2
        %v2311 = vpop.permute.xlu0 %2310
        %2312 = vrot.lane.b32.xlu0 %v2301, 2
        %v2313 = vpop.permute.xlu0 %2312
        %2314 = vrot.lane.b32.xlu0 %v2305, 2
        %v2315 = vpop.permute.xlu0 %2314
        %2316 = vrot.lane.b32.xlu0 %v2309, 2
        %v2317 = vpop.permute.xlu0 %2316
        %v2322 = vmul.f32 %v2070, %v2311
        %v2323 = vmul.f32 %v2071, %v2311
        %v2324 = vmul.f32 %v2072, %v2313
        %v2325 = vmul.f32 %v2073, %v2313
        %v2326 = vmul.f32 %v2074, %v2315
        %v2327 = vmul.f32 %v2075, %v2315
        %v2328 = vmul.f32 %v2076, %v2317
        %v2329 = vmul.f32 %v2077, %v2317
        %2338 = vrot.lane.b32.xlu0 %v2322, 127
        %v2339 = vpop.permute.xlu0 %2338
        %2340 = vrot.lane.b32.xlu0 %v2323, 127
        %v2341 = vpop.permute.xlu0 %2340
        %2342 = vrot.lane.b32.xlu0 %v2324, 127
        %v2343 = vpop.permute.xlu0 %2342
        %2344 = vrot.lane.b32.xlu0 %v2325, 127
        %v2345 = vpop.permute.xlu0 %2344
        %2346 = vrot.lane.b32.xlu0 %v2326, 127
        %v2347 = vpop.permute.xlu0 %2346
        %2348 = vrot.lane.b32.xlu0 %v2327, 127
        %v2349 = vpop.permute.xlu0 %2348
        %2350 = vrot.lane.b32.xlu0 %v2328, 127
        %v2351 = vpop.permute.xlu0 %2350
        %2352 = vrot.lane.b32.xlu0 %v2329, 127
        %v2353 = vpop.permute.xlu0 %2352
        %v2362 = vadd.f32 %v2210, %v2339
        %v2363 = vadd.f32 %v2211, %v2341
        %v2364 = vadd.f32 %v2212, %v2343
        %v2365 = vadd.f32 %v2213, %v2345
        %v2366 = vadd.f32 %v2214, %v2347
        %v2367 = vadd.f32 %v2215, %v2349
        %v2368 = vadd.f32 %v2216, %v2351
        %v2369 = vadd.f32 %v2217, %v2353
        %v2370 = vlaneseq
        %v2371 = vshrl.u32 %v2370, 7
        %v2372 = vsub.s32 0, %v2371
        %v2373 = vrot.slane %v814, %v2372
        %v2374 = vlaneseq
        %v2375 = vshrl.u32 %v2374, 7
        %v2376 = vsub.s32 0, %v2375
        %v2377 = vrot.slane %v821, %v2376
        %v2378 = vlaneseq
        %v2379 = vshrl.u32 %v2378, 7
        %v2380 = vsub.s32 0, %v2379
        %v2381 = vrot.slane %v822, %v2380
        %v2382 = vlaneseq
        %v2383 = vshrl.u32 %v2382, 7
        %v2384 = vsub.s32 0, %v2383
        %v2385 = vrot.slane %v823, %v2384
        %2386 = vrot.lane.b32.xlu0 %v2373, 3
        %v2387 = vpop.permute.xlu0 %2386
        %2388 = vrot.lane.b32.xlu0 %v2377, 3
        %v2389 = vpop.permute.xlu0 %2388
        %2390 = vrot.lane.b32.xlu0 %v2381, 3
        %v2391 = vpop.permute.xlu0 %2390
        %2392 = vrot.lane.b32.xlu0 %v2385, 3
        %v2393 = vpop.permute.xlu0 %2392
        %v2398 = vmul.f32 %v2070, %v2387
        %v2399 = vmul.f32 %v2071, %v2387
        %v2400 = vmul.f32 %v2072, %v2389
        %v2401 = vmul.f32 %v2073, %v2389
        %v2402 = vmul.f32 %v2074, %v2391
        %v2403 = vmul.f32 %v2075, %v2391
        %v2404 = vmul.f32 %v2076, %v2393
        %v2405 = vmul.f32 %v2077, %v2393
        %2414 = vrot.lane.b32.xlu0 %v2398, 125
        %v2415 = vpop.permute.xlu0 %2414
        %2416 = vrot.lane.b32.xlu0 %v2399, 125
        %v2417 = vpop.permute.xlu0 %2416
        %2418 = vrot.lane.b32.xlu0 %v2400, 125
        %v2419 = vpop.permute.xlu0 %2418
        %2420 = vrot.lane.b32.xlu0 %v2401, 125
        %v2421 = vpop.permute.xlu0 %2420
        %2422 = vrot.lane.b32.xlu0 %v2402, 125
        %v2423 = vpop.permute.xlu0 %2422
        %2424 = vrot.lane.b32.xlu0 %v2403, 125
        %v2425 = vpop.permute.xlu0 %2424
        %2426 = vrot.lane.b32.xlu0 %v2404, 125
        %v2427 = vpop.permute.xlu0 %2426
        %2428 = vrot.lane.b32.xlu0 %v2405, 125
        %v2429 = vpop.permute.xlu0 %2428
        %v2438 = vadd.f32 %v2286, %v2415
        %v2439 = vadd.f32 %v2287, %v2417
        %v2440 = vadd.f32 %v2288, %v2419
        %v2441 = vadd.f32 %v2289, %v2421
        %v2442 = vadd.f32 %v2290, %v2423
        %v2443 = vadd.f32 %v2291, %v2425
        %v2444 = vadd.f32 %v2292, %v2427
        %v2445 = vadd.f32 %v2293, %v2429
        %v2446 = vlaneseq
        %v2447 = vshrl.u32 %v2446, 7
        %v2448 = vsub.s32 0, %v2447
        %v2449 = vrot.slane %v355, %v2448
        %v2450 = vlaneseq
        %v2451 = vshrl.u32 %v2450, 7
        %v2452 = vsub.s32 0, %v2451
        %v2453 = vrot.slane %v362, %v2452
        %v2454 = vlaneseq
        %v2455 = vshrl.u32 %v2454, 7
        %v2456 = vsub.s32 0, %v2455
        %v2457 = vrot.slane %v363, %v2456
        %v2458 = vlaneseq
        %v2459 = vshrl.u32 %v2458, 7
        %v2460 = vsub.s32 0, %v2459
        %v2461 = vrot.slane %v364, %v2460
        %2462 = vrot.lane.b32.xlu0 %v2449, 3
        %v2463 = vpop.permute.xlu0 %2462
        %2464 = vrot.lane.b32.xlu0 %v2453, 3
        %v2465 = vpop.permute.xlu0 %2464
        %2466 = vrot.lane.b32.xlu0 %v2457, 3
        %v2467 = vpop.permute.xlu0 %2466
        %2468 = vrot.lane.b32.xlu0 %v2461, 3
        %v2469 = vpop.permute.xlu0 %2468
        %v2474 = vmul.f32 %v2070, %v2463
        %v2475 = vmul.f32 %v2071, %v2463
        %v2476 = vmul.f32 %v2072, %v2465
        %v2477 = vmul.f32 %v2073, %v2465
        %v2478 = vmul.f32 %v2074, %v2467
        %v2479 = vmul.f32 %v2075, %v2467
        %v2480 = vmul.f32 %v2076, %v2469
        %v2481 = vmul.f32 %v2077, %v2469
        %2490 = vrot.lane.b32.xlu0 %v2474, 126
        %v2491 = vpop.permute.xlu0 %2490
        %2492 = vrot.lane.b32.xlu0 %v2475, 126
        %v2493 = vpop.permute.xlu0 %2492
        %2494 = vrot.lane.b32.xlu0 %v2476, 126
        %v2495 = vpop.permute.xlu0 %2494
        %2496 = vrot.lane.b32.xlu0 %v2477, 126
        %v2497 = vpop.permute.xlu0 %2496
        %2498 = vrot.lane.b32.xlu0 %v2478, 126
        %v2499 = vpop.permute.xlu0 %2498
        %2500 = vrot.lane.b32.xlu0 %v2479, 126
        %v2501 = vpop.permute.xlu0 %2500
        %2502 = vrot.lane.b32.xlu0 %v2480, 126
        %v2503 = vpop.permute.xlu0 %2502
        %2504 = vrot.lane.b32.xlu0 %v2481, 126
        %v2505 = vpop.permute.xlu0 %2504
        %v2514 = vadd.f32 %v2362, %v2491
        %v2515 = vadd.f32 %v2363, %v2493
        %v2516 = vadd.f32 %v2364, %v2495
        %v2517 = vadd.f32 %v2365, %v2497
        %v2518 = vadd.f32 %v2366, %v2499
        %v2519 = vadd.f32 %v2367, %v2501
        %v2520 = vadd.f32 %v2368, %v2503
        %v2521 = vadd.f32 %v2369, %v2505
        %v2522 = vlaneseq
        %v2523 = vshrl.u32 %v2522, 7
        %v2524 = vsub.s32 0, %v2523
        %v2525 = vrot.slane %v841, %v2524
        %v2526 = vlaneseq
        %v2527 = vshrl.u32 %v2526, 7
        %v2528 = vsub.s32 0, %v2527
        %v2529 = vrot.slane %v848, %v2528
        %v2530 = vlaneseq
        %v2531 = vshrl.u32 %v2530, 7
        %v2532 = vsub.s32 0, %v2531
        %v2533 = vrot.slane %v849, %v2532
        %v2534 = vlaneseq
        %v2535 = vshrl.u32 %v2534, 7
        %v2536 = vsub.s32 0, %v2535
        %v2537 = vrot.slane %v850, %v2536
        %2538 = vrot.lane.b32.xlu0 %v2525, 4
        %v2539 = vpop.permute.xlu0 %2538
        %2540 = vrot.lane.b32.xlu0 %v2529, 4
        %v2541 = vpop.permute.xlu0 %2540
        %2542 = vrot.lane.b32.xlu0 %v2533, 4
        %v2543 = vpop.permute.xlu0 %2542
        %2544 = vrot.lane.b32.xlu0 %v2537, 4
        %v2545 = vpop.permute.xlu0 %2544
        %v2550 = vmul.f32 %v2070, %v2539
        %v2551 = vmul.f32 %v2071, %v2539
        %v2552 = vmul.f32 %v2072, %v2541
        %v2553 = vmul.f32 %v2073, %v2541
        %v2554 = vmul.f32 %v2074, %v2543
        %v2555 = vmul.f32 %v2075, %v2543
        %v2556 = vmul.f32 %v2076, %v2545
        %v2557 = vmul.f32 %v2077, %v2545
        %2566 = vrot.lane.b32.xlu0 %v2550, 124
        %v2567 = vpop.permute.xlu0 %2566
        %2568 = vrot.lane.b32.xlu0 %v2551, 124
        %v2569 = vpop.permute.xlu0 %2568
        %2570 = vrot.lane.b32.xlu0 %v2552, 124
        %v2571 = vpop.permute.xlu0 %2570
        %2572 = vrot.lane.b32.xlu0 %v2553, 124
        %v2573 = vpop.permute.xlu0 %2572
        %2574 = vrot.lane.b32.xlu0 %v2554, 124
        %v2575 = vpop.permute.xlu0 %2574
        %2576 = vrot.lane.b32.xlu0 %v2555, 124
        %v2577 = vpop.permute.xlu0 %2576
        %2578 = vrot.lane.b32.xlu0 %v2556, 124
        %v2579 = vpop.permute.xlu0 %2578
        %2580 = vrot.lane.b32.xlu0 %v2557, 124
        %v2581 = vpop.permute.xlu0 %2580
        %v2590 = vadd.f32 %v2438, %v2567
        %v2591 = vadd.f32 %v2439, %v2569
        %v2592 = vadd.f32 %v2440, %v2571
        %v2593 = vadd.f32 %v2441, %v2573
        %v2594 = vadd.f32 %v2442, %v2575
        %v2595 = vadd.f32 %v2443, %v2577
        %v2596 = vadd.f32 %v2444, %v2579
        %v2597 = vadd.f32 %v2445, %v2581
        %v2598 = vld [vmem:[%s156 + $0x3] sm:$0xff]
        %v2599 = vld [vmem:[%s156 + $0xb] sm:$0xff]
        %v2600 = vld [vmem:[%s156 + $0x1b] sm:$0xff]
        %v2601 = vld [vmem:[%s156 + $0x23] sm:$0xff]
        %v2602 = vld [vmem:[%s156 + $0x33] sm:$0xff]
        %v2603 = vld [vmem:[%s156 + $0x3b] sm:$0xff]
        %v2604 = vld [vmem:[%s156 + $0x4b] sm:$0xff]
        %v2605 = vld [vmem:[%s156 + $0x53] sm:$0xff]
        %v2606 = vlaneseq
        %v2607 = vshrl.u32 %v2606, 7
        %v2608 = vsub.s32 0, %v2607
        %v2609 = vrot.slane %v868, %v2608
        %v2610 = vlaneseq
        %v2611 = vshrl.u32 %v2610, 7
        %v2612 = vsub.s32 0, %v2611
        %v2613 = vrot.slane %v875, %v2612
        %v2614 = vlaneseq
        %v2615 = vshrl.u32 %v2614, 7
        %v2616 = vsub.s32 0, %v2615
        %v2617 = vrot.slane %v876, %v2616
        %v2618 = vlaneseq
        %v2619 = vshrl.u32 %v2618, 7
        %v2620 = vsub.s32 0, %v2619
        %v2621 = vrot.slane %v877, %v2620
        %v2626 = vmul.f32 %v2598, %v2609
        %v2627 = vmul.f32 %v2599, %v2609
        %v2628 = vmul.f32 %v2600, %v2613
        %v2629 = vmul.f32 %v2601, %v2613
        %v2630 = vmul.f32 %v2602, %v2617
        %v2631 = vmul.f32 %v2603, %v2617
        %v2632 = vmul.f32 %v2604, %v2621
        %v2633 = vmul.f32 %v2605, %v2621
        %v2634 = vlaneseq
        %v2635 = vshrl.u32 %v2634, 7
        %v2636 = vsub.s32 0, %v2635
        %v2637 = vrot.slane %v895, %v2636
        %v2638 = vlaneseq
        %v2639 = vshrl.u32 %v2638, 7
        %v2640 = vsub.s32 0, %v2639
        %v2641 = vrot.slane %v902, %v2640
        %v2642 = vlaneseq
        %v2643 = vshrl.u32 %v2642, 7
        %v2644 = vsub.s32 0, %v2643
        %v2645 = vrot.slane %v903, %v2644
        %v2646 = vlaneseq
        %v2647 = vshrl.u32 %v2646, 7
        %v2648 = vsub.s32 0, %v2647
        %v2649 = vrot.slane %v904, %v2648
        %2650 = vrot.lane.b32.xlu0 %v2637, 1
        %v2651 = vpop.permute.xlu0 %2650
        %2652 = vrot.lane.b32.xlu0 %v2641, 1
        %v2653 = vpop.permute.xlu0 %2652
        %2654 = vrot.lane.b32.xlu0 %v2645, 1
        %v2655 = vpop.permute.xlu0 %2654
        %2656 = vrot.lane.b32.xlu0 %v2649, 1
        %v2657 = vpop.permute.xlu0 %2656
        %v2662 = vmul.f32 %v2598, %v2651
        %v2663 = vmul.f32 %v2599, %v2651
        %v2664 = vmul.f32 %v2600, %v2653
        %v2665 = vmul.f32 %v2601, %v2653
        %v2666 = vmul.f32 %v2602, %v2655
        %v2667 = vmul.f32 %v2603, %v2655
        %v2668 = vmul.f32 %v2604, %v2657
        %v2669 = vmul.f32 %v2605, %v2657
        %2678 = vrot.lane.b32.xlu0 %v2662, 127
        %v2679 = vpop.permute.xlu0 %2678
        %2680 = vrot.lane.b32.xlu0 %v2663, 127
        %v2681 = vpop.permute.xlu0 %2680
        %2682 = vrot.lane.b32.xlu0 %v2664, 127
        %v2683 = vpop.permute.xlu0 %2682
        %2684 = vrot.lane.b32.xlu0 %v2665, 127
        %v2685 = vpop.permute.xlu0 %2684
        %2686 = vrot.lane.b32.xlu0 %v2666, 127
        %v2687 = vpop.permute.xlu0 %2686
        %2688 = vrot.lane.b32.xlu0 %v2667, 127
        %v2689 = vpop.permute.xlu0 %2688
        %2690 = vrot.lane.b32.xlu0 %v2668, 127
        %v2691 = vpop.permute.xlu0 %2690
        %2692 = vrot.lane.b32.xlu0 %v2669, 127
        %v2693 = vpop.permute.xlu0 %2692
        %v2702 = vadd.f32 %v2626, %v2679
        %v2703 = vadd.f32 %v2627, %v2681
        %v2704 = vadd.f32 %v2628, %v2683
        %v2705 = vadd.f32 %v2629, %v2685
        %v2706 = vadd.f32 %v2630, %v2687
        %v2707 = vadd.f32 %v2631, %v2689
        %v2708 = vadd.f32 %v2632, %v2691
        %v2709 = vadd.f32 %v2633, %v2693
        %v2710 = vlaneseq
        %v2711 = vshrl.u32 %v2710, 7
        %v2712 = vsub.s32 0, %v2711
        %v2713 = vrot.slane %v382, %v2712
        %v2714 = vlaneseq
        %v2715 = vshrl.u32 %v2714, 7
        %v2716 = vsub.s32 0, %v2715
        %v2717 = vrot.slane %v389, %v2716
        %v2718 = vlaneseq
        %v2719 = vshrl.u32 %v2718, 7
        %v2720 = vsub.s32 0, %v2719
        %v2721 = vrot.slane %v390, %v2720
        %v2722 = vlaneseq
        %v2723 = vshrl.u32 %v2722, 7
        %v2724 = vsub.s32 0, %v2723
        %v2725 = vrot.slane %v391, %v2724
        %2726 = vrot.lane.b32.xlu0 %v2713, 1
        %v2727 = vpop.permute.xlu0 %2726
        %2728 = vrot.lane.b32.xlu0 %v2717, 1
        %v2729 = vpop.permute.xlu0 %2728
        %2730 = vrot.lane.b32.xlu0 %v2721, 1
        %v2731 = vpop.permute.xlu0 %2730
        %2732 = vrot.lane.b32.xlu0 %v2725, 1
        %v2733 = vpop.permute.xlu0 %2732
        %v2738 = vmul.f32 %v2598, %v2727
        %v2739 = vmul.f32 %v2599, %v2727
        %v2740 = vmul.f32 %v2600, %v2729
        %v2741 = vmul.f32 %v2601, %v2729
        %v2742 = vmul.f32 %v2602, %v2731
        %v2743 = vmul.f32 %v2603, %v2731
        %v2744 = vmul.f32 %v2604, %v2733
        %v2745 = vmul.f32 %v2605, %v2733
        %v2746 = vlaneseq
        %v2747 = vshrl.u32 %v2746, 7
        %v2748 = vsub.s32 0, %v2747
        %v2749 = vrot.slane %v922, %v2748
        %v2750 = vlaneseq
        %v2751 = vshrl.u32 %v2750, 7
        %v2752 = vsub.s32 0, %v2751
        %v2753 = vrot.slane %v929, %v2752
        %v2754 = vlaneseq
        %v2755 = vshrl.u32 %v2754, 7
        %v2756 = vsub.s32 0, %v2755
        %v2757 = vrot.slane %v930, %v2756
        %v2758 = vlaneseq
        %v2759 = vshrl.u32 %v2758, 7
        %v2760 = vsub.s32 0, %v2759
        %v2761 = vrot.slane %v931, %v2760
        %2762 = vrot.lane.b32.xlu0 %v2749, 2
        %v2763 = vpop.permute.xlu0 %2762
        %2764 = vrot.lane.b32.xlu0 %v2753, 2
        %v2765 = vpop.permute.xlu0 %2764
        %2766 = vrot.lane.b32.xlu0 %v2757, 2
        %v2767 = vpop.permute.xlu0 %2766
        %2768 = vrot.lane.b32.xlu0 %v2761, 2
        %v2769 = vpop.permute.xlu0 %2768
        %v2774 = vmul.f32 %v2598, %v2763
        %v2775 = vmul.f32 %v2599, %v2763
        %v2776 = vmul.f32 %v2600, %v2765
        %v2777 = vmul.f32 %v2601, %v2765
        %v2778 = vmul.f32 %v2602, %v2767
        %v2779 = vmul.f32 %v2603, %v2767
        %v2780 = vmul.f32 %v2604, %v2769
        %v2781 = vmul.f32 %v2605, %v2769
        %2790 = vrot.lane.b32.xlu0 %v2774, 126
        %v2791 = vpop.permute.xlu0 %2790
        %2792 = vrot.lane.b32.xlu0 %v2775, 126
        %v2793 = vpop.permute.xlu0 %2792
        %2794 = vrot.lane.b32.xlu0 %v2776, 126
        %v2795 = vpop.permute.xlu0 %2794
        %2796 = vrot.lane.b32.xlu0 %v2777, 126
        %v2797 = vpop.permute.xlu0 %2796
        %2798 = vrot.lane.b32.xlu0 %v2778, 126
        %v2799 = vpop.permute.xlu0 %2798
        %2800 = vrot.lane.b32.xlu0 %v2779, 126
        %v2801 = vpop.permute.xlu0 %2800
        %2802 = vrot.lane.b32.xlu0 %v2780, 126
        %v2803 = vpop.permute.xlu0 %2802
        %2804 = vrot.lane.b32.xlu0 %v2781, 126
        %v2805 = vpop.permute.xlu0 %2804
        %v2814 = vadd.f32 %v2702, %v2791
        %v2815 = vadd.f32 %v2703, %v2793
        %v2816 = vadd.f32 %v2704, %v2795
        %v2817 = vadd.f32 %v2705, %v2797
        %v2818 = vadd.f32 %v2706, %v2799
        %v2819 = vadd.f32 %v2707, %v2801
        %v2820 = vadd.f32 %v2708, %v2803
        %v2821 = vadd.f32 %v2709, %v2805
        %v2822 = vlaneseq
        %v2823 = vshrl.u32 %v2822, 7
        %v2824 = vsub.s32 0, %v2823
        %v2825 = vrot.slane %v409, %v2824
        %v2826 = vlaneseq
        %v2827 = vshrl.u32 %v2826, 7
        %v2828 = vsub.s32 0, %v2827
        %v2829 = vrot.slane %v416, %v2828
        %v2830 = vlaneseq
        %v2831 = vshrl.u32 %v2830, 7
        %v2832 = vsub.s32 0, %v2831
        %v2833 = vrot.slane %v417, %v2832
        %v2834 = vlaneseq
        %v2835 = vshrl.u32 %v2834, 7
        %v2836 = vsub.s32 0, %v2835
        %v2837 = vrot.slane %v418, %v2836
        %2838 = vrot.lane.b32.xlu0 %v2825, 2
        %v2839 = vpop.permute.xlu0 %2838
        %2840 = vrot.lane.b32.xlu0 %v2829, 2
        %v2841 = vpop.permute.xlu0 %2840
        %2842 = vrot.lane.b32.xlu0 %v2833, 2
        %v2843 = vpop.permute.xlu0 %2842
        %2844 = vrot.lane.b32.xlu0 %v2837, 2
        %v2845 = vpop.permute.xlu0 %2844
        %v2850 = vmul.f32 %v2598, %v2839
        %v2851 = vmul.f32 %v2599, %v2839
        %v2852 = vmul.f32 %v2600, %v2841
        %v2853 = vmul.f32 %v2601, %v2841
        %v2854 = vmul.f32 %v2602, %v2843
        %v2855 = vmul.f32 %v2603, %v2843
        %v2856 = vmul.f32 %v2604, %v2845
        %v2857 = vmul.f32 %v2605, %v2845
        %2866 = vrot.lane.b32.xlu0 %v2850, 127
        %v2867 = vpop.permute.xlu0 %2866
        %2868 = vrot.lane.b32.xlu0 %v2851, 127
        %v2869 = vpop.permute.xlu0 %2868
        %2870 = vrot.lane.b32.xlu0 %v2852, 127
        %v2871 = vpop.permute.xlu0 %2870
        %2872 = vrot.lane.b32.xlu0 %v2853, 127
        %v2873 = vpop.permute.xlu0 %2872
        %2874 = vrot.lane.b32.xlu0 %v2854, 127
        %v2875 = vpop.permute.xlu0 %2874
        %2876 = vrot.lane.b32.xlu0 %v2855, 127
        %v2877 = vpop.permute.xlu0 %2876
        %2878 = vrot.lane.b32.xlu0 %v2856, 127
        %v2879 = vpop.permute.xlu0 %2878
        %2880 = vrot.lane.b32.xlu0 %v2857, 127
        %v2881 = vpop.permute.xlu0 %2880
        %v2890 = vadd.f32 %v2738, %v2867
        %v2891 = vadd.f32 %v2739, %v2869
        %v2892 = vadd.f32 %v2740, %v2871
        %v2893 = vadd.f32 %v2741, %v2873
        %v2894 = vadd.f32 %v2742, %v2875
        %v2895 = vadd.f32 %v2743, %v2877
        %v2896 = vadd.f32 %v2744, %v2879
        %v2897 = vadd.f32 %v2745, %v2881
        %v2898 = vlaneseq
        %v2899 = vshrl.u32 %v2898, 7
        %v2900 = vsub.s32 0, %v2899
        %v2901 = vrot.slane %v949, %v2900
        %v2902 = vlaneseq
        %v2903 = vshrl.u32 %v2902, 7
        %v2904 = vsub.s32 0, %v2903
        %v2905 = vrot.slane %v956, %v2904
        %v2906 = vlaneseq
        %v2907 = vshrl.u32 %v2906, 7
        %v2908 = vsub.s32 0, %v2907
        %v2909 = vrot.slane %v957, %v2908
        %v2910 = vlaneseq
        %v2911 = vshrl.u32 %v2910, 7
        %v2912 = vsub.s32 0, %v2911
        %v2913 = vrot.slane %v958, %v2912
        %2914 = vrot.lane.b32.xlu0 %v2901, 3
        %v2915 = vpop.permute.xlu0 %2914
        %2916 = vrot.lane.b32.xlu0 %v2905, 3
        %v2917 = vpop.permute.xlu0 %2916
        %2918 = vrot.lane.b32.xlu0 %v2909, 3
        %v2919 = vpop.permute.xlu0 %2918
        %2920 = vrot.lane.b32.xlu0 %v2913, 3
        %v2921 = vpop.permute.xlu0 %2920
        %v2926 = vmul.f32 %v2598, %v2915
        %v2927 = vmul.f32 %v2599, %v2915
        %v2928 = vmul.f32 %v2600, %v2917
        %v2929 = vmul.f32 %v2601, %v2917
        %v2930 = vmul.f32 %v2602, %v2919
        %v2931 = vmul.f32 %v2603, %v2919
        %v2932 = vmul.f32 %v2604, %v2921
        %v2933 = vmul.f32 %v2605, %v2921
        %2942 = vrot.lane.b32.xlu0 %v2926, 125
        %v2943 = vpop.permute.xlu0 %2942
        %2944 = vrot.lane.b32.xlu0 %v2927, 125
        %v2945 = vpop.permute.xlu0 %2944
        %2946 = vrot.lane.b32.xlu0 %v2928, 125
        %v2947 = vpop.permute.xlu0 %2946
        %2948 = vrot.lane.b32.xlu0 %v2929, 125
        %v2949 = vpop.permute.xlu0 %2948
        %2950 = vrot.lane.b32.xlu0 %v2930, 125
        %v2951 = vpop.permute.xlu0 %2950
        %2952 = vrot.lane.b32.xlu0 %v2931, 125
        %v2953 = vpop.permute.xlu0 %2952
        %2954 = vrot.lane.b32.xlu0 %v2932, 125
        %v2955 = vpop.permute.xlu0 %2954
        %2956 = vrot.lane.b32.xlu0 %v2933, 125
        %v2957 = vpop.permute.xlu0 %2956
        %v2966 = vadd.f32 %v2814, %v2943
        %v2967 = vadd.f32 %v2815, %v2945
        %v2968 = vadd.f32 %v2816, %v2947
        %v2969 = vadd.f32 %v2817, %v2949
        %v2970 = vadd.f32 %v2818, %v2951
        %v2971 = vadd.f32 %v2819, %v2953
        %v2972 = vadd.f32 %v2820, %v2955
        %v2973 = vadd.f32 %v2821, %v2957
        %v2974 = vlaneseq
        %v2975 = vshrl.u32 %v2974, 7
        %v2976 = vsub.s32 0, %v2975
        %v2977 = vrot.slane %v436, %v2976
        %v2978 = vlaneseq
        %v2979 = vshrl.u32 %v2978, 7
        %v2980 = vsub.s32 0, %v2979
        %v2981 = vrot.slane %v443, %v2980
        %v2982 = vlaneseq
        %v2983 = vshrl.u32 %v2982, 7
        %v2984 = vsub.s32 0, %v2983
        %v2985 = vrot.slane %v444, %v2984
        %v2986 = vlaneseq
        %v2987 = vshrl.u32 %v2986, 7
        %v2988 = vsub.s32 0, %v2987
        %v2989 = vrot.slane %v445, %v2988
        %2990 = vrot.lane.b32.xlu0 %v2977, 3
        %v2991 = vpop.permute.xlu0 %2990
        %2992 = vrot.lane.b32.xlu0 %v2981, 3
        %v2993 = vpop.permute.xlu0 %2992
        %2994 = vrot.lane.b32.xlu0 %v2985, 3
        %v2995 = vpop.permute.xlu0 %2994
        %2996 = vrot.lane.b32.xlu0 %v2989, 3
        %v2997 = vpop.permute.xlu0 %2996
        %v3002 = vmul.f32 %v2598, %v2991
        %v3003 = vmul.f32 %v2599, %v2991
        %v3004 = vmul.f32 %v2600, %v2993
        %v3005 = vmul.f32 %v2601, %v2993
        %v3006 = vmul.f32 %v2602, %v2995
        %v3007 = vmul.f32 %v2603, %v2995
        %v3008 = vmul.f32 %v2604, %v2997
        %v3009 = vmul.f32 %v2605, %v2997
        %3018 = vrot.lane.b32.xlu0 %v3002, 126
        %v3019 = vpop.permute.xlu0 %3018
        %3020 = vrot.lane.b32.xlu0 %v3003, 126
        %v3021 = vpop.permute.xlu0 %3020
        %3022 = vrot.lane.b32.xlu0 %v3004, 126
        %v3023 = vpop.permute.xlu0 %3022
        %3024 = vrot.lane.b32.xlu0 %v3005, 126
        %v3025 = vpop.permute.xlu0 %3024
        %3026 = vrot.lane.b32.xlu0 %v3006, 126
        %v3027 = vpop.permute.xlu0 %3026
        %3028 = vrot.lane.b32.xlu0 %v3007, 126
        %v3029 = vpop.permute.xlu0 %3028
        %3030 = vrot.lane.b32.xlu0 %v3008, 126
        %v3031 = vpop.permute.xlu0 %3030
        %3032 = vrot.lane.b32.xlu0 %v3009, 126
        %v3033 = vpop.permute.xlu0 %3032
        %v3042 = vadd.f32 %v2890, %v3019
        %v3043 = vadd.f32 %v2891, %v3021
        %v3044 = vadd.f32 %v2892, %v3023
        %v3045 = vadd.f32 %v2893, %v3025
        %v3046 = vadd.f32 %v2894, %v3027
        %v3047 = vadd.f32 %v2895, %v3029
        %v3048 = vadd.f32 %v2896, %v3031
        %v3049 = vadd.f32 %v2897, %v3033
        %v3050 = vlaneseq
        %v3051 = vshrl.u32 %v3050, 7
        %v3052 = vsub.s32 0, %v3051
        %v3053 = vrot.slane %v976, %v3052
        %v3054 = vlaneseq
        %v3055 = vshrl.u32 %v3054, 7
        %v3056 = vsub.s32 0, %v3055
        %v3057 = vrot.slane %v983, %v3056
        %v3058 = vlaneseq
        %v3059 = vshrl.u32 %v3058, 7
        %v3060 = vsub.s32 0, %v3059
        %v3061 = vrot.slane %v984, %v3060
        %v3062 = vlaneseq
        %v3063 = vshrl.u32 %v3062, 7
        %v3064 = vsub.s32 0, %v3063
        %v3065 = vrot.slane %v985, %v3064
        %3066 = vrot.lane.b32.xlu0 %v3053, 4
        %v3067 = vpop.permute.xlu0 %3066
        %3068 = vrot.lane.b32.xlu0 %v3057, 4
        %v3069 = vpop.permute.xlu0 %3068
        %3070 = vrot.lane.b32.xlu0 %v3061, 4
        %v3071 = vpop.permute.xlu0 %3070
        %3072 = vrot.lane.b32.xlu0 %v3065, 4
        %v3073 = vpop.permute.xlu0 %3072
        %v3078 = vmul.f32 %v2598, %v3067
        %v3079 = vmul.f32 %v2599, %v3067
        %v3080 = vmul.f32 %v2600, %v3069
        %v3081 = vmul.f32 %v2601, %v3069
        %v3082 = vmul.f32 %v2602, %v3071
        %v3083 = vmul.f32 %v2603, %v3071
        %v3084 = vmul.f32 %v2604, %v3073
        %v3085 = vmul.f32 %v2605, %v3073
        %3094 = vrot.lane.b32.xlu0 %v3078, 124
        %v3095 = vpop.permute.xlu0 %3094
        %3096 = vrot.lane.b32.xlu0 %v3079, 124
        %v3097 = vpop.permute.xlu0 %3096
        %3098 = vrot.lane.b32.xlu0 %v3080, 124
        %v3099 = vpop.permute.xlu0 %3098
        %3100 = vrot.lane.b32.xlu0 %v3081, 124
        %v3101 = vpop.permute.xlu0 %3100
        %3102 = vrot.lane.b32.xlu0 %v3082, 124
        %v3103 = vpop.permute.xlu0 %3102
        %3104 = vrot.lane.b32.xlu0 %v3083, 124
        %v3105 = vpop.permute.xlu0 %3104
        %3106 = vrot.lane.b32.xlu0 %v3084, 124
        %v3107 = vpop.permute.xlu0 %3106
        %3108 = vrot.lane.b32.xlu0 %v3085, 124
        %v3109 = vpop.permute.xlu0 %3108
        %v3118 = vadd.f32 %v2966, %v3095
        %v3119 = vadd.f32 %v2967, %v3097
        %v3120 = vadd.f32 %v2968, %v3099
        %v3121 = vadd.f32 %v2969, %v3101
        %v3122 = vadd.f32 %v2970, %v3103
        %v3123 = vadd.f32 %v2971, %v3105
        %v3124 = vadd.f32 %v2972, %v3107
        %v3125 = vadd.f32 %v2973, %v3109
        %v3126 = vld [vmem:[%s156 + $0x4] sm:$0xff]
        %v3127 = vld [vmem:[%s156 + $0xc] sm:$0xff]
        %v3128 = vld [vmem:[%s156 + $0x1c] sm:$0xff]
        %v3129 = vld [vmem:[%s156 + $0x24] sm:$0xff]
        %v3130 = vld [vmem:[%s156 + $0x34] sm:$0xff]
        %v3131 = vld [vmem:[%s156 + $0x3c] sm:$0xff]
        %v3132 = vld [vmem:[%s156 + $0x4c] sm:$0xff]
        %v3133 = vld [vmem:[%s156 + $0x54] sm:$0xff]
        %v3134 = vlaneseq
        %v3135 = vshrl.u32 %v3134, 7
        %v3136 = vsub.s32 0, %v3135
        %v3137 = vrot.slane %v1003, %v3136
        %v3138 = vlaneseq
        %v3139 = vshrl.u32 %v3138, 7
        %v3140 = vsub.s32 0, %v3139
        %v3141 = vrot.slane %v1010, %v3140
        %v3142 = vlaneseq
        %v3143 = vshrl.u32 %v3142, 7
        %v3144 = vsub.s32 0, %v3143
        %v3145 = vrot.slane %v1011, %v3144
        %v3146 = vlaneseq
        %v3147 = vshrl.u32 %v3146, 7
        %v3148 = vsub.s32 0, %v3147
        %v3149 = vrot.slane %v1012, %v3148
        %v3154 = vmul.f32 %v3126, %v3137
        %v3155 = vmul.f32 %v3127, %v3137
        %v3156 = vmul.f32 %v3128, %v3141
        %v3157 = vmul.f32 %v3129, %v3141
        %v3158 = vmul.f32 %v3130, %v3145
        %v3159 = vmul.f32 %v3131, %v3145
        %v3160 = vmul.f32 %v3132, %v3149
        %v3161 = vmul.f32 %v3133, %v3149
        %v3162 = vlaneseq
        %v3163 = vshrl.u32 %v3162, 7
        %v3164 = vsub.s32 0, %v3163
        %v3165 = vrot.slane %v1030, %v3164
        %v3166 = vlaneseq
        %v3167 = vshrl.u32 %v3166, 7
        %v3168 = vsub.s32 0, %v3167
        %v3169 = vrot.slane %v1037, %v3168
        %v3170 = vlaneseq
        %v3171 = vshrl.u32 %v3170, 7
        %v3172 = vsub.s32 0, %v3171
        %v3173 = vrot.slane %v1038, %v3172
        %v3174 = vlaneseq
        %v3175 = vshrl.u32 %v3174, 7
        %v3176 = vsub.s32 0, %v3175
        %v3177 = vrot.slane %v1039, %v3176
        %3178 = vrot.lane.b32.xlu0 %v3165, 1
        %v3179 = vpop.permute.xlu0 %3178
        %3180 = vrot.lane.b32.xlu0 %v3169, 1
        %v3181 = vpop.permute.xlu0 %3180
        %3182 = vrot.lane.b32.xlu0 %v3173, 1
        %v3183 = vpop.permute.xlu0 %3182
        %3184 = vrot.lane.b32.xlu0 %v3177, 1
        %v3185 = vpop.permute.xlu0 %3184
        %v3190 = vmul.f32 %v3126, %v3179
        %v3191 = vmul.f32 %v3127, %v3179
        %v3192 = vmul.f32 %v3128, %v3181
        %v3193 = vmul.f32 %v3129, %v3181
        %v3194 = vmul.f32 %v3130, %v3183
        %v3195 = vmul.f32 %v3131, %v3183
        %v3196 = vmul.f32 %v3132, %v3185
        %v3197 = vmul.f32 %v3133, %v3185
        %3206 = vrot.lane.b32.xlu0 %v3190, 127
        %v3207 = vpop.permute.xlu0 %3206
        %3208 = vrot.lane.b32.xlu0 %v3191, 127
        %v3209 = vpop.permute.xlu0 %3208
        %3210 = vrot.lane.b32.xlu0 %v3192, 127
        %v3211 = vpop.permute.xlu0 %3210
        %3212 = vrot.lane.b32.xlu0 %v3193, 127
        %v3213 = vpop.permute.xlu0 %3212
        %3214 = vrot.lane.b32.xlu0 %v3194, 127
        %v3215 = vpop.permute.xlu0 %3214
        %3216 = vrot.lane.b32.xlu0 %v3195, 127
        %v3217 = vpop.permute.xlu0 %3216
        %3218 = vrot.lane.b32.xlu0 %v3196, 127
        %v3219 = vpop.permute.xlu0 %3218
        %3220 = vrot.lane.b32.xlu0 %v3197, 127
        %v3221 = vpop.permute.xlu0 %3220
        %v3230 = vadd.f32 %v3154, %v3207
        %v3231 = vadd.f32 %v3155, %v3209
        %v3232 = vadd.f32 %v3156, %v3211
        %v3233 = vadd.f32 %v3157, %v3213
        %v3234 = vadd.f32 %v3158, %v3215
        %v3235 = vadd.f32 %v3159, %v3217
        %v3236 = vadd.f32 %v3160, %v3219
        %v3237 = vadd.f32 %v3161, %v3221
        %v3238 = vlaneseq
        %v3239 = vshrl.u32 %v3238, 7
        %v3240 = vsub.s32 0, %v3239
        %v3241 = vrot.slane %v1057, %v3240
        %v3242 = vlaneseq
        %v3243 = vshrl.u32 %v3242, 7
        %v3244 = vsub.s32 0, %v3243
        %v3245 = vrot.slane %v1064, %v3244
        %v3246 = vlaneseq
        %v3247 = vshrl.u32 %v3246, 7
        %v3248 = vsub.s32 0, %v3247
        %v3249 = vrot.slane %v1065, %v3248
        %v3250 = vlaneseq
        %v3251 = vshrl.u32 %v3250, 7
        %v3252 = vsub.s32 0, %v3251
        %v3253 = vrot.slane %v1066, %v3252
        %3254 = vrot.lane.b32.xlu0 %v3241, 2
        %v3255 = vpop.permute.xlu0 %3254
        %3256 = vrot.lane.b32.xlu0 %v3245, 2
        %v3257 = vpop.permute.xlu0 %3256
        %3258 = vrot.lane.b32.xlu0 %v3249, 2
        %v3259 = vpop.permute.xlu0 %3258
        %3260 = vrot.lane.b32.xlu0 %v3253, 2
        %v3261 = vpop.permute.xlu0 %3260
        %v3266 = vmul.f32 %v3126, %v3255
        %v3267 = vmul.f32 %v3127, %v3255
        %v3268 = vmul.f32 %v3128, %v3257
        %v3269 = vmul.f32 %v3129, %v3257
        %v3270 = vmul.f32 %v3130, %v3259
        %v3271 = vmul.f32 %v3131, %v3259
        %v3272 = vmul.f32 %v3132, %v3261
        %v3273 = vmul.f32 %v3133, %v3261
        %3282 = vrot.lane.b32.xlu0 %v3266, 126
        %v3283 = vpop.permute.xlu0 %3282
        %3284 = vrot.lane.b32.xlu0 %v3267, 126
        %v3285 = vpop.permute.xlu0 %3284
        %3286 = vrot.lane.b32.xlu0 %v3268, 126
        %v3287 = vpop.permute.xlu0 %3286
        %3288 = vrot.lane.b32.xlu0 %v3269, 126
        %v3289 = vpop.permute.xlu0 %3288
        %3290 = vrot.lane.b32.xlu0 %v3270, 126
        %v3291 = vpop.permute.xlu0 %3290
        %3292 = vrot.lane.b32.xlu0 %v3271, 126
        %v3293 = vpop.permute.xlu0 %3292
        %3294 = vrot.lane.b32.xlu0 %v3272, 126
        %v3295 = vpop.permute.xlu0 %3294
        %3296 = vrot.lane.b32.xlu0 %v3273, 126
        %v3297 = vpop.permute.xlu0 %3296
        %v3306 = vadd.f32 %v3230, %v3283
        %v3307 = vadd.f32 %v3231, %v3285
        %v3308 = vadd.f32 %v3232, %v3287
        %v3309 = vadd.f32 %v3233, %v3289
        %v3310 = vadd.f32 %v3234, %v3291
        %v3311 = vadd.f32 %v3235, %v3293
        %v3312 = vadd.f32 %v3236, %v3295
        %v3313 = vadd.f32 %v3237, %v3297
        %v3314 = vlaneseq
        %v3315 = vshrl.u32 %v3314, 7
        %v3316 = vsub.s32 0, %v3315
        %v3317 = vrot.slane %v1084, %v3316
        %v3318 = vlaneseq
        %v3319 = vshrl.u32 %v3318, 7
        %v3320 = vsub.s32 0, %v3319
        %v3321 = vrot.slane %v1091, %v3320
        %v3322 = vlaneseq
        %v3323 = vshrl.u32 %v3322, 7
        %v3324 = vsub.s32 0, %v3323
        %v3325 = vrot.slane %v1092, %v3324
        %v3326 = vlaneseq
        %v3327 = vshrl.u32 %v3326, 7
        %v3328 = vsub.s32 0, %v3327
        %v3329 = vrot.slane %v1093, %v3328
        %3330 = vrot.lane.b32.xlu0 %v3317, 3
        %v3331 = vpop.permute.xlu0 %3330
        %3332 = vrot.lane.b32.xlu0 %v3321, 3
        %v3333 = vpop.permute.xlu0 %3332
        %3334 = vrot.lane.b32.xlu0 %v3325, 3
        %v3335 = vpop.permute.xlu0 %3334
        %3336 = vrot.lane.b32.xlu0 %v3329, 3
        %v3337 = vpop.permute.xlu0 %3336
        %v3342 = vmul.f32 %v3126, %v3331
        %v3343 = vmul.f32 %v3127, %v3331
        %v3344 = vmul.f32 %v3128, %v3333
        %v3345 = vmul.f32 %v3129, %v3333
        %v3346 = vmul.f32 %v3130, %v3335
        %v3347 = vmul.f32 %v3131, %v3335
        %v3348 = vmul.f32 %v3132, %v3337
        %v3349 = vmul.f32 %v3133, %v3337
        %3358 = vrot.lane.b32.xlu0 %v3342, 125
        %v3359 = vpop.permute.xlu0 %3358
        %3360 = vrot.lane.b32.xlu0 %v3343, 125
        %v3361 = vpop.permute.xlu0 %3360
        %3362 = vrot.lane.b32.xlu0 %v3344, 125
        %v3363 = vpop.permute.xlu0 %3362
        %3364 = vrot.lane.b32.xlu0 %v3345, 125
        %v3365 = vpop.permute.xlu0 %3364
        %3366 = vrot.lane.b32.xlu0 %v3346, 125
        %v3367 = vpop.permute.xlu0 %3366
        %3368 = vrot.lane.b32.xlu0 %v3347, 125
        %v3369 = vpop.permute.xlu0 %3368
        %3370 = vrot.lane.b32.xlu0 %v3348, 125
        %v3371 = vpop.permute.xlu0 %3370
        %3372 = vrot.lane.b32.xlu0 %v3349, 125
        %v3373 = vpop.permute.xlu0 %3372
        %v3382 = vadd.f32 %v3306, %v3359
        %v3383 = vadd.f32 %v3307, %v3361
        %v3384 = vadd.f32 %v3308, %v3363
        %v3385 = vadd.f32 %v3309, %v3365
        %v3386 = vadd.f32 %v3310, %v3367
        %v3387 = vadd.f32 %v3311, %v3369
        %v3388 = vadd.f32 %v3312, %v3371
        %v3389 = vadd.f32 %v3313, %v3373
        %v3390 = vlaneseq
        %v3391 = vshrl.u32 %v3390, 7
        %v3392 = vsub.s32 0, %v3391
        %v3393 = vrot.slane %v1111, %v3392
        %v3394 = vlaneseq
        %v3395 = vshrl.u32 %v3394, 7
        %v3396 = vsub.s32 0, %v3395
        %v3397 = vrot.slane %v1118, %v3396
        %v3398 = vlaneseq
        %v3399 = vshrl.u32 %v3398, 7
        %v3400 = vsub.s32 0, %v3399
        %v3401 = vrot.slane %v1119, %v3400
        %v3402 = vlaneseq
        %v3403 = vshrl.u32 %v3402, 7
        %v3404 = vsub.s32 0, %v3403
        %v3405 = vrot.slane %v1120, %v3404
        %3406 = vrot.lane.b32.xlu0 %v3393, 4
        %v3407 = vpop.permute.xlu0 %3406
        %3408 = vrot.lane.b32.xlu0 %v3397, 4
        %v3409 = vpop.permute.xlu0 %3408
        %3410 = vrot.lane.b32.xlu0 %v3401, 4
        %v3411 = vpop.permute.xlu0 %3410
        %3412 = vrot.lane.b32.xlu0 %v3405, 4
        %v3413 = vpop.permute.xlu0 %3412
        %v3418 = vmul.f32 %v3126, %v3407
        %v3419 = vmul.f32 %v3127, %v3407
        %v3420 = vmul.f32 %v3128, %v3409
        %v3421 = vmul.f32 %v3129, %v3409
        %v3422 = vmul.f32 %v3130, %v3411
        %v3423 = vmul.f32 %v3131, %v3411
        %v3424 = vmul.f32 %v3132, %v3413
        %v3425 = vmul.f32 %v3133, %v3413
        %3434 = vrot.lane.b32.xlu0 %v3418, 124
        %v3435 = vpop.permute.xlu0 %3434
        %3436 = vrot.lane.b32.xlu0 %v3419, 124
        %v3437 = vpop.permute.xlu0 %3436
        %3438 = vrot.lane.b32.xlu0 %v3420, 124
        %v3439 = vpop.permute.xlu0 %3438
        %3440 = vrot.lane.b32.xlu0 %v3421, 124
        %v3441 = vpop.permute.xlu0 %3440
        %3442 = vrot.lane.b32.xlu0 %v3422, 124
        %v3443 = vpop.permute.xlu0 %3442
        %3444 = vrot.lane.b32.xlu0 %v3423, 124
        %v3445 = vpop.permute.xlu0 %3444
        %3446 = vrot.lane.b32.xlu0 %v3424, 124
        %v3447 = vpop.permute.xlu0 %3446
        %3448 = vrot.lane.b32.xlu0 %v3425, 124
        %v3449 = vpop.permute.xlu0 %3448
        %v3458 = vadd.f32 %v3382, %v3435
        %v3459 = vadd.f32 %v3383, %v3437
        %v3460 = vadd.f32 %v3384, %v3439
        %v3461 = vadd.f32 %v3385, %v3441
        %v3462 = vadd.f32 %v3386, %v3443
        %v3463 = vadd.f32 %v3387, %v3445
        %v3464 = vadd.f32 %v3388, %v3447
        %v3465 = vadd.f32 %v3389, %v3449
        %v3466 = vadd.f32 %v1534, %v2062
        %v3467 = vadd.f32 %v1535, %v2063
        %v3468 = vadd.f32 %v1536, %v2064
        %v3469 = vadd.f32 %v1537, %v2065
        %v3470 = vadd.f32 %v1538, %v2066
        %v3471 = vadd.f32 %v1539, %v2067
        %v3472 = vadd.f32 %v1540, %v2068
        %v3473 = vadd.f32 %v1541, %v2069
        %v3474 = vadd.f32 %v2590, %v3118
        %v3475 = vadd.f32 %v2591, %v3119
        %v3476 = vadd.f32 %v2592, %v3120
        %v3477 = vadd.f32 %v2593, %v3121
        %v3478 = vadd.f32 %v2594, %v3122
        %v3479 = vadd.f32 %v2595, %v3123
        %v3480 = vadd.f32 %v2596, %v3124
        %v3481 = vadd.f32 %v2597, %v3125
        %v3482 = vadd.f32 %v3466, %v3474
        %v3483 = vadd.f32 %v3467, %v3475
        %v3484 = vadd.f32 %v3468, %v3476
        %v3485 = vadd.f32 %v3469, %v3477
        %v3486 = vadd.f32 %v3470, %v3478
        %v3487 = vadd.f32 %v3471, %v3479
        %v3488 = vadd.f32 %v3472, %v3480
        %v3489 = vadd.f32 %v3473, %v3481
        %v3490 = vadd.f32 %v3482, %v3458
        %v3491 = vadd.f32 %v3483, %v3459
        %v3492 = vadd.f32 %v3484, %v3460
        %v3493 = vadd.f32 %v3485, %v3461
        %v3494 = vadd.f32 %v3486, %v3462
        %v3495 = vadd.f32 %v3487, %v3463
        %v3496 = vadd.f32 %v3488, %v3464
        %v3497 = vadd.f32 %v3489, %v3465
        %v3498 = vadd.f32 %v1986, %v2514
        %v3499 = vadd.f32 %v1987, %v2515
        %v3500 = vadd.f32 %v1988, %v2516
        %v3501 = vadd.f32 %v1989, %v2517
        %v3502 = vadd.f32 %v1990, %v2518
        %v3503 = vadd.f32 %v1991, %v2519
        %v3504 = vadd.f32 %v1992, %v2520
        %v3505 = vadd.f32 %v1993, %v2521
        %v3506 = vadd.f32 %v3498, %v3042
        %v3507 = vadd.f32 %v3499, %v3043
        %v3508 = vadd.f32 %v3500, %v3044
        %v3509 = vadd.f32 %v3501, %v3045
        %v3510 = vadd.f32 %v3502, %v3046
        %v3511 = vadd.f32 %v3503, %v3047
        %v3512 = vadd.f32 %v3504, %v3048
        %v3513 = vadd.f32 %v3505, %v3049
        %v3514 = vlaneseq
        %v3515 = vshrl.u32 %v3514, 7
        %v3516 = vsub.s32 0, %v3515
        %v3517 = vrot.slane %v1192, %v3516
        %v3518 = vlaneseq
        %v3519 = vshrl.u32 %v3518, 7
        %v3520 = vsub.s32 0, %v3519
        %v3521 = vrot.slane %v1199, %v3520
        %v3522 = vlaneseq
        %v3523 = vshrl.u32 %v3522, 7
        %v3524 = vsub.s32 0, %v3523
        %v3525 = vrot.slane %v1200, %v3524
        %v3526 = vlaneseq
        %v3527 = vshrl.u32 %v3526, 7
        %v3528 = vsub.s32 0, %v3527
        %v3529 = vrot.slane %v1201, %v3528
        %v3534 = vadd.f32 %v3490, %v3517
        %v3535 = vadd.f32 %v3491, %v3517
        %v3536 = vadd.f32 %v3492, %v3521
        %v3537 = vadd.f32 %v3493, %v3521
        %v3538 = vadd.f32 %v3494, %v3525
        %v3539 = vadd.f32 %v3495, %v3525
        %v3540 = vadd.f32 %v3496, %v3529
        %v3541 = vadd.f32 %v3497, %v3529
        %v3542 = vmax.f32 %v3534, 0.0
        %v3543 = vmax.f32 %v3535, 0.0
        %v3544 = vmax.f32 %v3536, 0.0
        %v3545 = vmax.f32 %v3537, 0.0
        %v3546 = vmax.f32 %v3538, 0.0
        %v3547 = vmax.f32 %v3539, 0.0
        %v3548 = vmax.f32 %v3540, 0.0
        %v3549 = vmax.f32 %v3541, 0.0
        %v3550 = vmin.f32 %v3542, 6.0
        %v3551 = vmin.f32 %v3543, 6.0
        %v3552 = vmin.f32 %v3544, 6.0
        %v3553 = vmin.f32 %v3545, 6.0
        %v3554 = vmin.f32 %v3546, 6.0
        %v3555 = vmin.f32 %v3547, 6.0
        %v3556 = vmin.f32 %v3548, 6.0
        %v3557 = vmin.f32 %v3549, 6.0
        %v3558 = vlaneseq
        %v3559 = vshrl.u32 %v3558, 7
        %v3560 = vsub.s32 0, %v3559
        %v3561 = vrot.slane %v1165, %v3560
        %v3562 = vlaneseq
        %v3563 = vshrl.u32 %v3562, 7
        %v3564 = vsub.s32 0, %v3563
        %v3565 = vrot.slane %v1172, %v3564
        %v3566 = vlaneseq
        %v3567 = vshrl.u32 %v3566, 7
        %v3568 = vsub.s32 0, %v3567
        %v3569 = vrot.slane %v1173, %v3568
        %v3570 = vlaneseq
        %v3571 = vshrl.u32 %v3570, 7
        %v3572 = vsub.s32 0, %v3571
        %v3573 = vrot.slane %v1174, %v3572
        %3574 = vrot.lane.b32.xlu0 %v3561, 1
        %v3575 = vpop.permute.xlu0 %3574
        %3576 = vrot.lane.b32.xlu0 %v3565, 1
        %v3577 = vpop.permute.xlu0 %3576
        %3578 = vrot.lane.b32.xlu0 %v3569, 1
        %v3579 = vpop.permute.xlu0 %3578
        %3580 = vrot.lane.b32.xlu0 %v3573, 1
        %v3581 = vpop.permute.xlu0 %3580
        %v3586 = vadd.f32 %v3506, %v3575
        %v3587 = vadd.f32 %v3507, %v3575
        %v3588 = vadd.f32 %v3508, %v3577
        %v3589 = vadd.f32 %v3509, %v3577
        %v3590 = vadd.f32 %v3510, %v3579
        %v3591 = vadd.f32 %v3511, %v3579
        %v3592 = vadd.f32 %v3512, %v3581
        %v3593 = vadd.f32 %v3513, %v3581
        %v3594 = vmax.f32 %v3586, 0.0
        %v3595 = vmax.f32 %v3587, 0.0
        %v3596 = vmax.f32 %v3588, 0.0
        %v3597 = vmax.f32 %v3589, 0.0
        %v3598 = vmax.f32 %v3590, 0.0
        %v3599 = vmax.f32 %v3591, 0.0
        %v3600 = vmax.f32 %v3592, 0.0
        %v3601 = vmax.f32 %v3593, 0.0
        %v3602 = vmin.f32 %v3594, 6.0
        %v3603 = vmin.f32 %v3595, 6.0
        %v3604 = vmin.f32 %v3596, 6.0
        %v3605 = vmin.f32 %v3597, 6.0
        %v3606 = vmin.f32 %v3598, 6.0
        %v3607 = vmin.f32 %v3599, 6.0
        %v3608 = vmin.f32 %v3600, 6.0
        %v3609 = vmin.f32 %v3601, 6.0
        %3618 = vrot.lane.b32.xlu0 %v3602, 127
        %v3619 = vpop.permute.xlu0 %3618
        %3620 = vrot.lane.b32.xlu0 %v3603, 127
        %v3621 = vpop.permute.xlu0 %3620
        %3622 = vrot.lane.b32.xlu0 %v3604, 127
        %v3623 = vpop.permute.xlu0 %3622
        %3624 = vrot.lane.b32.xlu0 %v3605, 127
        %v3625 = vpop.permute.xlu0 %3624
        %3626 = vrot.lane.b32.xlu0 %v3606, 127
        %v3627 = vpop.permute.xlu0 %3626
        %3628 = vrot.lane.b32.xlu0 %v3607, 127
        %v3629 = vpop.permute.xlu0 %3628
        %3630 = vrot.lane.b32.xlu0 %v3608, 127
        %v3631 = vpop.permute.xlu0 %3630
        %3632 = vrot.lane.b32.xlu0 %v3609, 127
        %v3633 = vpop.permute.xlu0 %3632
        %v3642 = vadd.f32 %v3550, %v3619
        %v3643 = vadd.f32 %v3551, %v3621
        %v3644 = vadd.f32 %v3552, %v3623
        %v3645 = vadd.f32 %v3553, %v3625
        %v3646 = vadd.f32 %v3554, %v3627
        %v3647 = vadd.f32 %v3555, %v3629
        %v3648 = vadd.f32 %v3556, %v3631
        %v3649 = vadd.f32 %v3557, %v3633
        %v3650 = vlaneseq
        %v3651 = vshrl.u32 %v3650, 7
        %v3652 = vsub.s32 0, %v3651
        %v3653 = vrot.slane %v193, %v3652
        %v3654 = vlaneseq
        %v3655 = vshrl.u32 %v3654, 7
        %v3656 = vsub.s32 0, %v3655
        %v3657 = vrot.slane %v200, %v3656
        %v3658 = vlaneseq
        %v3659 = vshrl.u32 %v3658, 7
        %v3660 = vsub.s32 0, %v3659
        %v3661 = vrot.slane %v201, %v3660
        %v3662 = vlaneseq
        %v3663 = vshrl.u32 %v3662, 7
        %v3664 = vsub.s32 0, %v3663
        %v3665 = vrot.slane %v202, %v3664
        %3666 = vrot.lane.b32.xlu0 %v3653, 2
        %v3667 = vpop.permute.xlu0 %3666
        %3668 = vrot.lane.b32.xlu0 %v3657, 2
        %v3669 = vpop.permute.xlu0 %3668
        %3670 = vrot.lane.b32.xlu0 %v3661, 2
        %v3671 = vpop.permute.xlu0 %3670
        %3672 = vrot.lane.b32.xlu0 %v3665, 2
        %v3673 = vpop.permute.xlu0 %3672
        %v3678 = vmul.f32 %v2070, %v3667
        %v3679 = vmul.f32 %v2071, %v3667
        %v3680 = vmul.f32 %v2072, %v3669
        %v3681 = vmul.f32 %v2073, %v3669
        %v3682 = vmul.f32 %v2074, %v3671
        %v3683 = vmul.f32 %v2075, %v3671
        %v3684 = vmul.f32 %v2076, %v3673
        %v3685 = vmul.f32 %v2077, %v3673
        %v3686 = vlaneseq
        %v3687 = vshrl.u32 %v3686, 7
        %v3688 = vsub.s32 0, %v3687
        %v3689 = vrot.slane %v1138, %v3688
        %v3690 = vlaneseq
        %v3691 = vshrl.u32 %v3690, 7
        %v3692 = vsub.s32 0, %v3691
        %v3693 = vrot.slane %v1145, %v3692
        %v3694 = vlaneseq
        %v3695 = vshrl.u32 %v3694, 7
        %v3696 = vsub.s32 0, %v3695
        %v3697 = vrot.slane %v1146, %v3696
        %v3698 = vlaneseq
        %v3699 = vshrl.u32 %v3698, 7
        %v3700 = vsub.s32 0, %v3699
        %v3701 = vrot.slane %v1147, %v3700
        %3702 = vrot.lane.b32.xlu0 %v3689, 2
        %v3703 = vpop.permute.xlu0 %3702
        %3704 = vrot.lane.b32.xlu0 %v3693, 2
        %v3705 = vpop.permute.xlu0 %3704
        %3706 = vrot.lane.b32.xlu0 %v3697, 2
        %v3707 = vpop.permute.xlu0 %3706
        %3708 = vrot.lane.b32.xlu0 %v3701, 2
        %v3709 = vpop.permute.xlu0 %3708
        %v3714 = vadd.f32 %v3678, %v3703
        %v3715 = vadd.f32 %v3679, %v3703
        %v3716 = vadd.f32 %v3680, %v3705
        %v3717 = vadd.f32 %v3681, %v3705
        %v3718 = vadd.f32 %v3682, %v3707
        %v3719 = vadd.f32 %v3683, %v3707
        %v3720 = vadd.f32 %v3684, %v3709
        %v3721 = vadd.f32 %v3685, %v3709
        %v3722 = vmax.f32 %v3714, 0.0
        %v3723 = vmax.f32 %v3715, 0.0
        %v3724 = vmax.f32 %v3716, 0.0
        %v3725 = vmax.f32 %v3717, 0.0
        %v3726 = vmax.f32 %v3718, 0.0
        %v3727 = vmax.f32 %v3719, 0.0
        %v3728 = vmax.f32 %v3720, 0.0
        %v3729 = vmax.f32 %v3721, 0.0
        %v3730 = vmin.f32 %v3722, 6.0
        %v3731 = vmin.f32 %v3723, 6.0
        %v3732 = vmin.f32 %v3724, 6.0
        %v3733 = vmin.f32 %v3725, 6.0
        %v3734 = vmin.f32 %v3726, 6.0
        %v3735 = vmin.f32 %v3727, 6.0
        %v3736 = vmin.f32 %v3728, 6.0
        %v3737 = vmin.f32 %v3729, 6.0
        %3746 = vrot.lane.b32.xlu0 %v3730, 126
        %v3747 = vpop.permute.xlu0 %3746
        %3748 = vrot.lane.b32.xlu0 %v3731, 126
        %v3749 = vpop.permute.xlu0 %3748
        %3750 = vrot.lane.b32.xlu0 %v3732, 126
        %v3751 = vpop.permute.xlu0 %3750
        %3752 = vrot.lane.b32.xlu0 %v3733, 126
        %v3753 = vpop.permute.xlu0 %3752
        %3754 = vrot.lane.b32.xlu0 %v3734, 126
        %v3755 = vpop.permute.xlu0 %3754
        %3756 = vrot.lane.b32.xlu0 %v3735, 126
        %v3757 = vpop.permute.xlu0 %3756
        %3758 = vrot.lane.b32.xlu0 %v3736, 126
        %v3759 = vpop.permute.xlu0 %3758
        %3760 = vrot.lane.b32.xlu0 %v3737, 126
        %v3761 = vpop.permute.xlu0 %3760
        %v3770 = vadd.f32 %v3642, %v3747
        %v3771 = vadd.f32 %v3643, %v3749
        %v3772 = vadd.f32 %v3644, %v3751
        %v3773 = vadd.f32 %v3645, %v3753
        %v3774 = vadd.f32 %v3646, %v3755
        %v3775 = vadd.f32 %v3647, %v3757
        %v3776 = vadd.f32 %v3648, %v3759
        %v3777 = vadd.f32 %v3649, %v3761
        %vm3778 = vcmask 130048
        %3779 = vst.msk [vmem:[%s176] sm:$0xff] %vm3778, %v3770
        %3780 = vst.msk [vmem:[%s176 + $0x8] sm:$0xff] %vm3778, %v3771
        %3781 = vst.msk [vmem:[%s176 + $0x10] sm:$0xff] %vm3778, %v3772
        %3782 = vst.msk [vmem:[%s176 + $0x18] sm:$0xff] %vm3778, %v3773
        %3783 = vst.msk [vmem:[%s176 + $0x20] sm:$0xff] %vm3778, %v3774
        %3784 = vst.msk [vmem:[%s176 + $0x28] sm:$0xff] %vm3778, %v3775
        %3785 = vst.msk [vmem:[%s176 + $0x30] sm:$0xff] %vm3778, %v3776
        %3786 = vst.msk [vmem:[%s176 + $0x38] sm:$0xff] %vm3778, %v3777
        %s3787 = sand.u32 %s75, 1
        %s3788 = scalar_lea.sflag [#allocation4], %s3787
        %s3789 = sand.u32 %s75, 1
        %s3790 = smul.addr %s3789, 64
        %s3791 = scalar_lea.vmem [#allocation7], %s3790
        // Predicated region
        $region37: #{tpu_custom_call.1} parent=27 // pred_check
          %p3792 = pneg %p85
        $region38: #{tpu_custom_call.1} parent=27 // pred_check_branch
          %3794 = sbr.rel (%p3792) target = $region40
        $region39: #{tpu_custom_call.1} parent=27 // pred_region
          %s3796 = ssub.s32 1024, 1024
          %3797 = vsyncadd %s3788, %s3796
          %s3798 = smul.addr %s20, 8
          %s3799 = smul.addr %s3798, 128
          %s3800 = scalar_lea.hbm %s2, %s3799
          %s3801 = sshll.u32 %s3791, 4
          %s3802 = int_to_ptr.vmem [resolvable:$true] %s3801
          %3807 = dma.vmem_to_hbm [thread:$0]  %s3802, 1024, %s3800, %s3788, 128, 128, 8
        $region40: #{tpu_custom_call.1} parent=27 // pred_fallthru
          _
      $region28: #{tpu_custom_call.1} parent=5 // pred_fallthru
        _
      %p3808 = scmp.le.s32.totalorder 2, %s15
      // Predicated region
      $region41: #{tpu_custom_call.1} parent=5 // pred_check
        %p3809 = pneg %p3808
      $region42: #{tpu_custom_call.1} parent=5 // pred_check_branch
        %3811 = sbr.rel (%p3809) target = $region44
      $region43: #{tpu_custom_call.1} parent=5 // pred_region
        %s3812 = ssub.s32 %s15, 2
        // Predicated region
        $region45: #{tpu_custom_call.1} parent=43 // pred_check
          %p3813 = pneg %p91
        $region46: #{tpu_custom_call.1} parent=43 // pred_check_branch
          %3815 = sbr.rel (%p3813) target = $region48
        $region47: #{tpu_custom_call.1} parent=43 // pred_region
          %s3816 = sand.u32 %s76, 1
          %s3817 = scalar_lea.sflag [#allocation4], %s3816
          %s3818 = sand.u32 %s76, 1
          %s3819 = smul.addr %s3818, 64
          %s3820 = scalar_lea.vmem [#allocation7], %s3819
          %3821 = dma.done %s3817, 1024
        $region48: #{tpu_custom_call.1} parent=43 // pred_fallthru
          _
      $region44: #{tpu_custom_call.1} parent=5 // pred_fallthru
        _
    $region6: #{tpu_custom_call.1} parent=1 // loop_footer
      %s19 = sadd.s32 1, %s15
    $region7: #{tpu_custom_call.1} parent=1 // loop_footer_branch
      %14 = sbr.rel target = $region3
    $region8: #{tpu_custom_call.1} parent=1 // loop_exit
      _
    %3822 = vsyncpa [#allocation3], 1
    %s3823 = scalar_lea.sflag [#allocation3], 1
    %3824 = vsyncpa %s3823, 1
    %3825 = vsyncpa [#allocation6], 1
    %s3826 = scalar_lea.sflag [#allocation6], 1
    %3827 = vsyncpa %s3826, 1
    %3828 = vsyncpa [#allocation4], 1
    %s3829 = scalar_lea.sflag [#allocation4], 1
    %3830 = vsyncpa %s3829, 1

</llo_original>
